<compile_context>
chip_gen: v5e
topology: v5e:2x2
jax: 0.10.0
libtpu: 0.0.40
codegen_flags: <defaults>
</compile_context>

<pallas_src>
import jax
import jax.numpy as jnp
import numpy as np
from jax import lax
from jax.experimental import pallas as pl
from jax.experimental.pallas import tpu as pltpu

LN_EPS = 1e-12  # BertConfig.layer_norm_eps default


def bert_wrapper_kernel(hs_ref, mask_ref,
                        wcat_ref, whh_f_ref, whh_b_ref,
                        gbias_ref, bhn_f_ref, bhn_b_ref,
                        lnw_ref, lnb_ref,
                        out_ref,
                        gif_ref, gib_ref, fwd_ref, bwd_ref):
    """One batch block: 5 chained (biGRU + dense + tanh + LayerNorm) steps.

    hs_ref   : (6, S, Bt, H)  time-major slice of the last 6 hidden states (f32)
    mask_ref : (Bt, S)
    wcat     : (H, 7H) bf16  = [wih_fwd^T | wih_bwd^T | dense_w^T]
    whh_*    : (H, 3H) bf16  GRU hidden-to-hidden weights (pre-transposed)
    gbias    : (1, 7H) f32   fused bias: bih (+ bhh r/z folded) and dense bias
    bhn_*    : (1, H)  f32   hidden bias of the n gate (cannot be folded)
    lnw/lnb  : (S, H)  f32   LayerNorm affine over normalized_shape=(S, H)
    out_ref  : (Bt, H)
    scratch  : gif/gib (S, Bt, 3H) gate preactivations; fwd/bwd (S, Bt, H)
    """
    n_states, S, Bt, H = hs_ref.shape
    kk = n_states - 1            # 5
    H2, H3 = 2 * H, 3 * H

    wcat = wcat_ref[...]         # (H, 7H) bf16
    whh_f = whh_f_ref[...]       # (H, 3H) bf16
    whh_b = whh_b_ref[...]
    gbias = gbias_ref[...]       # (1, 7H) f32
    # Hoist broadcasts out of the recurrence loop (no CSE inside fori_loop).
    bhn_f = jnp.broadcast_to(bhn_f_ref[...], (Bt, H))
    bhn_b = jnp.broadcast_to(bhn_b_ref[...], (Bt, H))
    lnw = lnw_ref[...][:, None, :]   # (S, 1, H)
    lnb = lnb_ref[...][:, None, :]

    h0 = jnp.zeros((Bt, H), jnp.float32)

    def bi_gru_step(t, carry):
        # Fused fwd/bwd step: two independent small matmuls issued back-to-back
        # so the second weight push overlaps the first drain + gate math.
        h_f, h_b = carry
        tb = S - 1 - t
        gi_f = gif_ref[t]        # (Bt, 3H), bih + bhh_{r,z} already folded in
        gi_b = gib_ref[tb]
        gh_f = jnp.dot(h_f.astype(jnp.bfloat16), whh_f,
                       preferred_element_type=jnp.float32)
        gh_b = jnp.dot(h_b.astype(jnp.bfloat16), whh_b,
                       preferred_element_type=jnp.float32)

        r_f = jax.nn.sigmoid(gi_f[:, :H] + gh_f[:, :H])
        z_f = jax.nn.sigmoid(gi_f[:, H:H2] + gh_f[:, H:H2])
        n_f = jnp.tanh(gi_f[:, H2:] + r_f * (gh_f[:, H2:] + bhn_f))
        h_f = (1.0 - z_f) * n_f + z_f * h_f

        r_b = jax.nn.sigmoid(gi_b[:, :H] + gh_b[:, :H])
        z_b = jax.nn.sigmoid(gi_b[:, H:H2] + gh_b[:, H:H2])
        n_b = jnp.tanh(gi_b[:, H2:] + r_b * (gh_b[:, H2:] + bhn_b))
        h_b = (1.0 - z_b) * n_b + z_b * h_b

        fwd_ref[t] = h_f
        bwd_ref[tb] = h_b
        return h_f, h_b

    pre = hs_ref[0]                      # pre_state[0] = hidden_states[-(kk+1)]

    for i in range(kk):                  # static unroll over the 5 wrapper steps
        feat = hs_ref[i + 1]             # hidden_states[-kk + i]
        x = feat + pre                   # shared GRU input / dense input
        x_bf = x.reshape(S * Bt, H).astype(jnp.bfloat16)

        # Single fused input projection: [gi_fwd | gi_bwd | dense] (MXU, f32 acc).
        proj = (jnp.dot(x_bf, wcat, preferred_element_type=jnp.float32)
                + gbias).reshape(S, Bt, 7 * H)
        gif_ref[...] = proj[:, :, :H3]
        gib_ref[...] = proj[:, :, H3:2 * H3]
        tn = jnp.tanh(proj[:, :, 2 * H3:])           # TN_fi, time-major (S,Bt,H)

        # Fused bidirectional recurrence (PyTorch biGRU output alignment).
        lax.fori_loop(0, S, bi_gru_step, (h0, h0))

        rnn = jnp.tanh(fwd_ref[...] + bwd_ref[...])  # tanh(out[:,:,:H]+out[:,:,H:])
        y = feat + tn + rnn + jnp.tanh(pre)

        # LayerNorm over normalized_shape=(S, H), per batch element (f32 stats).
        mu = jnp.mean(y, axis=(0, 2), keepdims=True)
        var = jnp.mean((y - mu) ** 2, axis=(0, 2), keepdims=True)
        pre = (y - mu) * lax.rsqrt(var + LN_EPS) * lnw + lnb

    # torch.mean(pre_state[-1] * mask.view(B,S,1), dim=1)  (divide by S, not mask sum)
    mask_sb = jnp.swapaxes(mask_ref[...], 0, 1)            # (S, Bt)
    out_ref[...] = jnp.sum(pre * mask_sb[:, :, None], axis=0) * (1.0 / S)


def init_params(key, S, H):
    """Deterministic synthetic parameters (shapes match the nn.Module __init__)."""
    ks = jax.random.split(key, 12)
    scale = 0.05

    def u(k, shape):
        return jax.random.uniform(k, shape, jnp.float32, -1.0, 1.0) * scale

    return dict(
        # GRU "RNN1", forward direction (PyTorch gate order r, z, n)
        wih_f=u(ks[0], (3 * H, H)), whh_f=u(ks[1], (3 * H, H)),
        bih_f=u(ks[2], (1, 3 * H)), bhh_f=u(ks[3], (1, 3 * H)),
        # GRU "RNN1", reverse direction
        wih_b=u(ks[4], (3 * H, H)), whh_b=u(ks[5], (3 * H, H)),
        bih_b=u(ks[6], (1, 3 * H)), bhh_b=u(ks[7], (1, 3 * H)),
        # dense: nn.Linear(H, H)
        dense_w=u(ks[8], (H, H)), dense_b=u(ks[9], (1, H)),
        # LayerNorm([S, H]) affine
        ln_w=1.0 + u(ks[10], (S, H)), ln_b=u(ks[11], (S, H)),
        # NOTE: RNN2..RNN5 exist in the module but are unused in forward().
    )


@jax.jit
def bert_wrapper_rnn_forward(hidden_states, attention_mask, params):
    """hidden_states: tuple of >= 6 arrays (B, S, H); attention_mask: (B, S)."""
    hs = jnp.stack(hidden_states[-6:], axis=0).astype(jnp.float32)   # (6, B, S, H)
    hs = jnp.transpose(hs, (0, 2, 1, 3))                             # (6, S, B, H)
    mask = attention_mask.astype(jnp.float32)                        # (B, S)
    _, S, B, H = hs.shape

    # Batch block: keep the (8,128) tiling rule (Bt multiple of 8, or full B).
    Bt = 8 if (B % 8 == 0) else B
    nb = B // Bt

    # Fused / pre-transposed weights.  bf16 operands -> bf16 MXU path; the
    # accumulation stays f32 (preferred_element_type) inside the kernel.
    wcat = jnp.concatenate(
        [params["wih_f"].T, params["wih_b"].T, params["dense_w"].T],
        axis=1).astype(jnp.bfloat16)                                  # (H, 7H)
    whh_f = params["whh_f"].T.astype(jnp.bfloat16)                    # (H, 3H)
    whh_b = params["whh_b"].T.astype(jnp.bfloat16)

    def fold_rz(bih, bhh):
        # Fold the hidden r/z biases into the precomputed gi (n bias cannot be
        # folded because it is multiplied by r inside the cell).
        return bih.at[:, :2 * H].add(bhh[:, :2 * H])

    gbias = jnp.concatenate(
        [fold_rz(params["bih_f"], params["bhh_f"]),
         fold_rz(params["bih_b"], params["bhh_b"]),
         params["dense_b"]], axis=1)                                  # (1, 7H)
    bhn_f = params["bhh_f"][:, 2 * H:]                                # (1, H)
    bhn_b = params["bhh_b"][:, 2 * H:]
    lnw, lnb = params["ln_w"], params["ln_b"]

    def const_spec(shape):
        return pl.BlockSpec(shape, lambda b: (0,) * len(shape))

    in_specs = [
        pl.BlockSpec((6, S, Bt, H), lambda b: (0, 0, b, 0)),   # hs (time-major)
        pl.BlockSpec((Bt, S), lambda b: (b, 0)),               # mask
        const_spec(wcat.shape), const_spec(whh_f.shape), const_spec(whh_b.shape),
        const_spec(gbias.shape), const_spec(bhn_f.shape), const_spec(bhn_b.shape),
        const_spec(lnw.shape), const_spec(lnb.shape),
    ]
    out_specs = pl.BlockSpec((Bt, H), lambda b: (b, 0))

    # VMEM budget: actual buffer sum (double-buffered BlockSpec inputs + scratch
    # + projection temp) with headroom, clamped to a sane per-generation range.
    f32 = 4
    est = (
        2 * 6 * S * Bt * H * f32                       # hs block (x2 buffers)
        + 2 * Bt * S * f32 + 2 * Bt * H * f32          # mask + out blocks
        + 2 * (7 * H * H + 2 * 3 * H * H) * 2          # bf16 weights (x2 buffers)
        + 2 * (7 * H + 2 * H + 2 * S * H) * f32        # biases + LN affine
        + (2 * S * Bt * 3 * H + 2 * S * Bt * H) * f32  # scratch (gi + fwd/bwd)
        + S * Bt * 7 * H * f32                         # fused projection temp
        + (4 << 20)                                    # headroom
    )
    vmem_limit = int(min(112 * 2 ** 20, max(32 * 2 ** 20, est)))

    out2d = pl.pallas_call(
        bert_wrapper_kernel,
        out_shape=jax.ShapeDtypeStruct((B, H), jnp.float32),
        grid=(nb,),
        in_specs=in_specs,
        out_specs=out_specs,
        scratch_shapes=[
            pltpu.VMEM((S, Bt, 3 * H), jnp.float32),   # fwd gate preactivations
            pltpu.VMEM((S, Bt, 3 * H), jnp.float32),   # bwd gate preactivations
            pltpu.VMEM((S, Bt, H), jnp.float32),       # fwd GRU outputs
            pltpu.VMEM((S, Bt, H), jnp.float32),       # bwd GRU outputs
        ],
        compiler_params=pltpu.CompilerParams(
            dimension_semantics=("parallel",),         # dual-TC sharding on v7x
            vmem_limit_bytes=vmem_limit),
    )(hs, mask, wcat, whh_f, whh_b, gbias, bhn_f, bhn_b, lnw, lnb)

    return out2d.reshape(B, 1, H)


def reference_forward(hidden_states, attention_mask, params):
    """Pure-JAX reference mirroring the PyTorch forward (with matching bf16
    matmul-operand rounding, f32 accumulation and f32 elementwise math)."""
    H = hidden_states[0].shape[-1]

    def bdot(a, b):
        return jnp.dot(a.astype(jnp.bfloat16), b.astype(jnp.bfloat16),
                       preferred_element_type=jnp.float32)

    def gru_dir(x_sbh, wih, whh, bih, bhh, reverse):
        def cell(h, x_t):
            gi = bdot(x_t, wih.T) + bih[0]
            gh = bdot(h, whh.T) + bhh[0]
            r = jax.nn.sigmoid(gi[:, :H] + gh[:, :H])
            z = jax.nn.sigmoid(gi[:, H:2 * H] + gh[:, H:2 * H])
            n = jnp.tanh(gi[:, 2 * H:] + r * gh[:, 2 * H:])
            h_new = (1.0 - z) * n + z * h
            return h_new, h_new
        h0 = jnp.zeros((x_sbh.shape[1], H), jnp.float32)
        xs = x_sbh[::-1] if reverse else x_sbh
        _, ys = lax.scan(cell, h0, xs)
        return ys[::-1] if reverse else ys

    hs = [h.astype(jnp.float32) for h in hidden_states]
    pre = hs[-6]
    for i in range(5):
        feat = hs[-5 + i]
        x = feat + pre
        x_sbh = jnp.swapaxes(x, 0, 1)
        of = gru_dir(x_sbh, params["wih_f"], params["whh_f"],
                     params["bih_f"], params["bhh_f"], False)
        ob = gru_dir(x_sbh, params["wih_b"], params["whh_b"],
                     params["bih_b"], params["bhh_b"], True)
        rnn = jnp.tanh(jnp.swapaxes(of + ob, 0, 1))
        tn = jnp.tanh(bdot(x, params["dense_w"].T) + params["dense_b"][0])
        hi1 = jnp.tanh(pre)
        y = feat + tn + rnn + hi1
        mu = jnp.mean(y, axis=(1, 2), keepdims=True)
        var = jnp.mean((y - mu) ** 2, axis=(1, 2), keepdims=True)
        yn = (y - mu) / jnp.sqrt(var + LN_EPS)
        pre = yn * params["ln_w"][None] + params["ln_b"][None]
    B, S_, H_ = pre.shape
    out = jnp.mean(pre * attention_mask[:, :, None].astype(jnp.float32), axis=1)
    return out.reshape(B, 1, H_)


if __name__ == "__main__":
    key = jax.random.PRNGKey(0)
    B, S, H = 2, 8, 32          # small shapes (module's nominal: seq=128, hid=768)
    n_layers = 7                # need at least 6 hidden states

    k_hs, k_p = jax.random.split(key, 2)
    hs_keys = jax.random.split(k_hs, n_layers)
    hidden_states = tuple(
        jax.random.normal(k, (B, S, H), jnp.float32) * 0.5 for k in hs_keys)

    # binary attention mask with some padding on the second example
    lens = jnp.array([S, S - 3])
    attention_mask = (jnp.arange(S)[None, :] < lens[:, None]).astype(jnp.float32)

    params = init_params(k_p, S, H)

    out = bert_wrapper_rnn_forward(hidden_states, attention_mask, params)
    out = jax.block_until_ready(out)
    assert out.shape == (B, 1, H)

    ref = reference_forward(hidden_states, attention_mask, params)
    np.testing.assert_allclose(np.asarray(out), np.asarray(ref),
                               atol=2e-3, rtol=2e-3)
    print("KERNEL_OK")
</pallas_src>

<mosaic_0001>
module attributes {stable_mosaic.version = 11 : i64} {
  func.func @bert_wrapper_kernel(%arg0: i32, %arg1: memref<6x8x2x32xf32, #tpu.memory_space<vmem>>, %arg2: memref<2x8xf32, #tpu.memory_space<vmem>>, %arg3: memref<32x224xbf16, #tpu.memory_space<vmem>>, %arg4: memref<32x96xbf16, #tpu.memory_space<vmem>>, %arg5: memref<32x96xbf16, #tpu.memory_space<vmem>>, %arg6: memref<1x224xf32, #tpu.memory_space<vmem>>, %arg7: memref<1x32xf32, #tpu.memory_space<vmem>>, %arg8: memref<1x32xf32, #tpu.memory_space<vmem>>, %arg9: memref<8x32xf32, #tpu.memory_space<vmem>>, %arg10: memref<8x32xf32, #tpu.memory_space<vmem>>, %arg11: memref<2x32xf32, #tpu.memory_space<vmem>>, %arg12: memref<8x2x96xf32, #tpu.memory_space<vmem>>, %arg13: memref<8x2x96xf32, #tpu.memory_space<vmem>>, %arg14: memref<8x2x32xf32, #tpu.memory_space<vmem>>, %arg15: memref<8x2x32xf32, #tpu.memory_space<vmem>>) attributes {dimension_semantics = [#tpu.dimension_semantics<parallel>], iteration_bounds = array<i64: 1>, scalar_prefetch = 0 : i64, scratch_operands = 4 : i64, tpu.core_type = #tpu.core_type<tc>, window_params = [{transform_indices = @transform_0, window_bounds = array<i64: 6, 8, 2, 32>}, {transform_indices = @transform_1, window_bounds = array<i64: 2, 8>}, {pipeline_mode = #tpu.pipeline_mode<synchronous>, transform_indices = @transform_2, window_bounds = array<i64: 32, 224>}, {pipeline_mode = #tpu.pipeline_mode<synchronous>, transform_indices = @transform_3, window_bounds = array<i64: 32, 96>}, {pipeline_mode = #tpu.pipeline_mode<synchronous>, transform_indices = @transform_4, window_bounds = array<i64: 32, 96>}, {pipeline_mode = #tpu.pipeline_mode<synchronous>, transform_indices = @transform_5, window_bounds = array<i64: 1, 224>}, {pipeline_mode = #tpu.pipeline_mode<synchronous>, transform_indices = @transform_6, window_bounds = array<i64: 1, 32>}, {pipeline_mode = #tpu.pipeline_mode<synchronous>, transform_indices = @transform_7, window_bounds = array<i64: 1, 32>}, {pipeline_mode = #tpu.pipeline_mode<synchronous>, transform_indices = @transform_8, window_bounds = array<i64: 8, 32>}, {pipeline_mode = #tpu.pipeline_mode<synchronous>, transform_indices = @transform_9, window_bounds = array<i64: 8, 32>}, {transform_indices = @transform_10, window_bounds = array<i64: 2, 32>}]} {
    %c0 = arith.constant 0 : index
    %c0_0 = arith.constant 0 : index
    %0 = vector.load %arg3[%c0, %c0_0] : memref<32x224xbf16, #tpu.memory_space<vmem>>, vector<32x224xbf16>
    %c0_1 = arith.constant 0 : index
    %c0_2 = arith.constant 0 : index
    %1 = vector.load %arg4[%c0_1, %c0_2] : memref<32x96xbf16, #tpu.memory_space<vmem>>, vector<32x96xbf16>
    %c0_3 = arith.constant 0 : index
    %c0_4 = arith.constant 0 : index
    %2 = vector.load %arg5[%c0_3, %c0_4] : memref<32x96xbf16, #tpu.memory_space<vmem>>, vector<32x96xbf16>
    %c0_5 = arith.constant 0 : index
    %c0_6 = arith.constant 0 : index
    %3 = vector.load %arg6[%c0_5, %c0_6] : memref<1x224xf32, #tpu.memory_space<vmem>>, vector<1x224xf32>
    %c0_7 = arith.constant 0 : index
    %c0_8 = arith.constant 0 : index
    %4 = vector.load %arg7[%c0_7, %c0_8] : memref<1x32xf32, #tpu.memory_space<vmem>>, vector<1x32xf32>
    %5 = vector.shape_cast %4 : vector<1x32xf32> to vector<1x32xf32>
    %6 = vector.broadcast %5 : vector<1x32xf32> to vector<2x32xf32>
    %c0_9 = arith.constant 0 : index
    %c0_10 = arith.constant 0 : index
    %7 = vector.load %arg8[%c0_9, %c0_10] : memref<1x32xf32, #tpu.memory_space<vmem>>, vector<1x32xf32>
    %8 = vector.shape_cast %7 : vector<1x32xf32> to vector<1x32xf32>
    %9 = vector.broadcast %8 : vector<1x32xf32> to vector<2x32xf32>
    %c0_11 = arith.constant 0 : index
    %c0_12 = arith.constant 0 : index
    %10 = vector.load %arg9[%c0_11, %c0_12] : memref<8x32xf32, #tpu.memory_space<vmem>>, vector<8x32xf32>
    %11 = vector.shape_cast %10 : vector<8x32xf32> to vector<8x1x32xf32>
    %c0_13 = arith.constant 0 : index
    %c0_14 = arith.constant 0 : index
    %12 = vector.load %arg10[%c0_13, %c0_14] : memref<8x32xf32, #tpu.memory_space<vmem>>, vector<8x32xf32>
    %13 = vector.shape_cast %12 : vector<8x32xf32> to vector<8x1x32xf32>
    %cst = arith.constant 0.000000e+00 : f32
    %14 = vector.broadcast %cst : f32 to vector<2x32xf32>
    %c0_15 = arith.constant 0 : index
    %c0_16 = arith.constant 0 : index
    %c0_17 = arith.constant 0 : index
    %c0_18 = arith.constant 0 : index
    %15 = vector.load %arg1[%c0_15, %c0_16, %c0_17, %c0_18] : memref<6x8x2x32xf32, #tpu.memory_space<vmem>>, vector<1x8x2x32xf32>
    %16 = vector.shape_cast %15 : vector<1x8x2x32xf32> to vector<8x2x32xf32>
    %c1 = arith.constant 1 : index
    %c0_19 = arith.constant 0 : index
    %c0_20 = arith.constant 0 : index
    %c0_21 = arith.constant 0 : index
    %17 = vector.load %arg1[%c1, %c0_19, %c0_20, %c0_21] : memref<6x8x2x32xf32, #tpu.memory_space<vmem>>, vector<1x8x2x32xf32>
    %18 = vector.shape_cast %17 : vector<1x8x2x32xf32> to vector<8x2x32xf32>
    %19 = arith.addf %18, %16 : vector<8x2x32xf32>
    %20 = vector.shape_cast %19 : vector<8x2x32xf32> to vector<16x32xf32>
    %21 = arith.truncf %20 : vector<16x32xf32> to vector<16x32xbf16>
    %cst_22 = arith.constant dense<0.000000e+00> : vector<16x224xf32>
    %22 = tpu.matmul %21, %0, %cst_22 {dimension_numbers = #tpu.dot_dimension_numbers<[1], [0], [0], [1], [0, 0, 1, 1], [], []>} : vector<16x32xbf16>, vector<32x224xbf16>, vector<16x224xf32> -> vector<16x224xf32>
    %23 = vector.broadcast %3 : vector<1x224xf32> to vector<16x224xf32>
    %24 = arith.addf %22, %23 : vector<16x224xf32>
    %25 = vector.shape_cast %24 : vector<16x224xf32> to vector<8x2x224xf32>
    %26 = vector.extract_strided_slice %25 {offsets = [0, 0, 0], sizes = [8, 2, 96], strides = [1, 1, 1]} : vector<8x2x224xf32> to vector<8x2x96xf32>
    %c0_23 = arith.constant 0 : index
    %c0_24 = arith.constant 0 : index
    %c0_25 = arith.constant 0 : index
    %27 = vector.load %arg12[%c0_23, %c0_24, %c0_25] : memref<8x2x96xf32, #tpu.memory_space<vmem>>, vector<8x2x96xf32>
    tpu.vector_store %arg12[%c0_23, %c0_24, %c0_25], %26 {strides = array<i32>} : memref<8x2x96xf32, #tpu.memory_space<vmem>>, vector<8x2x96xf32>,
    %28 = vector.extract_strided_slice %25 {offsets = [0, 0, 96], sizes = [8, 2, 96], strides = [1, 1, 1]} : vector<8x2x224xf32> to vector<8x2x96xf32>
    %c0_26 = arith.constant 0 : index
    %c0_27 = arith.constant 0 : index
    %c0_28 = arith.constant 0 : index
    %29 = vector.load %arg13[%c0_26, %c0_27, %c0_28] : memref<8x2x96xf32, #tpu.memory_space<vmem>>, vector<8x2x96xf32>
    tpu.vector_store %arg13[%c0_26, %c0_27, %c0_28], %28 {strides = array<i32>} : memref<8x2x96xf32, #tpu.memory_space<vmem>>, vector<8x2x96xf32>,
    %30 = vector.extract_strided_slice %25 {offsets = [0, 0, 192], sizes = [8, 2, 32], strides = [1, 1, 1]} : vector<8x2x224xf32> to vector<8x2x32xf32>
    %31 = math.tanh %30 : vector<8x2x32xf32>
    %c0_i32 = arith.constant 0 : i32
    %c8_i32 = arith.constant 8 : i32
    %32 = arith.addi %c0_i32, %c8_i32 : i32
    %c1_i32 = arith.constant 1 : i32
    %33:2 = scf.for %arg16 = %c0_i32 to %32 step %c1_i32 iter_args(%arg17 = %14, %arg18 = %14) -> (vector<2x32xf32>, vector<2x32xf32>)  : i32 {
      %c7_i32 = arith.constant 7 : i32
      %261 = arith.subi %c7_i32, %arg16 : i32
      %262 = arith.index_cast %arg16 : i32 to index
      %c0_147 = arith.constant 0 : index
      %c0_148 = arith.constant 0 : index
      %263 = vector.load %arg12[%262, %c0_147, %c0_148] : memref<8x2x96xf32, #tpu.memory_space<vmem>>, vector<1x2x96xf32>
      %264 = vector.shape_cast %263 : vector<1x2x96xf32> to vector<2x96xf32>
      %265 = arith.index_cast %261 : i32 to index
      %c0_149 = arith.constant 0 : index
      %c0_150 = arith.constant 0 : index
      %266 = vector.load %arg13[%265, %c0_149, %c0_150] : memref<8x2x96xf32, #tpu.memory_space<vmem>>, vector<1x2x96xf32>
      %267 = vector.shape_cast %266 : vector<1x2x96xf32> to vector<2x96xf32>
      %268 = arith.truncf %arg17 : vector<2x32xf32> to vector<2x32xbf16>
      %cst_151 = arith.constant dense<0.000000e+00> : vector<2x96xf32>
      %269 = tpu.matmul %268, %1, %cst_151 {dimension_numbers = #tpu.dot_dimension_numbers<[1], [0], [0], [1], [0, 0, 1, 1], [], []>} : vector<2x32xbf16>, vector<32x96xbf16>, vector<2x96xf32> -> vector<2x96xf32>
      %270 = arith.truncf %arg18 : vector<2x32xf32> to vector<2x32xbf16>
      %cst_152 = arith.constant dense<0.000000e+00> : vector<2x96xf32>
      %271 = tpu.matmul %270, %2, %cst_152 {dimension_numbers = #tpu.dot_dimension_numbers<[1], [0], [0], [1], [0, 0, 1, 1], [], []>} : vector<2x32xbf16>, vector<32x96xbf16>, vector<2x96xf32> -> vector<2x96xf32>
      %272 = vector.extract_strided_slice %264 {offsets = [0, 0], sizes = [2, 32], strides = [1, 1]} : vector<2x96xf32> to vector<2x32xf32>
      %273 = vector.extract_strided_slice %269 {offsets = [0, 0], sizes = [2, 32], strides = [1, 1]} : vector<2x96xf32> to vector<2x32xf32>
      %274 = arith.addf %272, %273 : vector<2x32xf32>
      %275 = arith.negf %274 : vector<2x32xf32>
      %276 = math.exp %275 : vector<2x32xf32>
      %cst_153 = arith.constant 1.000000e+00 : f32
      %277 = vector.broadcast %cst_153 : f32 to vector<2x32xf32>
      %278 = arith.addf %277, %276 : vector<2x32xf32>
      %279 = arith.divf %277, %278 : vector<2x32xf32>
      %280 = vector.extract_strided_slice %264 {offsets = [0, 32], sizes = [2, 32], strides = [1, 1]} : vector<2x96xf32> to vector<2x32xf32>
      %281 = vector.extract_strided_slice %269 {offsets = [0, 32], sizes = [2, 32], strides = [1, 1]} : vector<2x96xf32> to vector<2x32xf32>
      %282 = arith.addf %280, %281 : vector<2x32xf32>
      %283 = arith.negf %282 : vector<2x32xf32>
      %284 = math.exp %283 : vector<2x32xf32>
      %cst_154 = arith.constant 1.000000e+00 : f32
      %285 = vector.broadcast %cst_154 : f32 to vector<2x32xf32>
      %286 = arith.addf %285, %284 : vector<2x32xf32>
      %287 = arith.divf %285, %286 : vector<2x32xf32>
      %288 = vector.extract_strided_slice %264 {offsets = [0, 64], sizes = [2, 32], strides = [1, 1]} : vector<2x96xf32> to vector<2x32xf32>
      %289 = vector.extract_strided_slice %269 {offsets = [0, 64], sizes = [2, 32], strides = [1, 1]} : vector<2x96xf32> to vector<2x32xf32>
      %290 = arith.addf %289, %6 : vector<2x32xf32>
      %291 = arith.mulf %279, %290 : vector<2x32xf32>
      %292 = arith.addf %288, %291 : vector<2x32xf32>
      %293 = math.tanh %292 : vector<2x32xf32>
      %cst_155 = arith.constant 1.000000e+00 : f32
      %294 = vector.broadcast %cst_155 : f32 to vector<2x32xf32>
      %295 = arith.subf %294, %287 : vector<2x32xf32>
      %296 = arith.mulf %295, %293 : vector<2x32xf32>
      %297 = arith.mulf %287, %arg17 : vector<2x32xf32>
      %298 = arith.addf %296, %297 : vector<2x32xf32>
      %299 = vector.extract_strided_slice %267 {offsets = [0, 0], sizes = [2, 32], strides = [1, 1]} : vector<2x96xf32> to vector<2x32xf32>
      %300 = vector.extract_strided_slice %271 {offsets = [0, 0], sizes = [2, 32], strides = [1, 1]} : vector<2x96xf32> to vector<2x32xf32>
      %301 = arith.addf %299, %300 : vector<2x32xf32>
      %302 = arith.negf %301 : vector<2x32xf32>
      %303 = math.exp %302 : vector<2x32xf32>
      %cst_156 = arith.constant 1.000000e+00 : f32
      %304 = vector.broadcast %cst_156 : f32 to vector<2x32xf32>
      %305 = arith.addf %304, %303 : vector<2x32xf32>
      %306 = arith.divf %304, %305 : vector<2x32xf32>
      %307 = vector.extract_strided_slice %267 {offsets = [0, 32], sizes = [2, 32], strides = [1, 1]} : vector<2x96xf32> to vector<2x32xf32>
      %308 = vector.extract_strided_slice %271 {offsets = [0, 32], sizes = [2, 32], strides = [1, 1]} : vector<2x96xf32> to vector<2x32xf32>
      %309 = arith.addf %307, %308 : vector<2x32xf32>
      %310 = arith.negf %309 : vector<2x32xf32>
      %311 = math.exp %310 : vector<2x32xf32>
      %cst_157 = arith.constant 1.000000e+00 : f32
      %312 = vector.broadcast %cst_157 : f32 to vector<2x32xf32>
      %313 = arith.addf %312, %311 : vector<2x32xf32>
      %314 = arith.divf %312, %313 : vector<2x32xf32>
      %315 = vector.extract_strided_slice %267 {offsets = [0, 64], sizes = [2, 32], strides = [1, 1]} : vector<2x96xf32> to vector<2x32xf32>
      %316 = vector.extract_strided_slice %271 {offsets = [0, 64], sizes = [2, 32], strides = [1, 1]} : vector<2x96xf32> to vector<2x32xf32>
      %317 = arith.addf %316, %9 : vector<2x32xf32>
      %318 = arith.mulf %306, %317 : vector<2x32xf32>
      %319 = arith.addf %315, %318 : vector<2x32xf32>
      %320 = math.tanh %319 : vector<2x32xf32>
      %cst_158 = arith.constant 1.000000e+00 : f32
      %321 = vector.broadcast %cst_158 : f32 to vector<2x32xf32>
      %322 = arith.subf %321, %314 : vector<2x32xf32>
      %323 = arith.mulf %322, %320 : vector<2x32xf32>
      %324 = arith.mulf %314, %arg18 : vector<2x32xf32>
      %325 = arith.addf %323, %324 : vector<2x32xf32>
      %326 = arith.index_cast %arg16 : i32 to index
      %c0_159 = arith.constant 0 : index
      %c0_160 = arith.constant 0 : index
      %327 = vector.load %arg14[%326, %c0_159, %c0_160] : memref<8x2x32xf32, #tpu.memory_space<vmem>>, vector<1x2x32xf32>
      %328 = vector.shape_cast %327 : vector<1x2x32xf32> to vector<2x32xf32>
      %329 = vector.shape_cast %298 : vector<2x32xf32> to vector<1x2x32xf32>
      tpu.vector_store %arg14[%326, %c0_159, %c0_160], %329 {strides = array<i32>} : memref<8x2x32xf32, #tpu.memory_space<vmem>>, vector<1x2x32xf32>,
      %330 = arith.index_cast %261 : i32 to index
      %c0_161 = arith.constant 0 : index
      %c0_162 = arith.constant 0 : index
      %331 = vector.load %arg15[%330, %c0_161, %c0_162] : memref<8x2x32xf32, #tpu.memory_space<vmem>>, vector<1x2x32xf32>
      %332 = vector.shape_cast %331 : vector<1x2x32xf32> to vector<2x32xf32>
      %333 = vector.shape_cast %325 : vector<2x32xf32> to vector<1x2x32xf32>
      tpu.vector_store %arg15[%330, %c0_161, %c0_162], %333 {strides = array<i32>} : memref<8x2x32xf32, #tpu.memory_space<vmem>>, vector<1x2x32xf32>,
      scf.yield %298, %325 : vector<2x32xf32>, vector<2x32xf32>
    }
    %c8_i32_29 = arith.constant 8 : i32
    %c0_30 = arith.constant 0 : index
    %c0_31 = arith.constant 0 : index
    %c0_32 = arith.constant 0 : index
    %34 = vector.load %arg14[%c0_30, %c0_31, %c0_32] : memref<8x2x32xf32, #tpu.memory_space<vmem>>, vector<8x2x32xf32>
    %c0_33 = arith.constant 0 : index
    %c0_34 = arith.constant 0 : index
    %c0_35 = arith.constant 0 : index
    %35 = vector.load %arg15[%c0_33, %c0_34, %c0_35] : memref<8x2x32xf32, #tpu.memory_space<vmem>>, vector<8x2x32xf32>
    %36 = arith.addf %34, %35 : vector<8x2x32xf32>
    %37 = math.tanh %36 : vector<8x2x32xf32>
    %38 = arith.addf %18, %31 : vector<8x2x32xf32>
    %39 = arith.addf %38, %37 : vector<8x2x32xf32>
    %40 = math.tanh %16 : vector<8x2x32xf32>
    %41 = arith.addf %39, %40 : vector<8x2x32xf32>
    %cst_36 = arith.constant dense<0.000000e+00> : vector<2xf32>
    %42 = vector.multi_reduction <add>, %41, %cst_36 [0, 2] : vector<8x2x32xf32> to vector<2xf32>
    %43 = vector.shape_cast %42 : vector<2xf32> to vector<1x2x1xf32>
    %cst_37 = arith.constant 2.560000e+02 : f32
    %44 = vector.broadcast %cst_37 : f32 to vector<1x2x1xf32>
    %45 = arith.divf %43, %44 : vector<1x2x1xf32>
    %46 = vector.broadcast %45 : vector<1x2x1xf32> to vector<8x2x32xf32>
    %47 = arith.subf %41, %46 : vector<8x2x32xf32>
    %48 = arith.mulf %47, %47 : vector<8x2x32xf32>
    %cst_38 = arith.constant dense<0.000000e+00> : vector<2xf32>
    %49 = vector.multi_reduction <add>, %48, %cst_38 [0, 2] : vector<8x2x32xf32> to vector<2xf32>
    %50 = vector.shape_cast %49 : vector<2xf32> to vector<1x2x1xf32>
    %cst_39 = arith.constant 2.560000e+02 : f32
    %51 = vector.broadcast %cst_39 : f32 to vector<1x2x1xf32>
    %52 = arith.divf %50, %51 : vector<1x2x1xf32>
    %53 = vector.broadcast %45 : vector<1x2x1xf32> to vector<8x2x32xf32>
    %54 = arith.subf %41, %53 : vector<8x2x32xf32>
    %cst_40 = arith.constant 9.99999996E-13 : f32
    %55 = vector.broadcast %cst_40 : f32 to vector<1x2x1xf32>
    %56 = arith.addf %52, %55 : vector<1x2x1xf32>
    %57 = math.rsqrt %56 : vector<1x2x1xf32>
    %58 = vector.broadcast %57 : vector<1x2x1xf32> to vector<8x2x32xf32>
    %59 = arith.mulf %54, %58 : vector<8x2x32xf32>
    %60 = vector.broadcast %11 : vector<8x1x32xf32> to vector<8x2x32xf32>
    %61 = arith.mulf %59, %60 : vector<8x2x32xf32>
    %62 = vector.broadcast %13 : vector<8x1x32xf32> to vector<8x2x32xf32>
    %63 = arith.addf %61, %62 : vector<8x2x32xf32>
    %c2 = arith.constant 2 : index
    %c0_41 = arith.constant 0 : index
    %c0_42 = arith.constant 0 : index
    %c0_43 = arith.constant 0 : index
    %64 = vector.load %arg1[%c2, %c0_41, %c0_42, %c0_43] : memref<6x8x2x32xf32, #tpu.memory_space<vmem>>, vector<1x8x2x32xf32>
    %65 = vector.shape_cast %64 : vector<1x8x2x32xf32> to vector<8x2x32xf32>
    %66 = arith.addf %65, %63 : vector<8x2x32xf32>
    %67 = vector.shape_cast %66 : vector<8x2x32xf32> to vector<16x32xf32>
    %68 = arith.truncf %67 : vector<16x32xf32> to vector<16x32xbf16>
    %cst_44 = arith.constant dense<0.000000e+00> : vector<16x224xf32>
    %69 = tpu.matmul %68, %0, %cst_44 {dimension_numbers = #tpu.dot_dimension_numbers<[1], [0], [0], [1], [0, 0, 1, 1], [], []>} : vector<16x32xbf16>, vector<32x224xbf16>, vector<16x224xf32> -> vector<16x224xf32>
    %70 = vector.broadcast %3 : vector<1x224xf32> to vector<16x224xf32>
    %71 = arith.addf %69, %70 : vector<16x224xf32>
    %72 = vector.shape_cast %71 : vector<16x224xf32> to vector<8x2x224xf32>
    %73 = vector.extract_strided_slice %72 {offsets = [0, 0, 0], sizes = [8, 2, 96], strides = [1, 1, 1]} : vector<8x2x224xf32> to vector<8x2x96xf32>
    %c0_45 = arith.constant 0 : index
    %c0_46 = arith.constant 0 : index
    %c0_47 = arith.constant 0 : index
    %74 = vector.load %arg12[%c0_45, %c0_46, %c0_47] : memref<8x2x96xf32, #tpu.memory_space<vmem>>, vector<8x2x96xf32>
    tpu.vector_store %arg12[%c0_45, %c0_46, %c0_47], %73 {strides = array<i32>} : memref<8x2x96xf32, #tpu.memory_space<vmem>>, vector<8x2x96xf32>,
    %75 = vector.extract_strided_slice %72 {offsets = [0, 0, 96], sizes = [8, 2, 96], strides = [1, 1, 1]} : vector<8x2x224xf32> to vector<8x2x96xf32>
    %c0_48 = arith.constant 0 : index
    %c0_49 = arith.constant 0 : index
    %c0_50 = arith.constant 0 : index
    %76 = vector.load %arg13[%c0_48, %c0_49, %c0_50] : memref<8x2x96xf32, #tpu.memory_space<vmem>>, vector<8x2x96xf32>
    tpu.vector_store %arg13[%c0_48, %c0_49, %c0_50], %75 {strides = array<i32>} : memref<8x2x96xf32, #tpu.memory_space<vmem>>, vector<8x2x96xf32>,
    %77 = vector.extract_strided_slice %72 {offsets = [0, 0, 192], sizes = [8, 2, 32], strides = [1, 1, 1]} : vector<8x2x224xf32> to vector<8x2x32xf32>
    %78 = math.tanh %77 : vector<8x2x32xf32>
    %c0_i32_51 = arith.constant 0 : i32
    %c8_i32_52 = arith.constant 8 : i32
    %79 = arith.addi %c0_i32_51, %c8_i32_52 : i32
    %c1_i32_53 = arith.constant 1 : i32
    %80:2 = scf.for %arg16 = %c0_i32_51 to %79 step %c1_i32_53 iter_args(%arg17 = %14, %arg18 = %14) -> (vector<2x32xf32>, vector<2x32xf32>)  : i32 {
      %c7_i32 = arith.constant 7 : i32
      %261 = arith.subi %c7_i32, %arg16 : i32
      %262 = arith.index_cast %arg16 : i32 to index
      %c0_147 = arith.constant 0 : index
      %c0_148 = arith.constant 0 : index
      %263 = vector.load %arg12[%262, %c0_147, %c0_148] : memref<8x2x96xf32, #tpu.memory_space<vmem>>, vector<1x2x96xf32>
      %264 = vector.shape_cast %263 : vector<1x2x96xf32> to vector<2x96xf32>
      %265 = arith.index_cast %261 : i32 to index
      %c0_149 = arith.constant 0 : index
      %c0_150 = arith.constant 0 : index
      %266 = vector.load %arg13[%265, %c0_149, %c0_150] : memref<8x2x96xf32, #tpu.memory_space<vmem>>, vector<1x2x96xf32>
      %267 = vector.shape_cast %266 : vector<1x2x96xf32> to vector<2x96xf32>
      %268 = arith.truncf %arg17 : vector<2x32xf32> to vector<2x32xbf16>
      %cst_151 = arith.constant dense<0.000000e+00> : vector<2x96xf32>
      %269 = tpu.matmul %268, %1, %cst_151 {dimension_numbers = #tpu.dot_dimension_numbers<[1], [0], [0], [1], [0, 0, 1, 1], [], []>} : vector<2x32xbf16>, vector<32x96xbf16>, vector<2x96xf32> -> vector<2x96xf32>
      %270 = arith.truncf %arg18 : vector<2x32xf32> to vector<2x32xbf16>
      %cst_152 = arith.constant dense<0.000000e+00> : vector<2x96xf32>
      %271 = tpu.matmul %270, %2, %cst_152 {dimension_numbers = #tpu.dot_dimension_numbers<[1], [0], [0], [1], [0, 0, 1, 1], [], []>} : vector<2x32xbf16>, vector<32x96xbf16>, vector<2x96xf32> -> vector<2x96xf32>
      %272 = vector.extract_strided_slice %264 {offsets = [0, 0], sizes = [2, 32], strides = [1, 1]} : vector<2x96xf32> to vector<2x32xf32>
      %273 = vector.extract_strided_slice %269 {offsets = [0, 0], sizes = [2, 32], strides = [1, 1]} : vector<2x96xf32> to vector<2x32xf32>
      %274 = arith.addf %272, %273 : vector<2x32xf32>
      %275 = arith.negf %274 : vector<2x32xf32>
      %276 = math.exp %275 : vector<2x32xf32>
      %cst_153 = arith.constant 1.000000e+00 : f32
      %277 = vector.broadcast %cst_153 : f32 to vector<2x32xf32>
      %278 = arith.addf %277, %276 : vector<2x32xf32>
      %279 = arith.divf %277, %278 : vector<2x32xf32>
      %280 = vector.extract_strided_slice %264 {offsets = [0, 32], sizes = [2, 32], strides = [1, 1]} : vector<2x96xf32> to vector<2x32xf32>
      %281 = vector.extract_strided_slice %269 {offsets = [0, 32], sizes = [2, 32], strides = [1, 1]} : vector<2x96xf32> to vector<2x32xf32>
      %282 = arith.addf %280, %281 : vector<2x32xf32>
      %283 = arith.negf %282 : vector<2x32xf32>
      %284 = math.exp %283 : vector<2x32xf32>
      %cst_154 = arith.constant 1.000000e+00 : f32
      %285 = vector.broadcast %cst_154 : f32 to vector<2x32xf32>
      %286 = arith.addf %285, %284 : vector<2x32xf32>
      %287 = arith.divf %285, %286 : vector<2x32xf32>
      %288 = vector.extract_strided_slice %264 {offsets = [0, 64], sizes = [2, 32], strides = [1, 1]} : vector<2x96xf32> to vector<2x32xf32>
      %289 = vector.extract_strided_slice %269 {offsets = [0, 64], sizes = [2, 32], strides = [1, 1]} : vector<2x96xf32> to vector<2x32xf32>
      %290 = arith.addf %289, %6 : vector<2x32xf32>
      %291 = arith.mulf %279, %290 : vector<2x32xf32>
      %292 = arith.addf %288, %291 : vector<2x32xf32>
      %293 = math.tanh %292 : vector<2x32xf32>
      %cst_155 = arith.constant 1.000000e+00 : f32
      %294 = vector.broadcast %cst_155 : f32 to vector<2x32xf32>
      %295 = arith.subf %294, %287 : vector<2x32xf32>
      %296 = arith.mulf %295, %293 : vector<2x32xf32>
      %297 = arith.mulf %287, %arg17 : vector<2x32xf32>
      %298 = arith.addf %296, %297 : vector<2x32xf32>
      %299 = vector.extract_strided_slice %267 {offsets = [0, 0], sizes = [2, 32], strides = [1, 1]} : vector<2x96xf32> to vector<2x32xf32>
      %300 = vector.extract_strided_slice %271 {offsets = [0, 0], sizes = [2, 32], strides = [1, 1]} : vector<2x96xf32> to vector<2x32xf32>
      %301 = arith.addf %299, %300 : vector<2x32xf32>
      %302 = arith.negf %301 : vector<2x32xf32>
      %303 = math.exp %302 : vector<2x32xf32>
      %cst_156 = arith.constant 1.000000e+00 : f32
      %304 = vector.broadcast %cst_156 : f32 to vector<2x32xf32>
      %305 = arith.addf %304, %303 : vector<2x32xf32>
      %306 = arith.divf %304, %305 : vector<2x32xf32>
      %307 = vector.extract_strided_slice %267 {offsets = [0, 32], sizes = [2, 32], strides = [1, 1]} : vector<2x96xf32> to vector<2x32xf32>
      %308 = vector.extract_strided_slice %271 {offsets = [0, 32], sizes = [2, 32], strides = [1, 1]} : vector<2x96xf32> to vector<2x32xf32>
      %309 = arith.addf %307, %308 : vector<2x32xf32>
      %310 = arith.negf %309 : vector<2x32xf32>
      %311 = math.exp %310 : vector<2x32xf32>
      %cst_157 = arith.constant 1.000000e+00 : f32
      %312 = vector.broadcast %cst_157 : f32 to vector<2x32xf32>
      %313 = arith.addf %312, %311 : vector<2x32xf32>
      %314 = arith.divf %312, %313 : vector<2x32xf32>
      %315 = vector.extract_strided_slice %267 {offsets = [0, 64], sizes = [2, 32], strides = [1, 1]} : vector<2x96xf32> to vector<2x32xf32>
      %316 = vector.extract_strided_slice %271 {offsets = [0, 64], sizes = [2, 32], strides = [1, 1]} : vector<2x96xf32> to vector<2x32xf32>
      %317 = arith.addf %316, %9 : vector<2x32xf32>
      %318 = arith.mulf %306, %317 : vector<2x32xf32>
      %319 = arith.addf %315, %318 : vector<2x32xf32>
      %320 = math.tanh %319 : vector<2x32xf32>
      %cst_158 = arith.constant 1.000000e+00 : f32
      %321 = vector.broadcast %cst_158 : f32 to vector<2x32xf32>
      %322 = arith.subf %321, %314 : vector<2x32xf32>
      %323 = arith.mulf %322, %320 : vector<2x32xf32>
      %324 = arith.mulf %314, %arg18 : vector<2x32xf32>
      %325 = arith.addf %323, %324 : vector<2x32xf32>
      %326 = arith.index_cast %arg16 : i32 to index
      %c0_159 = arith.constant 0 : index
      %c0_160 = arith.constant 0 : index
      %327 = vector.load %arg14[%326, %c0_159, %c0_160] : memref<8x2x32xf32, #tpu.memory_space<vmem>>, vector<1x2x32xf32>
      %328 = vector.shape_cast %327 : vector<1x2x32xf32> to vector<2x32xf32>
      %329 = vector.shape_cast %298 : vector<2x32xf32> to vector<1x2x32xf32>
      tpu.vector_store %arg14[%326, %c0_159, %c0_160], %329 {strides = array<i32>} : memref<8x2x32xf32, #tpu.memory_space<vmem>>, vector<1x2x32xf32>,
      %330 = arith.index_cast %261 : i32 to index
      %c0_161 = arith.constant 0 : index
      %c0_162 = arith.constant 0 : index
      %331 = vector.load %arg15[%330, %c0_161, %c0_162] : memref<8x2x32xf32, #tpu.memory_space<vmem>>, vector<1x2x32xf32>
      %332 = vector.shape_cast %331 : vector<1x2x32xf32> to vector<2x32xf32>
      %333 = vector.shape_cast %325 : vector<2x32xf32> to vector<1x2x32xf32>
      tpu.vector_store %arg15[%330, %c0_161, %c0_162], %333 {strides = array<i32>} : memref<8x2x32xf32, #tpu.memory_space<vmem>>, vector<1x2x32xf32>,
      scf.yield %298, %325 : vector<2x32xf32>, vector<2x32xf32>
    }
    %c8_i32_54 = arith.constant 8 : i32
    %c0_55 = arith.constant 0 : index
    %c0_56 = arith.constant 0 : index
    %c0_57 = arith.constant 0 : index
    %81 = vector.load %arg14[%c0_55, %c0_56, %c0_57] : memref<8x2x32xf32, #tpu.memory_space<vmem>>, vector<8x2x32xf32>
    %c0_58 = arith.constant 0 : index
    %c0_59 = arith.constant 0 : index
    %c0_60 = arith.constant 0 : index
    %82 = vector.load %arg15[%c0_58, %c0_59, %c0_60] : memref<8x2x32xf32, #tpu.memory_space<vmem>>, vector<8x2x32xf32>
    %83 = arith.addf %81, %82 : vector<8x2x32xf32>
    %84 = math.tanh %83 : vector<8x2x32xf32>
    %85 = arith.addf %65, %78 : vector<8x2x32xf32>
    %86 = arith.addf %85, %84 : vector<8x2x32xf32>
    %87 = math.tanh %63 : vector<8x2x32xf32>
    %88 = arith.addf %86, %87 : vector<8x2x32xf32>
    %cst_61 = arith.constant dense<0.000000e+00> : vector<2xf32>
    %89 = vector.multi_reduction <add>, %88, %cst_61 [0, 2] : vector<8x2x32xf32> to vector<2xf32>
    %90 = vector.shape_cast %89 : vector<2xf32> to vector<1x2x1xf32>
    %cst_62 = arith.constant 2.560000e+02 : f32
    %91 = vector.broadcast %cst_62 : f32 to vector<1x2x1xf32>
    %92 = arith.divf %90, %91 : vector<1x2x1xf32>
    %93 = vector.broadcast %92 : vector<1x2x1xf32> to vector<8x2x32xf32>
    %94 = arith.subf %88, %93 : vector<8x2x32xf32>
    %95 = arith.mulf %94, %94 : vector<8x2x32xf32>
    %cst_63 = arith.constant dense<0.000000e+00> : vector<2xf32>
    %96 = vector.multi_reduction <add>, %95, %cst_63 [0, 2] : vector<8x2x32xf32> to vector<2xf32>
    %97 = vector.shape_cast %96 : vector<2xf32> to vector<1x2x1xf32>
    %cst_64 = arith.constant 2.560000e+02 : f32
    %98 = vector.broadcast %cst_64 : f32 to vector<1x2x1xf32>
    %99 = arith.divf %97, %98 : vector<1x2x1xf32>
    %100 = vector.broadcast %92 : vector<1x2x1xf32> to vector<8x2x32xf32>
    %101 = arith.subf %88, %100 : vector<8x2x32xf32>
    %cst_65 = arith.constant 9.99999996E-13 : f32
    %102 = vector.broadcast %cst_65 : f32 to vector<1x2x1xf32>
    %103 = arith.addf %99, %102 : vector<1x2x1xf32>
    %104 = math.rsqrt %103 : vector<1x2x1xf32>
    %105 = vector.broadcast %104 : vector<1x2x1xf32> to vector<8x2x32xf32>
    %106 = arith.mulf %101, %105 : vector<8x2x32xf32>
    %107 = vector.broadcast %11 : vector<8x1x32xf32> to vector<8x2x32xf32>
    %108 = arith.mulf %106, %107 : vector<8x2x32xf32>
    %109 = vector.broadcast %13 : vector<8x1x32xf32> to vector<8x2x32xf32>
    %110 = arith.addf %108, %109 : vector<8x2x32xf32>
    %c3 = arith.constant 3 : index
    %c0_66 = arith.constant 0 : index
    %c0_67 = arith.constant 0 : index
    %c0_68 = arith.constant 0 : index
    %111 = vector.load %arg1[%c3, %c0_66, %c0_67, %c0_68] : memref<6x8x2x32xf32, #tpu.memory_space<vmem>>, vector<1x8x2x32xf32>
    %112 = vector.shape_cast %111 : vector<1x8x2x32xf32> to vector<8x2x32xf32>
    %113 = arith.addf %112, %110 : vector<8x2x32xf32>
    %114 = vector.shape_cast %113 : vector<8x2x32xf32> to vector<16x32xf32>
    %115 = arith.truncf %114 : vector<16x32xf32> to vector<16x32xbf16>
    %cst_69 = arith.constant dense<0.000000e+00> : vector<16x224xf32>
    %116 = tpu.matmul %115, %0, %cst_69 {dimension_numbers = #tpu.dot_dimension_numbers<[1], [0], [0], [1], [0, 0, 1, 1], [], []>} : vector<16x32xbf16>, vector<32x224xbf16>, vector<16x224xf32> -> vector<16x224xf32>
    %117 = vector.broadcast %3 : vector<1x224xf32> to vector<16x224xf32>
    %118 = arith.addf %116, %117 : vector<16x224xf32>
    %119 = vector.shape_cast %118 : vector<16x224xf32> to vector<8x2x224xf32>
    %120 = vector.extract_strided_slice %119 {offsets = [0, 0, 0], sizes = [8, 2, 96], strides = [1, 1, 1]} : vector<8x2x224xf32> to vector<8x2x96xf32>
    %c0_70 = arith.constant 0 : index
    %c0_71 = arith.constant 0 : index
    %c0_72 = arith.constant 0 : index
    %121 = vector.load %arg12[%c0_70, %c0_71, %c0_72] : memref<8x2x96xf32, #tpu.memory_space<vmem>>, vector<8x2x96xf32>
    tpu.vector_store %arg12[%c0_70, %c0_71, %c0_72], %120 {strides = array<i32>} : memref<8x2x96xf32, #tpu.memory_space<vmem>>, vector<8x2x96xf32>,
    %122 = vector.extract_strided_slice %119 {offsets = [0, 0, 96], sizes = [8, 2, 96], strides = [1, 1, 1]} : vector<8x2x224xf32> to vector<8x2x96xf32>
    %c0_73 = arith.constant 0 : index
    %c0_74 = arith.constant 0 : index
    %c0_75 = arith.constant 0 : index
    %123 = vector.load %arg13[%c0_73, %c0_74, %c0_75] : memref<8x2x96xf32, #tpu.memory_space<vmem>>, vector<8x2x96xf32>
    tpu.vector_store %arg13[%c0_73, %c0_74, %c0_75], %122 {strides = array<i32>} : memref<8x2x96xf32, #tpu.memory_space<vmem>>, vector<8x2x96xf32>,
    %124 = vector.extract_strided_slice %119 {offsets = [0, 0, 192], sizes = [8, 2, 32], strides = [1, 1, 1]} : vector<8x2x224xf32> to vector<8x2x32xf32>
    %125 = math.tanh %124 : vector<8x2x32xf32>
    %c0_i32_76 = arith.constant 0 : i32
    %c8_i32_77 = arith.constant 8 : i32
    %126 = arith.addi %c0_i32_76, %c8_i32_77 : i32
    %c1_i32_78 = arith.constant 1 : i32
    %127:2 = scf.for %arg16 = %c0_i32_76 to %126 step %c1_i32_78 iter_args(%arg17 = %14, %arg18 = %14) -> (vector<2x32xf32>, vector<2x32xf32>)  : i32 {
      %c7_i32 = arith.constant 7 : i32
      %261 = arith.subi %c7_i32, %arg16 : i32
      %262 = arith.index_cast %arg16 : i32 to index
      %c0_147 = arith.constant 0 : index
      %c0_148 = arith.constant 0 : index
      %263 = vector.load %arg12[%262, %c0_147, %c0_148] : memref<8x2x96xf32, #tpu.memory_space<vmem>>, vector<1x2x96xf32>
      %264 = vector.shape_cast %263 : vector<1x2x96xf32> to vector<2x96xf32>
      %265 = arith.index_cast %261 : i32 to index
      %c0_149 = arith.constant 0 : index
      %c0_150 = arith.constant 0 : index
      %266 = vector.load %arg13[%265, %c0_149, %c0_150] : memref<8x2x96xf32, #tpu.memory_space<vmem>>, vector<1x2x96xf32>
      %267 = vector.shape_cast %266 : vector<1x2x96xf32> to vector<2x96xf32>
      %268 = arith.truncf %arg17 : vector<2x32xf32> to vector<2x32xbf16>
      %cst_151 = arith.constant dense<0.000000e+00> : vector<2x96xf32>
      %269 = tpu.matmul %268, %1, %cst_151 {dimension_numbers = #tpu.dot_dimension_numbers<[1], [0], [0], [1], [0, 0, 1, 1], [], []>} : vector<2x32xbf16>, vector<32x96xbf16>, vector<2x96xf32> -> vector<2x96xf32>
      %270 = arith.truncf %arg18 : vector<2x32xf32> to vector<2x32xbf16>
      %cst_152 = arith.constant dense<0.000000e+00> : vector<2x96xf32>
      %271 = tpu.matmul %270, %2, %cst_152 {dimension_numbers = #tpu.dot_dimension_numbers<[1], [0], [0], [1], [0, 0, 1, 1], [], []>} : vector<2x32xbf16>, vector<32x96xbf16>, vector<2x96xf32> -> vector<2x96xf32>
      %272 = vector.extract_strided_slice %264 {offsets = [0, 0], sizes = [2, 32], strides = [1, 1]} : vector<2x96xf32> to vector<2x32xf32>
      %273 = vector.extract_strided_slice %269 {offsets = [0, 0], sizes = [2, 32], strides = [1, 1]} : vector<2x96xf32> to vector<2x32xf32>
      %274 = arith.addf %272, %273 : vector<2x32xf32>
      %275 = arith.negf %274 : vector<2x32xf32>
      %276 = math.exp %275 : vector<2x32xf32>
      %cst_153 = arith.constant 1.000000e+00 : f32
      %277 = vector.broadcast %cst_153 : f32 to vector<2x32xf32>
      %278 = arith.addf %277, %276 : vector<2x32xf32>
      %279 = arith.divf %277, %278 : vector<2x32xf32>
      %280 = vector.extract_strided_slice %264 {offsets = [0, 32], sizes = [2, 32], strides = [1, 1]} : vector<2x96xf32> to vector<2x32xf32>
      %281 = vector.extract_strided_slice %269 {offsets = [0, 32], sizes = [2, 32], strides = [1, 1]} : vector<2x96xf32> to vector<2x32xf32>
      %282 = arith.addf %280, %281 : vector<2x32xf32>
      %283 = arith.negf %282 : vector<2x32xf32>
      %284 = math.exp %283 : vector<2x32xf32>
      %cst_154 = arith.constant 1.000000e+00 : f32
      %285 = vector.broadcast %cst_154 : f32 to vector<2x32xf32>
      %286 = arith.addf %285, %284 : vector<2x32xf32>
      %287 = arith.divf %285, %286 : vector<2x32xf32>
      %288 = vector.extract_strided_slice %264 {offsets = [0, 64], sizes = [2, 32], strides = [1, 1]} : vector<2x96xf32> to vector<2x32xf32>
      %289 = vector.extract_strided_slice %269 {offsets = [0, 64], sizes = [2, 32], strides = [1, 1]} : vector<2x96xf32> to vector<2x32xf32>
      %290 = arith.addf %289, %6 : vector<2x32xf32>
      %291 = arith.mulf %279, %290 : vector<2x32xf32>
      %292 = arith.addf %288, %291 : vector<2x32xf32>
      %293 = math.tanh %292 : vector<2x32xf32>
      %cst_155 = arith.constant 1.000000e+00 : f32
      %294 = vector.broadcast %cst_155 : f32 to vector<2x32xf32>
      %295 = arith.subf %294, %287 : vector<2x32xf32>
      %296 = arith.mulf %295, %293 : vector<2x32xf32>
      %297 = arith.mulf %287, %arg17 : vector<2x32xf32>
      %298 = arith.addf %296, %297 : vector<2x32xf32>
      %299 = vector.extract_strided_slice %267 {offsets = [0, 0], sizes = [2, 32], strides = [1, 1]} : vector<2x96xf32> to vector<2x32xf32>
      %300 = vector.extract_strided_slice %271 {offsets = [0, 0], sizes = [2, 32], strides = [1, 1]} : vector<2x96xf32> to vector<2x32xf32>
      %301 = arith.addf %299, %300 : vector<2x32xf32>
      %302 = arith.negf %301 : vector<2x32xf32>
      %303 = math.exp %302 : vector<2x32xf32>
      %cst_156 = arith.constant 1.000000e+00 : f32
      %304 = vector.broadcast %cst_156 : f32 to vector<2x32xf32>
      %305 = arith.addf %304, %303 : vector<2x32xf32>
      %306 = arith.divf %304, %305 : vector<2x32xf32>
      %307 = vector.extract_strided_slice %267 {offsets = [0, 32], sizes = [2, 32], strides = [1, 1]} : vector<2x96xf32> to vector<2x32xf32>
      %308 = vector.extract_strided_slice %271 {offsets = [0, 32], sizes = [2, 32], strides = [1, 1]} : vector<2x96xf32> to vector<2x32xf32>
      %309 = arith.addf %307, %308 : vector<2x32xf32>
      %310 = arith.negf %309 : vector<2x32xf32>
      %311 = math.exp %310 : vector<2x32xf32>
      %cst_157 = arith.constant 1.000000e+00 : f32
      %312 = vector.broadcast %cst_157 : f32 to vector<2x32xf32>
      %313 = arith.addf %312, %311 : vector<2x32xf32>
      %314 = arith.divf %312, %313 : vector<2x32xf32>
      %315 = vector.extract_strided_slice %267 {offsets = [0, 64], sizes = [2, 32], strides = [1, 1]} : vector<2x96xf32> to vector<2x32xf32>
      %316 = vector.extract_strided_slice %271 {offsets = [0, 64], sizes = [2, 32], strides = [1, 1]} : vector<2x96xf32> to vector<2x32xf32>
      %317 = arith.addf %316, %9 : vector<2x32xf32>
      %318 = arith.mulf %306, %317 : vector<2x32xf32>
      %319 = arith.addf %315, %318 : vector<2x32xf32>
      %320 = math.tanh %319 : vector<2x32xf32>
      %cst_158 = arith.constant 1.000000e+00 : f32
      %321 = vector.broadcast %cst_158 : f32 to vector<2x32xf32>
      %322 = arith.subf %321, %314 : vector<2x32xf32>
      %323 = arith.mulf %322, %320 : vector<2x32xf32>
      %324 = arith.mulf %314, %arg18 : vector<2x32xf32>
      %325 = arith.addf %323, %324 : vector<2x32xf32>
      %326 = arith.index_cast %arg16 : i32 to index
      %c0_159 = arith.constant 0 : index
      %c0_160 = arith.constant 0 : index
      %327 = vector.load %arg14[%326, %c0_159, %c0_160] : memref<8x2x32xf32, #tpu.memory_space<vmem>>, vector<1x2x32xf32>
      %328 = vector.shape_cast %327 : vector<1x2x32xf32> to vector<2x32xf32>
      %329 = vector.shape_cast %298 : vector<2x32xf32> to vector<1x2x32xf32>
      tpu.vector_store %arg14[%326, %c0_159, %c0_160], %329 {strides = array<i32>} : memref<8x2x32xf32, #tpu.memory_space<vmem>>, vector<1x2x32xf32>,
      %330 = arith.index_cast %261 : i32 to index
      %c0_161 = arith.constant 0 : index
      %c0_162 = arith.constant 0 : index
      %331 = vector.load %arg15[%330, %c0_161, %c0_162] : memref<8x2x32xf32, #tpu.memory_space<vmem>>, vector<1x2x32xf32>
      %332 = vector.shape_cast %331 : vector<1x2x32xf32> to vector<2x32xf32>
      %333 = vector.shape_cast %325 : vector<2x32xf32> to vector<1x2x32xf32>
      tpu.vector_store %arg15[%330, %c0_161, %c0_162], %333 {strides = array<i32>} : memref<8x2x32xf32, #tpu.memory_space<vmem>>, vector<1x2x32xf32>,
      scf.yield %298, %325 : vector<2x32xf32>, vector<2x32xf32>
    }
    %c8_i32_79 = arith.constant 8 : i32
    %c0_80 = arith.constant 0 : index
    %c0_81 = arith.constant 0 : index
    %c0_82 = arith.constant 0 : index
    %128 = vector.load %arg14[%c0_80, %c0_81, %c0_82] : memref<8x2x32xf32, #tpu.memory_space<vmem>>, vector<8x2x32xf32>
    %c0_83 = arith.constant 0 : index
    %c0_84 = arith.constant 0 : index
    %c0_85 = arith.constant 0 : index
    %129 = vector.load %arg15[%c0_83, %c0_84, %c0_85] : memref<8x2x32xf32, #tpu.memory_space<vmem>>, vector<8x2x32xf32>
    %130 = arith.addf %128, %129 : vector<8x2x32xf32>
    %131 = math.tanh %130 : vector<8x2x32xf32>
    %132 = arith.addf %112, %125 : vector<8x2x32xf32>
    %133 = arith.addf %132, %131 : vector<8x2x32xf32>
    %134 = math.tanh %110 : vector<8x2x32xf32>
    %135 = arith.addf %133, %134 : vector<8x2x32xf32>
    %cst_86 = arith.constant dense<0.000000e+00> : vector<2xf32>
    %136 = vector.multi_reduction <add>, %135, %cst_86 [0, 2] : vector<8x2x32xf32> to vector<2xf32>
    %137 = vector.shape_cast %136 : vector<2xf32> to vector<1x2x1xf32>
    %cst_87 = arith.constant 2.560000e+02 : f32
    %138 = vector.broadcast %cst_87 : f32 to vector<1x2x1xf32>
    %139 = arith.divf %137, %138 : vector<1x2x1xf32>
    %140 = vector.broadcast %139 : vector<1x2x1xf32> to vector<8x2x32xf32>
    %141 = arith.subf %135, %140 : vector<8x2x32xf32>
    %142 = arith.mulf %141, %141 : vector<8x2x32xf32>
    %cst_88 = arith.constant dense<0.000000e+00> : vector<2xf32>
    %143 = vector.multi_reduction <add>, %142, %cst_88 [0, 2] : vector<8x2x32xf32> to vector<2xf32>
    %144 = vector.shape_cast %143 : vector<2xf32> to vector<1x2x1xf32>
    %cst_89 = arith.constant 2.560000e+02 : f32
    %145 = vector.broadcast %cst_89 : f32 to vector<1x2x1xf32>
    %146 = arith.divf %144, %145 : vector<1x2x1xf32>
    %147 = vector.broadcast %139 : vector<1x2x1xf32> to vector<8x2x32xf32>
    %148 = arith.subf %135, %147 : vector<8x2x32xf32>
    %cst_90 = arith.constant 9.99999996E-13 : f32
    %149 = vector.broadcast %cst_90 : f32 to vector<1x2x1xf32>
    %150 = arith.addf %146, %149 : vector<1x2x1xf32>
    %151 = math.rsqrt %150 : vector<1x2x1xf32>
    %152 = vector.broadcast %151 : vector<1x2x1xf32> to vector<8x2x32xf32>
    %153 = arith.mulf %148, %152 : vector<8x2x32xf32>
    %154 = vector.broadcast %11 : vector<8x1x32xf32> to vector<8x2x32xf32>
    %155 = arith.mulf %153, %154 : vector<8x2x32xf32>
    %156 = vector.broadcast %13 : vector<8x1x32xf32> to vector<8x2x32xf32>
    %157 = arith.addf %155, %156 : vector<8x2x32xf32>
    %c4 = arith.constant 4 : index
    %c0_91 = arith.constant 0 : index
    %c0_92 = arith.constant 0 : index
    %c0_93 = arith.constant 0 : index
    %158 = vector.load %arg1[%c4, %c0_91, %c0_92, %c0_93] : memref<6x8x2x32xf32, #tpu.memory_space<vmem>>, vector<1x8x2x32xf32>
    %159 = vector.shape_cast %158 : vector<1x8x2x32xf32> to vector<8x2x32xf32>
    %160 = arith.addf %159, %157 : vector<8x2x32xf32>
    %161 = vector.shape_cast %160 : vector<8x2x32xf32> to vector<16x32xf32>
    %162 = arith.truncf %161 : vector<16x32xf32> to vector<16x32xbf16>
    %cst_94 = arith.constant dense<0.000000e+00> : vector<16x224xf32>
    %163 = tpu.matmul %162, %0, %cst_94 {dimension_numbers = #tpu.dot_dimension_numbers<[1], [0], [0], [1], [0, 0, 1, 1], [], []>} : vector<16x32xbf16>, vector<32x224xbf16>, vector<16x224xf32> -> vector<16x224xf32>
    %164 = vector.broadcast %3 : vector<1x224xf32> to vector<16x224xf32>
    %165 = arith.addf %163, %164 : vector<16x224xf32>
    %166 = vector.shape_cast %165 : vector<16x224xf32> to vector<8x2x224xf32>
    %167 = vector.extract_strided_slice %166 {offsets = [0, 0, 0], sizes = [8, 2, 96], strides = [1, 1, 1]} : vector<8x2x224xf32> to vector<8x2x96xf32>
    %c0_95 = arith.constant 0 : index
    %c0_96 = arith.constant 0 : index
    %c0_97 = arith.constant 0 : index
    %168 = vector.load %arg12[%c0_95, %c0_96, %c0_97] : memref<8x2x96xf32, #tpu.memory_space<vmem>>, vector<8x2x96xf32>
    tpu.vector_store %arg12[%c0_95, %c0_96, %c0_97], %167 {strides = array<i32>} : memref<8x2x96xf32, #tpu.memory_space<vmem>>, vector<8x2x96xf32>,
    %169 = vector.extract_strided_slice %166 {offsets = [0, 0, 96], sizes = [8, 2, 96], strides = [1, 1, 1]} : vector<8x2x224xf32> to vector<8x2x96xf32>
    %c0_98 = arith.constant 0 : index
    %c0_99 = arith.constant 0 : index
    %c0_100 = arith.constant 0 : index
    %170 = vector.load %arg13[%c0_98, %c0_99, %c0_100] : memref<8x2x96xf32, #tpu.memory_space<vmem>>, vector<8x2x96xf32>
    tpu.vector_store %arg13[%c0_98, %c0_99, %c0_100], %169 {strides = array<i32>} : memref<8x2x96xf32, #tpu.memory_space<vmem>>, vector<8x2x96xf32>,
    %171 = vector.extract_strided_slice %166 {offsets = [0, 0, 192], sizes = [8, 2, 32], strides = [1, 1, 1]} : vector<8x2x224xf32> to vector<8x2x32xf32>
    %172 = math.tanh %171 : vector<8x2x32xf32>
    %c0_i32_101 = arith.constant 0 : i32
    %c8_i32_102 = arith.constant 8 : i32
    %173 = arith.addi %c0_i32_101, %c8_i32_102 : i32
    %c1_i32_103 = arith.constant 1 : i32
    %174:2 = scf.for %arg16 = %c0_i32_101 to %173 step %c1_i32_103 iter_args(%arg17 = %14, %arg18 = %14) -> (vector<2x32xf32>, vector<2x32xf32>)  : i32 {
      %c7_i32 = arith.constant 7 : i32
      %261 = arith.subi %c7_i32, %arg16 : i32
      %262 = arith.index_cast %arg16 : i32 to index
      %c0_147 = arith.constant 0 : index
      %c0_148 = arith.constant 0 : index
      %263 = vector.load %arg12[%262, %c0_147, %c0_148] : memref<8x2x96xf32, #tpu.memory_space<vmem>>, vector<1x2x96xf32>
      %264 = vector.shape_cast %263 : vector<1x2x96xf32> to vector<2x96xf32>
      %265 = arith.index_cast %261 : i32 to index
      %c0_149 = arith.constant 0 : index
      %c0_150 = arith.constant 0 : index
      %266 = vector.load %arg13[%265, %c0_149, %c0_150] : memref<8x2x96xf32, #tpu.memory_space<vmem>>, vector<1x2x96xf32>
      %267 = vector.shape_cast %266 : vector<1x2x96xf32> to vector<2x96xf32>
      %268 = arith.truncf %arg17 : vector<2x32xf32> to vector<2x32xbf16>
      %cst_151 = arith.constant dense<0.000000e+00> : vector<2x96xf32>
      %269 = tpu.matmul %268, %1, %cst_151 {dimension_numbers = #tpu.dot_dimension_numbers<[1], [0], [0], [1], [0, 0, 1, 1], [], []>} : vector<2x32xbf16>, vector<32x96xbf16>, vector<2x96xf32> -> vector<2x96xf32>
      %270 = arith.truncf %arg18 : vector<2x32xf32> to vector<2x32xbf16>
      %cst_152 = arith.constant dense<0.000000e+00> : vector<2x96xf32>
      %271 = tpu.matmul %270, %2, %cst_152 {dimension_numbers = #tpu.dot_dimension_numbers<[1], [0], [0], [1], [0, 0, 1, 1], [], []>} : vector<2x32xbf16>, vector<32x96xbf16>, vector<2x96xf32> -> vector<2x96xf32>
      %272 = vector.extract_strided_slice %264 {offsets = [0, 0], sizes = [2, 32], strides = [1, 1]} : vector<2x96xf32> to vector<2x32xf32>
      %273 = vector.extract_strided_slice %269 {offsets = [0, 0], sizes = [2, 32], strides = [1, 1]} : vector<2x96xf32> to vector<2x32xf32>
      %274 = arith.addf %272, %273 : vector<2x32xf32>
      %275 = arith.negf %274 : vector<2x32xf32>
      %276 = math.exp %275 : vector<2x32xf32>
      %cst_153 = arith.constant 1.000000e+00 : f32
      %277 = vector.broadcast %cst_153 : f32 to vector<2x32xf32>
      %278 = arith.addf %277, %276 : vector<2x32xf32>
      %279 = arith.divf %277, %278 : vector<2x32xf32>
      %280 = vector.extract_strided_slice %264 {offsets = [0, 32], sizes = [2, 32], strides = [1, 1]} : vector<2x96xf32> to vector<2x32xf32>
      %281 = vector.extract_strided_slice %269 {offsets = [0, 32], sizes = [2, 32], strides = [1, 1]} : vector<2x96xf32> to vector<2x32xf32>
      %282 = arith.addf %280, %281 : vector<2x32xf32>
      %283 = arith.negf %282 : vector<2x32xf32>
      %284 = math.exp %283 : vector<2x32xf32>
      %cst_154 = arith.constant 1.000000e+00 : f32
      %285 = vector.broadcast %cst_154 : f32 to vector<2x32xf32>
      %286 = arith.addf %285, %284 : vector<2x32xf32>
      %287 = arith.divf %285, %286 : vector<2x32xf32>
      %288 = vector.extract_strided_slice %264 {offsets = [0, 64], sizes = [2, 32], strides = [1, 1]} : vector<2x96xf32> to vector<2x32xf32>
      %289 = vector.extract_strided_slice %269 {offsets = [0, 64], sizes = [2, 32], strides = [1, 1]} : vector<2x96xf32> to vector<2x32xf32>
      %290 = arith.addf %289, %6 : vector<2x32xf32>
      %291 = arith.mulf %279, %290 : vector<2x32xf32>
      %292 = arith.addf %288, %291 : vector<2x32xf32>
      %293 = math.tanh %292 : vector<2x32xf32>
      %cst_155 = arith.constant 1.000000e+00 : f32
      %294 = vector.broadcast %cst_155 : f32 to vector<2x32xf32>
      %295 = arith.subf %294, %287 : vector<2x32xf32>
      %296 = arith.mulf %295, %293 : vector<2x32xf32>
      %297 = arith.mulf %287, %arg17 : vector<2x32xf32>
      %298 = arith.addf %296, %297 : vector<2x32xf32>
      %299 = vector.extract_strided_slice %267 {offsets = [0, 0], sizes = [2, 32], strides = [1, 1]} : vector<2x96xf32> to vector<2x32xf32>
      %300 = vector.extract_strided_slice %271 {offsets = [0, 0], sizes = [2, 32], strides = [1, 1]} : vector<2x96xf32> to vector<2x32xf32>
      %301 = arith.addf %299, %300 : vector<2x32xf32>
      %302 = arith.negf %301 : vector<2x32xf32>
      %303 = math.exp %302 : vector<2x32xf32>
      %cst_156 = arith.constant 1.000000e+00 : f32
      %304 = vector.broadcast %cst_156 : f32 to vector<2x32xf32>
      %305 = arith.addf %304, %303 : vector<2x32xf32>
      %306 = arith.divf %304, %305 : vector<2x32xf32>
      %307 = vector.extract_strided_slice %267 {offsets = [0, 32], sizes = [2, 32], strides = [1, 1]} : vector<2x96xf32> to vector<2x32xf32>
      %308 = vector.extract_strided_slice %271 {offsets = [0, 32], sizes = [2, 32], strides = [1, 1]} : vector<2x96xf32> to vector<2x32xf32>
      %309 = arith.addf %307, %308 : vector<2x32xf32>
      %310 = arith.negf %309 : vector<2x32xf32>
      %311 = math.exp %310 : vector<2x32xf32>
      %cst_157 = arith.constant 1.000000e+00 : f32
      %312 = vector.broadcast %cst_157 : f32 to vector<2x32xf32>
      %313 = arith.addf %312, %311 : vector<2x32xf32>
      %314 = arith.divf %312, %313 : vector<2x32xf32>
      %315 = vector.extract_strided_slice %267 {offsets = [0, 64], sizes = [2, 32], strides = [1, 1]} : vector<2x96xf32> to vector<2x32xf32>
      %316 = vector.extract_strided_slice %271 {offsets = [0, 64], sizes = [2, 32], strides = [1, 1]} : vector<2x96xf32> to vector<2x32xf32>
      %317 = arith.addf %316, %9 : vector<2x32xf32>
      %318 = arith.mulf %306, %317 : vector<2x32xf32>
      %319 = arith.addf %315, %318 : vector<2x32xf32>
      %320 = math.tanh %319 : vector<2x32xf32>
      %cst_158 = arith.constant 1.000000e+00 : f32
      %321 = vector.broadcast %cst_158 : f32 to vector<2x32xf32>
      %322 = arith.subf %321, %314 : vector<2x32xf32>
      %323 = arith.mulf %322, %320 : vector<2x32xf32>
      %324 = arith.mulf %314, %arg18 : vector<2x32xf32>
      %325 = arith.addf %323, %324 : vector<2x32xf32>
      %326 = arith.index_cast %arg16 : i32 to index
      %c0_159 = arith.constant 0 : index
      %c0_160 = arith.constant 0 : index
      %327 = vector.load %arg14[%326, %c0_159, %c0_160] : memref<8x2x32xf32, #tpu.memory_space<vmem>>, vector<1x2x32xf32>
      %328 = vector.shape_cast %327 : vector<1x2x32xf32> to vector<2x32xf32>
      %329 = vector.shape_cast %298 : vector<2x32xf32> to vector<1x2x32xf32>
      tpu.vector_store %arg14[%326, %c0_159, %c0_160], %329 {strides = array<i32>} : memref<8x2x32xf32, #tpu.memory_space<vmem>>, vector<1x2x32xf32>,
      %330 = arith.index_cast %261 : i32 to index
      %c0_161 = arith.constant 0 : index
      %c0_162 = arith.constant 0 : index
      %331 = vector.load %arg15[%330, %c0_161, %c0_162] : memref<8x2x32xf32, #tpu.memory_space<vmem>>, vector<1x2x32xf32>
      %332 = vector.shape_cast %331 : vector<1x2x32xf32> to vector<2x32xf32>
      %333 = vector.shape_cast %325 : vector<2x32xf32> to vector<1x2x32xf32>
      tpu.vector_store %arg15[%330, %c0_161, %c0_162], %333 {strides = array<i32>} : memref<8x2x32xf32, #tpu.memory_space<vmem>>, vector<1x2x32xf32>,
      scf.yield %298, %325 : vector<2x32xf32>, vector<2x32xf32>
    }
    %c8_i32_104 = arith.constant 8 : i32
    %c0_105 = arith.constant 0 : index
    %c0_106 = arith.constant 0 : index
    %c0_107 = arith.constant 0 : index
    %175 = vector.load %arg14[%c0_105, %c0_106, %c0_107] : memref<8x2x32xf32, #tpu.memory_space<vmem>>, vector<8x2x32xf32>
    %c0_108 = arith.constant 0 : index
    %c0_109 = arith.constant 0 : index
    %c0_110 = arith.constant 0 : index
    %176 = vector.load %arg15[%c0_108, %c0_109, %c0_110] : memref<8x2x32xf32, #tpu.memory_space<vmem>>, vector<8x2x32xf32>
    %177 = arith.addf %175, %176 : vector<8x2x32xf32>
    %178 = math.tanh %177 : vector<8x2x32xf32>
    %179 = arith.addf %159, %172 : vector<8x2x32xf32>
    %180 = arith.addf %179, %178 : vector<8x2x32xf32>
    %181 = math.tanh %157 : vector<8x2x32xf32>
    %182 = arith.addf %180, %181 : vector<8x2x32xf32>
    %cst_111 = arith.constant dense<0.000000e+00> : vector<2xf32>
    %183 = vector.multi_reduction <add>, %182, %cst_111 [0, 2] : vector<8x2x32xf32> to vector<2xf32>
    %184 = vector.shape_cast %183 : vector<2xf32> to vector<1x2x1xf32>
    %cst_112 = arith.constant 2.560000e+02 : f32
    %185 = vector.broadcast %cst_112 : f32 to vector<1x2x1xf32>
    %186 = arith.divf %184, %185 : vector<1x2x1xf32>
    %187 = vector.broadcast %186 : vector<1x2x1xf32> to vector<8x2x32xf32>
    %188 = arith.subf %182, %187 : vector<8x2x32xf32>
    %189 = arith.mulf %188, %188 : vector<8x2x32xf32>
    %cst_113 = arith.constant dense<0.000000e+00> : vector<2xf32>
    %190 = vector.multi_reduction <add>, %189, %cst_113 [0, 2] : vector<8x2x32xf32> to vector<2xf32>
    %191 = vector.shape_cast %190 : vector<2xf32> to vector<1x2x1xf32>
    %cst_114 = arith.constant 2.560000e+02 : f32
    %192 = vector.broadcast %cst_114 : f32 to vector<1x2x1xf32>
    %193 = arith.divf %191, %192 : vector<1x2x1xf32>
    %194 = vector.broadcast %186 : vector<1x2x1xf32> to vector<8x2x32xf32>
    %195 = arith.subf %182, %194 : vector<8x2x32xf32>
    %cst_115 = arith.constant 9.99999996E-13 : f32
    %196 = vector.broadcast %cst_115 : f32 to vector<1x2x1xf32>
    %197 = arith.addf %193, %196 : vector<1x2x1xf32>
    %198 = math.rsqrt %197 : vector<1x2x1xf32>
    %199 = vector.broadcast %198 : vector<1x2x1xf32> to vector<8x2x32xf32>
    %200 = arith.mulf %195, %199 : vector<8x2x32xf32>
    %201 = vector.broadcast %11 : vector<8x1x32xf32> to vector<8x2x32xf32>
    %202 = arith.mulf %200, %201 : vector<8x2x32xf32>
    %203 = vector.broadcast %13 : vector<8x1x32xf32> to vector<8x2x32xf32>
    %204 = arith.addf %202, %203 : vector<8x2x32xf32>
    %c5 = arith.constant 5 : index
    %c0_116 = arith.constant 0 : index
    %c0_117 = arith.constant 0 : index
    %c0_118 = arith.constant 0 : index
    %205 = vector.load %arg1[%c5, %c0_116, %c0_117, %c0_118] : memref<6x8x2x32xf32, #tpu.memory_space<vmem>>, vector<1x8x2x32xf32>
    %206 = vector.shape_cast %205 : vector<1x8x2x32xf32> to vector<8x2x32xf32>
    %207 = arith.addf %206, %204 : vector<8x2x32xf32>
    %208 = vector.shape_cast %207 : vector<8x2x32xf32> to vector<16x32xf32>
    %209 = arith.truncf %208 : vector<16x32xf32> to vector<16x32xbf16>
    %cst_119 = arith.constant dense<0.000000e+00> : vector<16x224xf32>
    %210 = tpu.matmul %209, %0, %cst_119 {dimension_numbers = #tpu.dot_dimension_numbers<[1], [0], [0], [1], [0, 0, 1, 1], [], []>} : vector<16x32xbf16>, vector<32x224xbf16>, vector<16x224xf32> -> vector<16x224xf32>
    %211 = vector.broadcast %3 : vector<1x224xf32> to vector<16x224xf32>
    %212 = arith.addf %210, %211 : vector<16x224xf32>
    %213 = vector.shape_cast %212 : vector<16x224xf32> to vector<8x2x224xf32>
    %214 = vector.extract_strided_slice %213 {offsets = [0, 0, 0], sizes = [8, 2, 96], strides = [1, 1, 1]} : vector<8x2x224xf32> to vector<8x2x96xf32>
    %c0_120 = arith.constant 0 : index
    %c0_121 = arith.constant 0 : index
    %c0_122 = arith.constant 0 : index
    %215 = vector.load %arg12[%c0_120, %c0_121, %c0_122] : memref<8x2x96xf32, #tpu.memory_space<vmem>>, vector<8x2x96xf32>
    tpu.vector_store %arg12[%c0_120, %c0_121, %c0_122], %214 {strides = array<i32>} : memref<8x2x96xf32, #tpu.memory_space<vmem>>, vector<8x2x96xf32>,
    %216 = vector.extract_strided_slice %213 {offsets = [0, 0, 96], sizes = [8, 2, 96], strides = [1, 1, 1]} : vector<8x2x224xf32> to vector<8x2x96xf32>
    %c0_123 = arith.constant 0 : index
    %c0_124 = arith.constant 0 : index
    %c0_125 = arith.constant 0 : index
    %217 = vector.load %arg13[%c0_123, %c0_124, %c0_125] : memref<8x2x96xf32, #tpu.memory_space<vmem>>, vector<8x2x96xf32>
    tpu.vector_store %arg13[%c0_123, %c0_124, %c0_125], %216 {strides = array<i32>} : memref<8x2x96xf32, #tpu.memory_space<vmem>>, vector<8x2x96xf32>,
    %218 = vector.extract_strided_slice %213 {offsets = [0, 0, 192], sizes = [8, 2, 32], strides = [1, 1, 1]} : vector<8x2x224xf32> to vector<8x2x32xf32>
    %219 = math.tanh %218 : vector<8x2x32xf32>
    %c0_i32_126 = arith.constant 0 : i32
    %c8_i32_127 = arith.constant 8 : i32
    %220 = arith.addi %c0_i32_126, %c8_i32_127 : i32
    %c1_i32_128 = arith.constant 1 : i32
    %221:2 = scf.for %arg16 = %c0_i32_126 to %220 step %c1_i32_128 iter_args(%arg17 = %14, %arg18 = %14) -> (vector<2x32xf32>, vector<2x32xf32>)  : i32 {
      %c7_i32 = arith.constant 7 : i32
      %261 = arith.subi %c7_i32, %arg16 : i32
      %262 = arith.index_cast %arg16 : i32 to index
      %c0_147 = arith.constant 0 : index
      %c0_148 = arith.constant 0 : index
      %263 = vector.load %arg12[%262, %c0_147, %c0_148] : memref<8x2x96xf32, #tpu.memory_space<vmem>>, vector<1x2x96xf32>
      %264 = vector.shape_cast %263 : vector<1x2x96xf32> to vector<2x96xf32>
      %265 = arith.index_cast %261 : i32 to index
      %c0_149 = arith.constant 0 : index
      %c0_150 = arith.constant 0 : index
      %266 = vector.load %arg13[%265, %c0_149, %c0_150] : memref<8x2x96xf32, #tpu.memory_space<vmem>>, vector<1x2x96xf32>
      %267 = vector.shape_cast %266 : vector<1x2x96xf32> to vector<2x96xf32>
      %268 = arith.truncf %arg17 : vector<2x32xf32> to vector<2x32xbf16>
      %cst_151 = arith.constant dense<0.000000e+00> : vector<2x96xf32>
      %269 = tpu.matmul %268, %1, %cst_151 {dimension_numbers = #tpu.dot_dimension_numbers<[1], [0], [0], [1], [0, 0, 1, 1], [], []>} : vector<2x32xbf16>, vector<32x96xbf16>, vector<2x96xf32> -> vector<2x96xf32>
      %270 = arith.truncf %arg18 : vector<2x32xf32> to vector<2x32xbf16>
      %cst_152 = arith.constant dense<0.000000e+00> : vector<2x96xf32>
      %271 = tpu.matmul %270, %2, %cst_152 {dimension_numbers = #tpu.dot_dimension_numbers<[1], [0], [0], [1], [0, 0, 1, 1], [], []>} : vector<2x32xbf16>, vector<32x96xbf16>, vector<2x96xf32> -> vector<2x96xf32>
      %272 = vector.extract_strided_slice %264 {offsets = [0, 0], sizes = [2, 32], strides = [1, 1]} : vector<2x96xf32> to vector<2x32xf32>
      %273 = vector.extract_strided_slice %269 {offsets = [0, 0], sizes = [2, 32], strides = [1, 1]} : vector<2x96xf32> to vector<2x32xf32>
      %274 = arith.addf %272, %273 : vector<2x32xf32>
      %275 = arith.negf %274 : vector<2x32xf32>
      %276 = math.exp %275 : vector<2x32xf32>
      %cst_153 = arith.constant 1.000000e+00 : f32
      %277 = vector.broadcast %cst_153 : f32 to vector<2x32xf32>
      %278 = arith.addf %277, %276 : vector<2x32xf32>
      %279 = arith.divf %277, %278 : vector<2x32xf32>
      %280 = vector.extract_strided_slice %264 {offsets = [0, 32], sizes = [2, 32], strides = [1, 1]} : vector<2x96xf32> to vector<2x32xf32>
      %281 = vector.extract_strided_slice %269 {offsets = [0, 32], sizes = [2, 32], strides = [1, 1]} : vector<2x96xf32> to vector<2x32xf32>
      %282 = arith.addf %280, %281 : vector<2x32xf32>
      %283 = arith.negf %282 : vector<2x32xf32>
      %284 = math.exp %283 : vector<2x32xf32>
      %cst_154 = arith.constant 1.000000e+00 : f32
      %285 = vector.broadcast %cst_154 : f32 to vector<2x32xf32>
      %286 = arith.addf %285, %284 : vector<2x32xf32>
      %287 = arith.divf %285, %286 : vector<2x32xf32>
      %288 = vector.extract_strided_slice %264 {offsets = [0, 64], sizes = [2, 32], strides = [1, 1]} : vector<2x96xf32> to vector<2x32xf32>
      %289 = vector.extract_strided_slice %269 {offsets = [0, 64], sizes = [2, 32], strides = [1, 1]} : vector<2x96xf32> to vector<2x32xf32>
      %290 = arith.addf %289, %6 : vector<2x32xf32>
      %291 = arith.mulf %279, %290 : vector<2x32xf32>
      %292 = arith.addf %288, %291 : vector<2x32xf32>
      %293 = math.tanh %292 : vector<2x32xf32>
      %cst_155 = arith.constant 1.000000e+00 : f32
      %294 = vector.broadcast %cst_155 : f32 to vector<2x32xf32>
      %295 = arith.subf %294, %287 : vector<2x32xf32>
      %296 = arith.mulf %295, %293 : vector<2x32xf32>
      %297 = arith.mulf %287, %arg17 : vector<2x32xf32>
      %298 = arith.addf %296, %297 : vector<2x32xf32>
      %299 = vector.extract_strided_slice %267 {offsets = [0, 0], sizes = [2, 32], strides = [1, 1]} : vector<2x96xf32> to vector<2x32xf32>
      %300 = vector.extract_strided_slice %271 {offsets = [0, 0], sizes = [2, 32], strides = [1, 1]} : vector<2x96xf32> to vector<2x32xf32>
      %301 = arith.addf %299, %300 : vector<2x32xf32>
      %302 = arith.negf %301 : vector<2x32xf32>
      %303 = math.exp %302 : vector<2x32xf32>
      %cst_156 = arith.constant 1.000000e+00 : f32
      %304 = vector.broadcast %cst_156 : f32 to vector<2x32xf32>
      %305 = arith.addf %304, %303 : vector<2x32xf32>
      %306 = arith.divf %304, %305 : vector<2x32xf32>
      %307 = vector.extract_strided_slice %267 {offsets = [0, 32], sizes = [2, 32], strides = [1, 1]} : vector<2x96xf32> to vector<2x32xf32>
      %308 = vector.extract_strided_slice %271 {offsets = [0, 32], sizes = [2, 32], strides = [1, 1]} : vector<2x96xf32> to vector<2x32xf32>
      %309 = arith.addf %307, %308 : vector<2x32xf32>
      %310 = arith.negf %309 : vector<2x32xf32>
      %311 = math.exp %310 : vector<2x32xf32>
      %cst_157 = arith.constant 1.000000e+00 : f32
      %312 = vector.broadcast %cst_157 : f32 to vector<2x32xf32>
      %313 = arith.addf %312, %311 : vector<2x32xf32>
      %314 = arith.divf %312, %313 : vector<2x32xf32>
      %315 = vector.extract_strided_slice %267 {offsets = [0, 64], sizes = [2, 32], strides = [1, 1]} : vector<2x96xf32> to vector<2x32xf32>
      %316 = vector.extract_strided_slice %271 {offsets = [0, 64], sizes = [2, 32], strides = [1, 1]} : vector<2x96xf32> to vector<2x32xf32>
      %317 = arith.addf %316, %9 : vector<2x32xf32>
      %318 = arith.mulf %306, %317 : vector<2x32xf32>
      %319 = arith.addf %315, %318 : vector<2x32xf32>
      %320 = math.tanh %319 : vector<2x32xf32>
      %cst_158 = arith.constant 1.000000e+00 : f32
      %321 = vector.broadcast %cst_158 : f32 to vector<2x32xf32>
      %322 = arith.subf %321, %314 : vector<2x32xf32>
      %323 = arith.mulf %322, %320 : vector<2x32xf32>
      %324 = arith.mulf %314, %arg18 : vector<2x32xf32>
      %325 = arith.addf %323, %324 : vector<2x32xf32>
      %326 = arith.index_cast %arg16 : i32 to index
      %c0_159 = arith.constant 0 : index
      %c0_160 = arith.constant 0 : index
      %327 = vector.load %arg14[%326, %c0_159, %c0_160] : memref<8x2x32xf32, #tpu.memory_space<vmem>>, vector<1x2x32xf32>
      %328 = vector.shape_cast %327 : vector<1x2x32xf32> to vector<2x32xf32>
      %329 = vector.shape_cast %298 : vector<2x32xf32> to vector<1x2x32xf32>
      tpu.vector_store %arg14[%326, %c0_159, %c0_160], %329 {strides = array<i32>} : memref<8x2x32xf32, #tpu.memory_space<vmem>>, vector<1x2x32xf32>,
      %330 = arith.index_cast %261 : i32 to index
      %c0_161 = arith.constant 0 : index
      %c0_162 = arith.constant 0 : index
      %331 = vector.load %arg15[%330, %c0_161, %c0_162] : memref<8x2x32xf32, #tpu.memory_space<vmem>>, vector<1x2x32xf32>
      %332 = vector.shape_cast %331 : vector<1x2x32xf32> to vector<2x32xf32>
      %333 = vector.shape_cast %325 : vector<2x32xf32> to vector<1x2x32xf32>
      tpu.vector_store %arg15[%330, %c0_161, %c0_162], %333 {strides = array<i32>} : memref<8x2x32xf32, #tpu.memory_space<vmem>>, vector<1x2x32xf32>,
      scf.yield %298, %325 : vector<2x32xf32>, vector<2x32xf32>
    }
    %c8_i32_129 = arith.constant 8 : i32
    %c0_130 = arith.constant 0 : index
    %c0_131 = arith.constant 0 : index
    %c0_132 = arith.constant 0 : index
    %222 = vector.load %arg14[%c0_130, %c0_131, %c0_132] : memref<8x2x32xf32, #tpu.memory_space<vmem>>, vector<8x2x32xf32>
    %c0_133 = arith.constant 0 : index
    %c0_134 = arith.constant 0 : index
    %c0_135 = arith.constant 0 : index
    %223 = vector.load %arg15[%c0_133, %c0_134, %c0_135] : memref<8x2x32xf32, #tpu.memory_space<vmem>>, vector<8x2x32xf32>
    %224 = arith.addf %222, %223 : vector<8x2x32xf32>
    %225 = math.tanh %224 : vector<8x2x32xf32>
    %226 = arith.addf %206, %219 : vector<8x2x32xf32>
    %227 = arith.addf %226, %225 : vector<8x2x32xf32>
    %228 = math.tanh %204 : vector<8x2x32xf32>
    %229 = arith.addf %227, %228 : vector<8x2x32xf32>
    %cst_136 = arith.constant dense<0.000000e+00> : vector<2xf32>
    %230 = vector.multi_reduction <add>, %229, %cst_136 [0, 2] : vector<8x2x32xf32> to vector<2xf32>
    %231 = vector.shape_cast %230 : vector<2xf32> to vector<1x2x1xf32>
    %cst_137 = arith.constant 2.560000e+02 : f32
    %232 = vector.broadcast %cst_137 : f32 to vector<1x2x1xf32>
    %233 = arith.divf %231, %232 : vector<1x2x1xf32>
    %234 = vector.broadcast %233 : vector<1x2x1xf32> to vector<8x2x32xf32>
    %235 = arith.subf %229, %234 : vector<8x2x32xf32>
    %236 = arith.mulf %235, %235 : vector<8x2x32xf32>
    %cst_138 = arith.constant dense<0.000000e+00> : vector<2xf32>
    %237 = vector.multi_reduction <add>, %236, %cst_138 [0, 2] : vector<8x2x32xf32> to vector<2xf32>
    %238 = vector.shape_cast %237 : vector<2xf32> to vector<1x2x1xf32>
    %cst_139 = arith.constant 2.560000e+02 : f32
    %239 = vector.broadcast %cst_139 : f32 to vector<1x2x1xf32>
    %240 = arith.divf %238, %239 : vector<1x2x1xf32>
    %241 = vector.broadcast %233 : vector<1x2x1xf32> to vector<8x2x32xf32>
    %242 = arith.subf %229, %241 : vector<8x2x32xf32>
    %cst_140 = arith.constant 9.99999996E-13 : f32
    %243 = vector.broadcast %cst_140 : f32 to vector<1x2x1xf32>
    %244 = arith.addf %240, %243 : vector<1x2x1xf32>
    %245 = math.rsqrt %244 : vector<1x2x1xf32>
    %246 = vector.broadcast %245 : vector<1x2x1xf32> to vector<8x2x32xf32>
    %247 = arith.mulf %242, %246 : vector<8x2x32xf32>
    %248 = vector.broadcast %11 : vector<8x1x32xf32> to vector<8x2x32xf32>
    %249 = arith.mulf %247, %248 : vector<8x2x32xf32>
    %250 = vector.broadcast %13 : vector<8x1x32xf32> to vector<8x2x32xf32>
    %251 = arith.addf %249, %250 : vector<8x2x32xf32>
    %c0_141 = arith.constant 0 : index
    %c0_142 = arith.constant 0 : index
    %252 = vector.load %arg2[%c0_141, %c0_142] : memref<2x8xf32, #tpu.memory_space<vmem>>, vector<2x8xf32>
    %253 = tpu.transpose %252, [1, 0] : vector<2x8xf32> -> vector<8x2xf32>
    %254 = vector.shape_cast %253 : vector<8x2xf32> to vector<8x2x1xf32>
    %255 = vector.broadcast %254 : vector<8x2x1xf32> to vector<8x2x32xf32>
    %256 = arith.mulf %251, %255 : vector<8x2x32xf32>
    %cst_143 = arith.constant dense<0.000000e+00> : vector<2x32xf32>
    %257 = vector.multi_reduction <add>, %256, %cst_143 [0] : vector<8x2x32xf32> to vector<2x32xf32>
    %cst_144 = arith.constant 1.250000e-01 : f32
    %258 = vector.broadcast %cst_144 : f32 to vector<2x32xf32>
    %259 = arith.mulf %257, %258 : vector<2x32xf32>
    %c0_145 = arith.constant 0 : index
    %c0_146 = arith.constant 0 : index
    %260 = vector.load %arg11[%c0_145, %c0_146] : memref<2x32xf32, #tpu.memory_space<vmem>>, vector<2x32xf32>
    tpu.vector_store %arg11[%c0_145, %c0_146], %259 {strides = array<i32>} : memref<2x32xf32, #tpu.memory_space<vmem>>, vector<2x32xf32>,
    return
  }
  func.func @transform_0(%arg0: i32) -> (i32, i32, i32, i32) {
    %c0_i32 = arith.constant 0 : i32
    %c0_i32_0 = arith.constant 0 : i32
    %c0_i32_1 = arith.constant 0 : i32
    %c0_i32_2 = arith.constant 0 : i32
    return %c0_i32, %c0_i32_0, %arg0, %c0_i32_1 : i32, i32, i32, i32
  }
  func.func @transform_1(%arg0: i32) -> (i32, i32) {
    %c0_i32 = arith.constant 0 : i32
    %c0_i32_0 = arith.constant 0 : i32
    return %arg0, %c0_i32 : i32, i32
  }
  func.func @transform_2(%arg0: i32) -> (i32, i32) {
    %c0_i32 = arith.constant 0 : i32
    %c0_i32_0 = arith.constant 0 : i32
    %c0_i32_1 = arith.constant 0 : i32
    return %c0_i32, %c0_i32_0 : i32, i32
  }
  func.func @transform_3(%arg0: i32) -> (i32, i32) {
    %c0_i32 = arith.constant 0 : i32
    %c0_i32_0 = arith.constant 0 : i32
    %c0_i32_1 = arith.constant 0 : i32
    return %c0_i32, %c0_i32_0 : i32, i32
  }
  func.func @transform_4(%arg0: i32) -> (i32, i32) {
    %c0_i32 = arith.constant 0 : i32
    %c0_i32_0 = arith.constant 0 : i32
    %c0_i32_1 = arith.constant 0 : i32
    return %c0_i32, %c0_i32_0 : i32, i32
  }
  func.func @transform_5(%arg0: i32) -> (i32, i32) {
    %c0_i32 = arith.constant 0 : i32
    %c0_i32_0 = arith.constant 0 : i32
    %c0_i32_1 = arith.constant 0 : i32
    return %c0_i32, %c0_i32_0 : i32, i32
  }
  func.func @transform_6(%arg0: i32) -> (i32, i32) {
    %c0_i32 = arith.constant 0 : i32
    %c0_i32_0 = arith.constant 0 : i32
    %c0_i32_1 = arith.constant 0 : i32
    return %c0_i32, %c0_i32_0 : i32, i32
  }
  func.func @transform_7(%arg0: i32) -> (i32, i32) {
    %c0_i32 = arith.constant 0 : i32
    %c0_i32_0 = arith.constant 0 : i32
    %c0_i32_1 = arith.constant 0 : i32
    return %c0_i32, %c0_i32_0 : i32, i32
  }
  func.func @transform_8(%arg0: i32) -> (i32, i32) {
    %c0_i32 = arith.constant 0 : i32
    %c0_i32_0 = arith.constant 0 : i32
    %c0_i32_1 = arith.constant 0 : i32
    return %c0_i32, %c0_i32_0 : i32, i32
  }
  func.func @transform_9(%arg0: i32) -> (i32, i32) {
    %c0_i32 = arith.constant 0 : i32
    %c0_i32_0 = arith.constant 0 : i32
    %c0_i32_1 = arith.constant 0 : i32
    return %c0_i32, %c0_i32_0 : i32, i32
  }
  func.func @transform_10(%arg0: i32) -> (i32, i32) {
    %c0_i32 = arith.constant 0 : i32
    %c0_i32_0 = arith.constant 0 : i32
    return %arg0, %c0_i32 : i32, i32
  }
}

</mosaic_0001>

<llo_original>
// kernel: bert_wrapper_rnn_forward.1
$region0: #{bert_wrapper_rnn_forward.1}
  #allocation0 [shape = 'u32[]', space=smem, size = 0x4, offset = 0x4, fixed_abs, tag = 'smem constant byte address 0x4 - core index']
  #allocation1 [shape = 'u32[72,128]{1,0:T(1,128)}', space=vmem, size = 0x9000, scoped, tag = 'internal scratch']
  #allocation2 [shape = 'f32[8,2,96]{2,1,0:T(2,128)}', space=vmem, size = 0x2000, scoped, tag = 'scratch operand']
  #allocation3 [shape = 'f32[8,2,96]{2,1,0:T(2,128)}', space=vmem, size = 0x2000, scoped, tag = 'scratch operand']
  #allocation4 [shape = 'f32[8,2,32]{2,1,0:T(2,128)}', space=vmem, size = 0x2000, scoped, tag = 'scratch operand']
  #allocation5 [shape = 'f32[8,2,32]{2,1,0:T(2,128)}', space=vmem, size = 0x2000, scoped, tag = 'scratch operand']
  %s0 = inlined_call_operand.vmem [shape: f32[6,8,2,32], index: 0, kind: input, shape index: {}]
  %s1 = inlined_call_operand.vmem [shape: f32[2,8], index: 1, kind: input, shape index: {}]
  %s2 = inlined_call_operand.vmem [shape: bf16[32,224], index: 2, kind: input, shape index: {}]
  %s3 = inlined_call_operand.vmem [shape: bf16[32,96], index: 3, kind: input, shape index: {}]
  %s4 = inlined_call_operand.vmem [shape: bf16[32,96], index: 4, kind: input, shape index: {}]
  %s5 = inlined_call_operand.vmem [shape: f32[1,224], index: 5, kind: input, shape index: {}]
  %s6 = inlined_call_operand.vmem [shape: f32[1,32], index: 6, kind: input, shape index: {}]
  %s7 = inlined_call_operand.vmem [shape: f32[1,32], index: 7, kind: input, shape index: {}]
  %s8 = inlined_call_operand.vmem [shape: f32[8,32], index: 8, kind: input, shape index: {}]
  %s9 = inlined_call_operand.vmem [shape: f32[8,32], index: 9, kind: input, shape index: {}]
  %s10 = inlined_call_operand.hbm [shape: f32[2,32], index: 10, kind: output, shape index: {}]
  %s11 = sld [smem:[#allocation0]]
  $region85: #{bert_wrapper_rnn_forward.1} parent=0
    _
  %s13 = ssub.s32 1, %s11
  %s14 = scalar_select 0, %s13, %s11
  $region1: #{bert_wrapper_rnn_forward.1} parent=0
    #allocation6 [shape = 'u8[1024]{0}', space=vmem, size = 0x400, scoped, tag = 'output window, operand 0, single buffered']
    #allocation7 [shape = 's32[1]{0}', space=sflag, size = 0x4, scoped, tag = 'scoped memory for bert_wrapper_rnn_forward.1']
    %15 = vsyncpa [#allocation7], 0
    // Predicated region
    $region2: #{bert_wrapper_rnn_forward.1} parent=1 // pred_check
      _
    $region3: #{bert_wrapper_rnn_forward.1} parent=1 // pred_check_branch
      %17 = sbr.rel (0) target = $region5
    $region4: #{bert_wrapper_rnn_forward.1} parent=1 // pred_region
      _
    $region5: #{bert_wrapper_rnn_forward.1} parent=1 // pred_fallthru
      _
    // Predicated region
    $region6: #{bert_wrapper_rnn_forward.1} parent=1 // pred_check
      _
    $region7: #{bert_wrapper_rnn_forward.1} parent=1 // pred_check_branch
      %19 = sbr.rel (0) target = $region9
    $region8: #{bert_wrapper_rnn_forward.1} parent=1 // pred_region
      _
    $region9: #{bert_wrapper_rnn_forward.1} parent=1 // pred_fallthru
      _
    // Predicated region
    $region10: #{bert_wrapper_rnn_forward.1} parent=1 // pred_check
      _
    $region11: #{bert_wrapper_rnn_forward.1} parent=1 // pred_check_branch
      %21 = sbr.rel (0) target = $region13
    $region12: #{bert_wrapper_rnn_forward.1} parent=1 // pred_region
      _
    $region13: #{bert_wrapper_rnn_forward.1} parent=1 // pred_fallthru
      _
    // Predicated region
    $region14: #{bert_wrapper_rnn_forward.1} parent=1 // pred_check
      _
    $region15: #{bert_wrapper_rnn_forward.1} parent=1 // pred_check_branch
      %23 = sbr.rel (0) target = $region17
    $region16: #{bert_wrapper_rnn_forward.1} parent=1 // pred_region
      _
    $region17: #{bert_wrapper_rnn_forward.1} parent=1 // pred_fallthru
      _
    // Predicated region
    $region18: #{bert_wrapper_rnn_forward.1} parent=1 // pred_check
      _
    $region19: #{bert_wrapper_rnn_forward.1} parent=1 // pred_check_branch
      %25 = sbr.rel (0) target = $region21
    $region20: #{bert_wrapper_rnn_forward.1} parent=1 // pred_region
      _
    $region21: #{bert_wrapper_rnn_forward.1} parent=1 // pred_fallthru
      _
    // Predicated region
    $region22: #{bert_wrapper_rnn_forward.1} parent=1 // pred_check
      _
    $region23: #{bert_wrapper_rnn_forward.1} parent=1 // pred_check_branch
      %27 = sbr.rel (0) target = $region25
    $region24: #{bert_wrapper_rnn_forward.1} parent=1 // pred_region
      _
    $region25: #{bert_wrapper_rnn_forward.1} parent=1 // pred_fallthru
      _
    // Predicated region
    $region26: #{bert_wrapper_rnn_forward.1} parent=1 // pred_check
      _
    $region27: #{bert_wrapper_rnn_forward.1} parent=1 // pred_check_branch
      %29 = sbr.rel (0) target = $region29
    $region28: #{bert_wrapper_rnn_forward.1} parent=1 // pred_region
      _
    $region29: #{bert_wrapper_rnn_forward.1} parent=1 // pred_fallthru
      _
    // Predicated region
    $region30: #{bert_wrapper_rnn_forward.1} parent=1 // pred_check
      _
    $region31: #{bert_wrapper_rnn_forward.1} parent=1 // pred_check_branch
      %31 = sbr.rel (0) target = $region33
    $region32: #{bert_wrapper_rnn_forward.1} parent=1 // pred_region
      _
    $region33: #{bert_wrapper_rnn_forward.1} parent=1 // pred_fallthru
      _
    // Predicated region
    $region34: #{bert_wrapper_rnn_forward.1} parent=1 // pred_check
      _
    $region35: #{bert_wrapper_rnn_forward.1} parent=1 // pred_check_branch
      %33 = sbr.rel (0) target = $region37
    $region36: #{bert_wrapper_rnn_forward.1} parent=1 // pred_region
      _
    $region37: #{bert_wrapper_rnn_forward.1} parent=1 // pred_fallthru
      _
    // Predicated region
    $region38: #{bert_wrapper_rnn_forward.1} parent=1 // pred_check
      _
    $region39: #{bert_wrapper_rnn_forward.1} parent=1 // pred_check_branch
      %35 = sbr.rel (0) target = $region41
    $region40: #{bert_wrapper_rnn_forward.1} parent=1 // pred_region
      _
    $region41: #{bert_wrapper_rnn_forward.1} parent=1 // pred_fallthru
      _
    %v37 = vld [vmem:[%s2] sm:$0xff]
    %v38 = vld [vmem:[%s2 + $0x8] sm:$0xff]
    %v39 = vld [vmem:[%s2 + $0x10] sm:$0xff]
    %v40 = vld [vmem:[%s2 + $0x18] sm:$0xff]
    %v41 = vld [vmem:[%s3] sm:$0xf]
    %v42 = vld [vmem:[%s3 + $0x4] sm:$0xf]
    %v43 = vld [vmem:[%s3 + $0x8] sm:$0xf]
    %v44 = vld [vmem:[%s3 + $0xc] sm:$0xf]
    %v45 = vld [vmem:[%s4] sm:$0xf]
    %v46 = vld [vmem:[%s4 + $0x4] sm:$0xf]
    %v47 = vld [vmem:[%s4 + $0x8] sm:$0xf]
    %v48 = vld [vmem:[%s4 + $0xc] sm:$0xf]
    %v49 = vld [vmem:[%s5] sm:$0x3]
    %v50 = vld [vmem:[%s6] sm:$0x1]
    %v52 = vperm.slane %v50, 0
    %v53 = vld [vmem:[%s7] sm:$0x1]
    %v55 = vperm.slane %v53, 0
    %v56 = vld [vmem:[%s8] sm:$0xff]
    %v58 = vrot.slane %v56, 1
    %v59 = vrot.slane %v56, 2
    %v60 = vrot.slane %v56, 3
    %v61 = vrot.slane %v56, 4
    %v62 = vrot.slane %v56, 5
    %v63 = vrot.slane %v56, 6
    %v64 = vrot.slane %v56, 7
    %v65 = vld [vmem:[%s9] sm:$0xff]
    %v67 = vrot.slane %v65, 1
    %v68 = vrot.slane %v65, 2
    %v69 = vrot.slane %v65, 3
    %v70 = vrot.slane %v65, 4
    %v71 = vrot.slane %v65, 5
    %v72 = vrot.slane %v65, 6
    %v73 = vrot.slane %v65, 7
    %v74 = vld [vmem:[%s0] sm:$0x3]
    %v75 = vld [vmem:[%s0 + $0x2] sm:$0x3]
    %v76 = vld [vmem:[%s0 + $0x4] sm:$0x3]
    %v77 = vld [vmem:[%s0 + $0x6] sm:$0x3]
    %v78 = vld [vmem:[%s0 + $0x8] sm:$0x3]
    %v79 = vld [vmem:[%s0 + $0xa] sm:$0x3]
    %v80 = vld [vmem:[%s0 + $0xc] sm:$0x3]
    %v81 = vld [vmem:[%s0 + $0xe] sm:$0x3]
    %s82 = scalar_lea.vmem %s0, 16
    %v83 = vld [vmem:[%s82] sm:$0x3]
    %v84 = vld [vmem:[%s82 + $0x2] sm:$0x3]
    %v85 = vld [vmem:[%s82 + $0x4] sm:$0x3]
    %v86 = vld [vmem:[%s82 + $0x6] sm:$0x3]
    %v87 = vld [vmem:[%s82 + $0x8] sm:$0x3]
    %v88 = vld [vmem:[%s82 + $0xa] sm:$0x3]
    %v89 = vld [vmem:[%s82 + $0xc] sm:$0x3]
    %v90 = vld [vmem:[%s82 + $0xe] sm:$0x3]
    %v91 = vadd.f32 %v83, %v74
    %v92 = vadd.f32 %v84, %v75
    %v93 = vadd.f32 %v85, %v76
    %v94 = vadd.f32 %v86, %v77
    %v95 = vadd.f32 %v87, %v78
    %v96 = vadd.f32 %v88, %v79
    %v97 = vadd.f32 %v89, %v80
    %v98 = vadd.f32 %v90, %v81
    %107 = vst [vmem:[#allocation1] ss:$4 sm:$0xff] %v91
    %s108 = scalar_lea.vmem [#allocation1], 1
    %109 = vst [vmem:[%s108] ss:$4 sm:$0xff] %v92
    %s110 = scalar_lea.vmem [#allocation1], 2
    %111 = vst [vmem:[%s110] ss:$4 sm:$0xff] %v93
    %s112 = scalar_lea.vmem [#allocation1], 3
    %113 = vst [vmem:[%s112] ss:$4 sm:$0xff] %v94
    %s114 = scalar_lea.vmem [#allocation1], 32
    %115 = vst [vmem:[%s114] ss:$4 sm:$0xff] %v95
    %s116 = scalar_lea.vmem [#allocation1], 33
    %117 = vst [vmem:[%s116] ss:$4 sm:$0xff] %v96
    %s118 = scalar_lea.vmem [#allocation1], 34
    %119 = vst [vmem:[%s118] ss:$4 sm:$0xff] %v97
    %s120 = scalar_lea.vmem [#allocation1], 35
    %121 = vst [vmem:[%s120] ss:$4 sm:$0xff] %v98
    %v122 = vld.sshfl [vmem:[#allocation1] sm:$0xff pattern:$0x73625140]
    %v123 = vld.sshfl [vmem:[#allocation1 + $0x20] sm:$0xff pattern:$0x73625140]
    %v126 = vpack.c.bf16 %v123, %v122
    %v128 = vperm.slane %v49, 0
    %v129 = vperm.slane %v49, 1
    %v136 = vunpack.c.l.b16 %v37
    %v137 = vunpack.c.h.b16 %v37
    %v138 = vunpack.c.l.b16 %v38
    %v139 = vunpack.c.h.b16 %v38
    %v140 = vunpack.c.l.b16 %v39
    %v141 = vunpack.c.h.b16 %v39
    %v142 = vunpack.c.l.b16 %v40
    %v143 = vunpack.c.h.b16 %v40
    %v144 = vpack.c.b16 %v138, %v136
    %v145 = vpack.c.b16 %v139, %v137
    %v146 = vpack.c.b16 %v142, %v140
    %v147 = vpack.c.b16 %v143, %v141
    %vm152 = vcmask 261120
    %v154 = vsel %vm152, %v126, 0
    %156 = vmatpush.bf16.msra.mxu0 0
    %157 = vmatpush.bf16.msra.mxu0 0
    %158 = vmatpush.bf16.msra.mxu0 0
    %159 = vmatpush.bf16.msra.mxu0 0
    %160 = vmatpush.bf16.msra.mxu0 0
    %161 = vmatpush.bf16.msra.mxu0 0
    %162 = vmatpush.bf16.msra.mxu0 %v146
    %163 = vmatpush.bf16.msra.mxu0 %v144
    %164 = vmatmul.bf16.gmra.mxu0 %v154
    %v165 = vpop.f32.mrf.mxu0
    %v166 = vadd.f32 %v128, %v165
    %v167 = vpop.f32.mrf.mxu0
    %v168 = vadd.f32 %v128, %v167
    %169 = vdwg.mxu0
    %170 = vmatpush.bf16.msra.mxu0 0
    %171 = vmatpush.bf16.msra.mxu0 0
    %172 = vmatpush.bf16.msra.mxu0 0
    %173 = vmatpush.bf16.msra.mxu0 0
    %174 = vmatpush.bf16.msra.mxu0 0
    %175 = vmatpush.bf16.msra.mxu0 0
    %176 = vmatpush.bf16.msra.mxu0 %v147
    %177 = vmatpush.bf16.msra.mxu0 %v145
    %178 = vmatmul.bf16.gmra.mxu0 %v154
    %v179 = vpop.f32.mrf.mxu0
    %v180 = vadd.f32 %v129, %v179
    %v181 = vpop.f32.mrf.mxu0
    %v182 = vadd.f32 %v129, %v181
    %183 = vdwg.mxu0
    %v188 = vrot.slane %v180, 6
    %v189 = vrot.slane %v182, 6
    %vm190 = vcmask 1041408
    %v191 = vsel %vm190, %v166, %v188
    %vm192 = vcmask 1043458
    %v193 = vsel %vm192, %v166, %v188
    %v194 = vrot.slane %v193, 2
    %vm195 = vcmask 1045508
    %v196 = vsel %vm195, %v166, %v188
    %v197 = vrot.slane %v196, 4
    %vm198 = vcmask 1045504
    %v199 = vsel %vm198, %v188, %v166
    %v200 = vrot.slane %v199, 6
    %v201 = vsel %vm190, %v168, %v189
    %v202 = vsel %vm192, %v168, %v189
    %v203 = vrot.slane %v202, 2
    %v204 = vsel %vm195, %v168, %v189
    %v205 = vrot.slane %v204, 4
    %v206 = vsel %vm198, %v189, %v168
    %v207 = vrot.slane %v206, 6
    %vm216 = vcmask 779264
    %217 = vst.msk [vmem:[#allocation2] sm:$0x3] %vm216, %v191
    %218 = vst.msk [vmem:[#allocation2 + $0x2] sm:$0x3] %vm216, %v194
    %219 = vst.msk [vmem:[#allocation2 + $0x4] sm:$0x3] %vm216, %v197
    %220 = vst.msk [vmem:[#allocation2 + $0x6] sm:$0x3] %vm216, %v200
    %221 = vst.msk [vmem:[#allocation2 + $0x8] sm:$0x3] %vm216, %v201
    %222 = vst.msk [vmem:[#allocation2 + $0xa] sm:$0x3] %vm216, %v203
    %223 = vst.msk [vmem:[#allocation2 + $0xc] sm:$0x3] %vm216, %v205
    %224 = vst.msk [vmem:[#allocation2 + $0xe] sm:$0x3] %vm216, %v207
    %225 = vst [vmem:[#allocation1] ss:$4 sm:$0xff] %v191
    %v226 = vld.sshfl [vmem:[#allocation1] sm:$0xff pattern:$0x73625140]
    %v227 = vld.sshfl [vmem:[#allocation1 + $0x8] sm:$0xff pattern:$0x73625140]
    %s228 = scalar_lea.vmem [#allocation1], 32
    %229 = vst [vmem:[%s228] ss:$4 sm:$0xff] %v194
    %v230 = vld.sshfl [vmem:[#allocation1 + $0x20] sm:$0xff pattern:$0x73625140]
    %v231 = vld.sshfl [vmem:[#allocation1 + $0x28] sm:$0xff pattern:$0x73625140]
    %232 = vst [vmem:[#allocation1] ss:$4 sm:$0xff] %v197
    %v233 = vld.sshfl [vmem:[#allocation1] sm:$0xff pattern:$0x73625140]
    %v234 = vld.sshfl [vmem:[#allocation1 + $0x8] sm:$0xff pattern:$0x73625140]
    %235 = vst [vmem:[%s228] ss:$4 sm:$0xff] %v200
    %v236 = vld.sshfl [vmem:[#allocation1 + $0x20] sm:$0xff pattern:$0x73625140]
    %v237 = vld.sshfl [vmem:[#allocation1 + $0x28] sm:$0xff pattern:$0x73625140]
    %238 = vst [vmem:[#allocation1] ss:$4 sm:$0xff] %v201
    %v239 = vld.sshfl [vmem:[#allocation1] sm:$0xff pattern:$0x73625140]
    %v240 = vld.sshfl [vmem:[#allocation1 + $0x8] sm:$0xff pattern:$0x73625140]
    %241 = vst [vmem:[%s228] ss:$4 sm:$0xff] %v203
    %v242 = vld.sshfl [vmem:[#allocation1 + $0x20] sm:$0xff pattern:$0x73625140]
    %v243 = vld.sshfl [vmem:[#allocation1 + $0x28] sm:$0xff pattern:$0x73625140]
    %244 = vst [vmem:[#allocation1] ss:$4 sm:$0xff] %v205
    %v245 = vld.sshfl [vmem:[#allocation1] sm:$0xff pattern:$0x73625140]
    %v246 = vld.sshfl [vmem:[#allocation1 + $0x8] sm:$0xff pattern:$0x73625140]
    %247 = vst [vmem:[%s228] ss:$4 sm:$0xff] %v207
    %v248 = vld.sshfl [vmem:[#allocation1 + $0x20] sm:$0xff pattern:$0x73625140]
    %v249 = vld.sshfl [vmem:[#allocation1 + $0x28] sm:$0xff pattern:$0x73625140]
    %250 = vrot.lane.b32.xlu0 %v226, 32
    %v251 = vpop.permute.xlu0 %250
    %252 = vrot.lane.b32.xlu0 %v227, 32
    %v253 = vpop.permute.xlu0 %252
    %254 = vrot.lane.b32.xlu0 %v230, 32
    %v255 = vpop.permute.xlu0 %254
    %256 = vrot.lane.b32.xlu0 %v231, 32
    %v257 = vpop.permute.xlu0 %256
    %258 = vrot.lane.b32.xlu0 %v233, 32
    %v259 = vpop.permute.xlu0 %258
    %260 = vrot.lane.b32.xlu0 %v234, 32
    %v261 = vpop.permute.xlu0 %260
    %262 = vrot.lane.b32.xlu0 %v236, 32
    %v263 = vpop.permute.xlu0 %262
    %264 = vrot.lane.b32.xlu0 %v237, 32
    %v265 = vpop.permute.xlu0 %264
    %266 = vrot.lane.b32.xlu0 %v239, 32
    %v267 = vpop.permute.xlu0 %266
    %268 = vrot.lane.b32.xlu0 %v240, 32
    %v269 = vpop.permute.xlu0 %268
    %270 = vrot.lane.b32.xlu0 %v242, 32
    %v271 = vpop.permute.xlu0 %270
    %272 = vrot.lane.b32.xlu0 %v243, 32
    %v273 = vpop.permute.xlu0 %272
    %274 = vrot.lane.b32.xlu0 %v245, 32
    %v275 = vpop.permute.xlu0 %274
    %276 = vrot.lane.b32.xlu0 %v246, 32
    %v277 = vpop.permute.xlu0 %276
    %278 = vrot.lane.b32.xlu0 %v248, 32
    %v279 = vpop.permute.xlu0 %278
    %280 = vrot.lane.b32.xlu0 %v249, 32
    %v281 = vpop.permute.xlu0 %280
    %v282 = vsel %vm152, %v251, %v253
    %v283 = vsel %vm152, %v255, %v257
    %v284 = vsel %vm152, %v259, %v261
    %v285 = vsel %vm152, %v263, %v265
    %v286 = vsel %vm152, %v267, %v269
    %v287 = vsel %vm152, %v271, %v273
    %v288 = vsel %vm152, %v275, %v277
    %v289 = vsel %vm152, %v279, %v281
    %298 = vst.msk [vmem:[#allocation3] sm:$0x3] %vm216, %v282
    %299 = vst.msk [vmem:[#allocation3 + $0x2] sm:$0x3] %vm216, %v283
    %300 = vst.msk [vmem:[#allocation3 + $0x4] sm:$0x3] %vm216, %v284
    %301 = vst.msk [vmem:[#allocation3 + $0x6] sm:$0x3] %vm216, %v285
    %302 = vst.msk [vmem:[#allocation3 + $0x8] sm:$0x3] %vm216, %v286
    %303 = vst.msk [vmem:[#allocation3 + $0xa] sm:$0x3] %vm216, %v287
    %304 = vst.msk [vmem:[#allocation3 + $0xc] sm:$0x3] %vm216, %v288
    %305 = vst.msk [vmem:[#allocation3 + $0xe] sm:$0x3] %vm216, %v289
    %306 = vrot.lane.b32.xlu0 %v191, 64
    %v307 = vpop.permute.xlu0 %306
    %308 = vrot.lane.b32.xlu0 %v194, 64
    %v309 = vpop.permute.xlu0 %308
    %310 = vrot.lane.b32.xlu0 %v197, 64
    %v311 = vpop.permute.xlu0 %310
    %312 = vrot.lane.b32.xlu0 %v200, 64
    %v313 = vpop.permute.xlu0 %312
    %314 = vrot.lane.b32.xlu0 %v201, 64
    %v315 = vpop.permute.xlu0 %314
    %316 = vrot.lane.b32.xlu0 %v203, 64
    %v317 = vpop.permute.xlu0 %316
    %318 = vrot.lane.b32.xlu0 %v205, 64
    %v319 = vpop.permute.xlu0 %318
    %320 = vrot.lane.b32.xlu0 %v207, 64
    %v321 = vpop.permute.xlu0 %320
    %v322 = vrot.slane %v307, 2
    %v323 = vrot.slane %v309, 2
    %v324 = vrot.slane %v311, 2
    %v325 = vrot.slane %v313, 2
    %v326 = vrot.slane %v315, 2
    %v327 = vrot.slane %v317, 2
    %v328 = vrot.slane %v319, 2
    %v329 = vrot.slane %v321, 2
    %v338 = vtanh.pop %v322
    %v339 = vtanh.pop %v323
    %v340 = vtanh.pop %v324
    %v341 = vtanh.pop %v325
    %v342 = vtanh.pop %v326
    %v343 = vtanh.pop %v327
    %v344 = vtanh.pop %v328
    %v345 = vtanh.pop %v329
    loop: start=0, step=1, limit=8
    $region42: #{bert_wrapper_rnn_forward.1} parent=1 // loop_pre_header
      _
    $region43: #{bert_wrapper_rnn_forward.1} parent=1 // loop_header
      %s347 = sphi 0, %s351
      %p348 = scmp.ge.s32.totalorder %s347, 8
      %v352 = vphi 0.0, %v467
      %v353 = vphi 0.0, %v510
    $region44: #{bert_wrapper_rnn_forward.1} parent=1 // loop_header_branch
      %350 = sbr.rel (%p348) target = $region48
    $region45: #{bert_wrapper_rnn_forward.1} parent=1 // loop_body
      %s354 = ssub.s32 7, %s347
      %s355 = smul.u32 %s347, 2
      %s356 = scalar_lea.vmem [#allocation2], %s355
      %v357 = vld [vmem:[%s356] sm:$0x3]
      %s358 = smul.u32 %s354, 2
      %s359 = scalar_lea.vmem [#allocation3], %s358
      %v360 = vld [vmem:[%s359] sm:$0x3]
      %v361 = vpack.c.bf16 %v352, %v352
      %363 = vrot.lane.b32.xlu0 %v361, 96
      %v364 = vpop.permute.xlu0 %363
      %v369 = vunpack.c.l.b16 %v41
      %v370 = vunpack.c.l.b16 %v42
      %v371 = vunpack.c.l.b16 %v43
      %v372 = vunpack.c.l.b16 %v44
      %v373 = vpack.c.b16 %v370, %v369
      %v374 = vpack.c.b16 %v372, %v371
      %v378 = vsel %vm152, %v364, 0
      %380 = vmatpush.bf16.msra.mxu0 0
      %381 = vmatpush.bf16.msra.mxu0 0
      %382 = vmatpush.bf16.msra.mxu0 0
      %383 = vmatpush.bf16.msra.mxu0 0
      %384 = vmatpush.bf16.msra.mxu0 0
      %385 = vmatpush.bf16.msra.mxu0 0
      %386 = vmatpush.bf16.msra.mxu0 %v374
      %387 = vmatpush.bf16.msra.mxu0 %v373
      %388 = vmatmul.bf16.gmra.mxu0 %v378
      %v389 = vpop.f32.mrf.mxu0
      %v390 = vadd.f32 0.0, %v389
      %v391 = vpop.f32.mrf.mxu0
      %392 = vdwg.mxu0
      %v393 = vpack.c.bf16 %v353, %v353
      %395 = vrot.lane.b32.xlu0 %v393, 96
      %v396 = vpop.permute.xlu0 %395
      %v401 = vunpack.c.l.b16 %v45
      %v402 = vunpack.c.l.b16 %v46
      %v403 = vunpack.c.l.b16 %v47
      %v404 = vunpack.c.l.b16 %v48
      %v405 = vpack.c.b16 %v402, %v401
      %v406 = vpack.c.b16 %v404, %v403
      %v410 = vsel %vm152, %v396, 0
      %412 = vmatpush.bf16.msra.mxu0 0
      %413 = vmatpush.bf16.msra.mxu0 0
      %414 = vmatpush.bf16.msra.mxu0 0
      %415 = vmatpush.bf16.msra.mxu0 0
      %416 = vmatpush.bf16.msra.mxu0 0
      %417 = vmatpush.bf16.msra.mxu0 0
      %418 = vmatpush.bf16.msra.mxu0 %v406
      %419 = vmatpush.bf16.msra.mxu0 %v405
      %420 = vmatmul.bf16.gmra.mxu0 %v410
      %v421 = vpop.f32.mrf.mxu0
      %v422 = vadd.f32 0.0, %v421
      %v423 = vpop.f32.mrf.mxu0
      %424 = vdwg.mxu0
      %v425 = vadd.f32 %v357, %v390
      %v426 = vxor.u32 %v425, 2147483648
      %v427 = vmul.f32 %v426, 1.442695
      %v428 = vpow.pop %v427
      %v429 = vadd.f32 %v428, 1.0
      %v430 = vrcp.pop %v429
      %v431 = vmul.f32 %v429, %v430
      %v432 = vsub.f32 1.0, %v431
      %v433 = vmul.f32 %v430, %v432
      %v434 = vadd.f32 %v430, %v433
      %vm435 = vweird.f32 %v429
      %vm436 = vweird.f32 %v430
      %vm437 = vmor %vm435, %vm436
      %v438 = vsel %vm437, %v430, %v434
      %v439 = vand.u32 2147483647, %v429
      %vm440 = vcmp.eq.f32.partialorder %v439, 8.507059e+37
      %v441 = vand.u32 %v429, 2147483648
      %v442 = vor.u32 1.1754944e-38, %v441
      %v443 = vsel %vm440, %v442, %v438
      %v444 = vmul.f32 1.0, %v443
      %445 = vrot.lane.b32.xlu0 %v52, 64
      %v446 = vpop.permute.xlu0 %445
      %v448 = vadd.f32 %v390, %v446
      %450 = vrot.lane.b32.xlu0 %v448, 64
      %v451 = vpop.permute.xlu0 %450
      %v453 = vmul.f32 %v444, %v451
      %455 = vrot.lane.b32.xlu0 %v453, 64
      %v456 = vpop.permute.xlu0 %455
      %v458 = vadd.f32 %v357, %v456
      %v459 = vtanh.pop %v458
      %v460 = vsub.f32 1.0, %v444
      %462 = vrot.lane.b32.xlu0 %v459, 96
      %v463 = vpop.permute.xlu0 %462
      %v465 = vmul.f32 %v460, %v463
      %v466 = vmul.f32 %v444, %v352
      %v467 = vadd.f32 %v465, %v466
      %v468 = vadd.f32 %v360, %v422
      %v469 = vxor.u32 %v468, 2147483648
      %v470 = vmul.f32 %v469, 1.442695
      %v471 = vpow.pop %v470
      %v472 = vadd.f32 %v471, 1.0
      %v473 = vrcp.pop %v472
      %v474 = vmul.f32 %v472, %v473
      %v475 = vsub.f32 1.0, %v474
      %v476 = vmul.f32 %v473, %v475
      %v477 = vadd.f32 %v473, %v476
      %vm478 = vweird.f32 %v472
      %vm479 = vweird.f32 %v473
      %vm480 = vmor %vm478, %vm479
      %v481 = vsel %vm480, %v473, %v477
      %v482 = vand.u32 2147483647, %v472
      %vm483 = vcmp.eq.f32.partialorder %v482, 8.507059e+37
      %v484 = vand.u32 %v472, 2147483648
      %v485 = vor.u32 1.1754944e-38, %v484
      %v486 = vsel %vm483, %v485, %v481
      %v487 = vmul.f32 1.0, %v486
      %488 = vrot.lane.b32.xlu0 %v55, 64
      %v489 = vpop.permute.xlu0 %488
      %v491 = vadd.f32 %v422, %v489
      %493 = vrot.lane.b32.xlu0 %v491, 64
      %v494 = vpop.permute.xlu0 %493
      %v496 = vmul.f32 %v487, %v494
      %498 = vrot.lane.b32.xlu0 %v496, 64
      %v499 = vpop.permute.xlu0 %498
      %v501 = vadd.f32 %v360, %v499
      %v502 = vtanh.pop %v501
      %v503 = vsub.f32 1.0, %v487
      %505 = vrot.lane.b32.xlu0 %v502, 96
      %v506 = vpop.permute.xlu0 %505
      %v508 = vmul.f32 %v503, %v506
      %v509 = vmul.f32 %v487, %v353
      %v510 = vadd.f32 %v508, %v509
      %512 = vrot.lane.b32.xlu0 %v467, 96
      %v513 = vpop.permute.xlu0 %512
      %s515 = scalar_lea.vmem [#allocation4], %s355
      %vm516 = vcmask 254976
      %517 = vst.msk [vmem:[%s515] sm:$0x3] %vm516, %v513
      %519 = vrot.lane.b32.xlu0 %v510, 96
      %v520 = vpop.permute.xlu0 %519
      %s522 = scalar_lea.vmem [#allocation5], %s358
      %523 = vst.msk [vmem:[%s522] sm:$0x3] %vm516, %v520
    $region46: #{bert_wrapper_rnn_forward.1} parent=1 // loop_footer
      %s351 = sadd.s32 1, %s347
    $region47: #{bert_wrapper_rnn_forward.1} parent=1 // loop_footer_branch
      %346 = sbr.rel target = $region43
    $region48: #{bert_wrapper_rnn_forward.1} parent=1 // loop_exit
      _
    %v524 = vld [vmem:[#allocation4] sm:$0x3]
    %v525 = vld [vmem:[#allocation4 + $0x2] sm:$0x3]
    %v526 = vld [vmem:[#allocation4 + $0x4] sm:$0x3]
    %v527 = vld [vmem:[#allocation4 + $0x6] sm:$0x3]
    %v528 = vld [vmem:[#allocation4 + $0x8] sm:$0x3]
    %v529 = vld [vmem:[#allocation4 + $0xa] sm:$0x3]
    %v530 = vld [vmem:[#allocation4 + $0xc] sm:$0x3]
    %v531 = vld [vmem:[#allocation4 + $0xe] sm:$0x3]
    %v532 = vld [vmem:[#allocation5] sm:$0x3]
    %v533 = vld [vmem:[#allocation5 + $0x2] sm:$0x3]
    %v534 = vld [vmem:[#allocation5 + $0x4] sm:$0x3]
    %v535 = vld [vmem:[#allocation5 + $0x6] sm:$0x3]
    %v536 = vld [vmem:[#allocation5 + $0x8] sm:$0x3]
    %v537 = vld [vmem:[#allocation5 + $0xa] sm:$0x3]
    %v538 = vld [vmem:[#allocation5 + $0xc] sm:$0x3]
    %v539 = vld [vmem:[#allocation5 + $0xe] sm:$0x3]
    %v540 = vadd.f32 %v524, %v532
    %v541 = vadd.f32 %v525, %v533
    %v542 = vadd.f32 %v526, %v534
    %v543 = vadd.f32 %v527, %v535
    %v544 = vadd.f32 %v528, %v536
    %v545 = vadd.f32 %v529, %v537
    %v546 = vadd.f32 %v530, %v538
    %v547 = vadd.f32 %v531, %v539
    %v548 = vtanh.pop %v540
    %v549 = vtanh.pop %v541
    %v550 = vtanh.pop %v542
    %v551 = vtanh.pop %v543
    %v552 = vtanh.pop %v544
    %v553 = vtanh.pop %v545
    %v554 = vtanh.pop %v546
    %v555 = vtanh.pop %v547
    %v556 = vadd.f32 %v83, %v338
    %v557 = vadd.f32 %v84, %v339
    %v558 = vadd.f32 %v85, %v340
    %v559 = vadd.f32 %v86, %v341
    %v560 = vadd.f32 %v87, %v342
    %v561 = vadd.f32 %v88, %v343
    %v562 = vadd.f32 %v89, %v344
    %v563 = vadd.f32 %v90, %v345
    %v564 = vadd.f32 %v556, %v548
    %v565 = vadd.f32 %v557, %v549
    %v566 = vadd.f32 %v558, %v550
    %v567 = vadd.f32 %v559, %v551
    %v568 = vadd.f32 %v560, %v552
    %v569 = vadd.f32 %v561, %v553
    %v570 = vadd.f32 %v562, %v554
    %v571 = vadd.f32 %v563, %v555
    %v572 = vtanh.pop %v74
    %v573 = vtanh.pop %v75
    %v574 = vtanh.pop %v76
    %v575 = vtanh.pop %v77
    %v576 = vtanh.pop %v78
    %v577 = vtanh.pop %v79
    %v578 = vtanh.pop %v80
    %v579 = vtanh.pop %v81
    %v580 = vadd.f32 %v564, %v572
    %v581 = vadd.f32 %v565, %v573
    %v582 = vadd.f32 %v566, %v574
    %v583 = vadd.f32 %v567, %v575
    %v584 = vadd.f32 %v568, %v576
    %v585 = vadd.f32 %v569, %v577
    %v586 = vadd.f32 %v570, %v578
    %v587 = vadd.f32 %v571, %v579
    %vm588 = vcmask 254976
    %v589 = vsel %vm588, %v580, 0.0
    %v590 = vsel %vm588, %v581, 0.0
    %v591 = vadd.f32 %v589, %v590
    %v592 = vsel %vm588, %v582, 0.0
    %v593 = vadd.f32 %v591, %v592
    %v594 = vsel %vm588, %v583, 0.0
    %v595 = vadd.f32 %v593, %v594
    %v596 = vsel %vm588, %v584, 0.0
    %v597 = vadd.f32 %v595, %v596
    %v598 = vsel %vm588, %v585, 0.0
    %v599 = vadd.f32 %v597, %v598
    %v600 = vsel %vm588, %v586, 0.0
    %v601 = vadd.f32 %v599, %v600
    %v602 = vsel %vm588, %v587, 0.0
    %v603 = vadd.f32 %v601, %v602
    %604 = vadd.xlane.f32.xlu0 %v603
    %v605 = vpop.xlane.xlu0 %604
    %v606 = vrcp.pop 256.0
    %v607 = vmul.f32 256.0, %v606
    %v608 = vsub.f32 1.0, %v607
    %v609 = vmul.f32 %v606, %v608
    %v610 = vadd.f32 %v606, %v609
    %vm611 = vweird.f32 %v606
    %v612 = vsel %vm611, %v606, %v610
    %v613 = vmul.f32 %v605, %v612
    %v614 = vsub.f32 %v580, %v613
    %v615 = vsub.f32 %v581, %v613
    %v616 = vsub.f32 %v582, %v613
    %v617 = vsub.f32 %v583, %v613
    %v618 = vsub.f32 %v584, %v613
    %v619 = vsub.f32 %v585, %v613
    %v620 = vsub.f32 %v586, %v613
    %v621 = vsub.f32 %v587, %v613
    %v622 = vmul.f32 %v614, %v614
    %v623 = vmul.f32 %v615, %v615
    %v624 = vmul.f32 %v616, %v616
    %v625 = vmul.f32 %v617, %v617
    %v626 = vmul.f32 %v618, %v618
    %v627 = vmul.f32 %v619, %v619
    %v628 = vmul.f32 %v620, %v620
    %v629 = vmul.f32 %v621, %v621
    %v630 = vsel %vm588, %v622, 0.0
    %v631 = vsel %vm588, %v623, 0.0
    %v632 = vadd.f32 %v630, %v631
    %v633 = vsel %vm588, %v624, 0.0
    %v634 = vadd.f32 %v632, %v633
    %v635 = vsel %vm588, %v625, 0.0
    %v636 = vadd.f32 %v634, %v635
    %v637 = vsel %vm588, %v626, 0.0
    %v638 = vadd.f32 %v636, %v637
    %v639 = vsel %vm588, %v627, 0.0
    %v640 = vadd.f32 %v638, %v639
    %v641 = vsel %vm588, %v628, 0.0
    %v642 = vadd.f32 %v640, %v641
    %v643 = vsel %vm588, %v629, 0.0
    %v644 = vadd.f32 %v642, %v643
    %645 = vadd.xlane.f32.xlu0 %v644
    %v646 = vpop.xlane.xlu0 %645
    %v647 = vmul.f32 %v646, %v612
    %v648 = vadd.f32 %v647, 1e-12
    %v649 = vrsqrt.pop %v648
    %v650 = vmul.f32 %v649, %v648
    %v651 = vmul.f32 %v650, %v649
    %v652 = vmul.f32 0.5, %v651
    %v653 = vsub.f32 1.5, %v652
    %v654 = vmul.f32 %v649, %v653
    %vm655 = vweird.f32 %v648
    %vm656 = vweird.f32 %v649
    %vm657 = vmor %vm655, %vm656
    %v658 = vsel %vm657, %v649, %v654
    %v659 = vmul.f32 %v614, %v658
    %v660 = vmul.f32 %v615, %v658
    %v661 = vmul.f32 %v616, %v658
    %v662 = vmul.f32 %v617, %v658
    %v663 = vmul.f32 %v618, %v658
    %v664 = vmul.f32 %v619, %v658
    %v665 = vmul.f32 %v620, %v658
    %v666 = vmul.f32 %v621, %v658
    %v667 = vperm.slane %v56, 0
    %v668 = vperm.slane %v58, 0
    %v669 = vperm.slane %v59, 0
    %v670 = vperm.slane %v60, 0
    %v671 = vperm.slane %v61, 0
    %v672 = vperm.slane %v62, 0
    %v673 = vperm.slane %v63, 0
    %v674 = vperm.slane %v64, 0
    %v683 = vmul.f32 %v659, %v667
    %v684 = vmul.f32 %v660, %v668
    %v685 = vmul.f32 %v661, %v669
    %v686 = vmul.f32 %v662, %v670
    %v687 = vmul.f32 %v663, %v671
    %v688 = vmul.f32 %v664, %v672
    %v689 = vmul.f32 %v665, %v673
    %v690 = vmul.f32 %v666, %v674
    %v691 = vperm.slane %v65, 0
    %v692 = vperm.slane %v67, 0
    %v693 = vperm.slane %v68, 0
    %v694 = vperm.slane %v69, 0
    %v695 = vperm.slane %v70, 0
    %v696 = vperm.slane %v71, 0
    %v697 = vperm.slane %v72, 0
    %v698 = vperm.slane %v73, 0
    %v707 = vadd.f32 %v683, %v691
    %v708 = vadd.f32 %v684, %v692
    %v709 = vadd.f32 %v685, %v693
    %v710 = vadd.f32 %v686, %v694
    %v711 = vadd.f32 %v687, %v695
    %v712 = vadd.f32 %v688, %v696
    %v713 = vadd.f32 %v689, %v697
    %v714 = vadd.f32 %v690, %v698
    %s715 = scalar_lea.vmem %s0, 32
    %v716 = vld [vmem:[%s715] sm:$0x3]
    %v717 = vld [vmem:[%s715 + $0x2] sm:$0x3]
    %v718 = vld [vmem:[%s715 + $0x4] sm:$0x3]
    %v719 = vld [vmem:[%s715 + $0x6] sm:$0x3]
    %v720 = vld [vmem:[%s715 + $0x8] sm:$0x3]
    %v721 = vld [vmem:[%s715 + $0xa] sm:$0x3]
    %v722 = vld [vmem:[%s715 + $0xc] sm:$0x3]
    %v723 = vld [vmem:[%s715 + $0xe] sm:$0x3]
    %v724 = vadd.f32 %v716, %v707
    %v725 = vadd.f32 %v717, %v708
    %v726 = vadd.f32 %v718, %v709
    %v727 = vadd.f32 %v719, %v710
    %v728 = vadd.f32 %v720, %v711
    %v729 = vadd.f32 %v721, %v712
    %v730 = vadd.f32 %v722, %v713
    %v731 = vadd.f32 %v723, %v714
    %740 = vst [vmem:[#allocation1] ss:$4 sm:$0xff] %v724
    %s741 = scalar_lea.vmem [#allocation1], 1
    %742 = vst [vmem:[%s741] ss:$4 sm:$0xff] %v725
    %s743 = scalar_lea.vmem [#allocation1], 2
    %744 = vst [vmem:[%s743] ss:$4 sm:$0xff] %v726
    %s745 = scalar_lea.vmem [#allocation1], 3
    %746 = vst [vmem:[%s745] ss:$4 sm:$0xff] %v727
    %s747 = scalar_lea.vmem [#allocation1], 32
    %748 = vst [vmem:[%s747] ss:$4 sm:$0xff] %v728
    %s749 = scalar_lea.vmem [#allocation1], 33
    %750 = vst [vmem:[%s749] ss:$4 sm:$0xff] %v729
    %s751 = scalar_lea.vmem [#allocation1], 34
    %752 = vst [vmem:[%s751] ss:$4 sm:$0xff] %v730
    %s753 = scalar_lea.vmem [#allocation1], 35
    %754 = vst [vmem:[%s753] ss:$4 sm:$0xff] %v731
    %v755 = vld.sshfl [vmem:[#allocation1] sm:$0xff pattern:$0x73625140]
    %v756 = vld.sshfl [vmem:[#allocation1 + $0x20] sm:$0xff pattern:$0x73625140]
    %v759 = vpack.c.bf16 %v756, %v755
    %v761 = vsel %vm152, %v759, 0
    %763 = vmatpush.bf16.msra.mxu0 0
    %764 = vmatpush.bf16.msra.mxu0 0
    %765 = vmatpush.bf16.msra.mxu0 0
    %766 = vmatpush.bf16.msra.mxu0 0
    %767 = vmatpush.bf16.msra.mxu0 0
    %768 = vmatpush.bf16.msra.mxu0 0
    %769 = vmatpush.bf16.msra.mxu0 %v146
    %770 = vmatpush.bf16.msra.mxu0 %v144
    %771 = vmatmul.bf16.gmra.mxu0 %v761
    %v772 = vpop.f32.mrf.mxu0
    %v773 = vadd.f32 %v128, %v772
    %v774 = vpop.f32.mrf.mxu0
    %v775 = vadd.f32 %v128, %v774
    %776 = vdwg.mxu0
    %777 = vmatpush.bf16.msra.mxu0 0
    %778 = vmatpush.bf16.msra.mxu0 0
    %779 = vmatpush.bf16.msra.mxu0 0
    %780 = vmatpush.bf16.msra.mxu0 0
    %781 = vmatpush.bf16.msra.mxu0 0
    %782 = vmatpush.bf16.msra.mxu0 0
    %783 = vmatpush.bf16.msra.mxu0 %v147
    %784 = vmatpush.bf16.msra.mxu0 %v145
    %785 = vmatmul.bf16.gmra.mxu0 %v761
    %v786 = vpop.f32.mrf.mxu0
    %v787 = vadd.f32 %v129, %v786
    %v788 = vpop.f32.mrf.mxu0
    %v789 = vadd.f32 %v129, %v788
    %790 = vdwg.mxu0
    %v795 = vrot.slane %v787, 6
    %v796 = vrot.slane %v789, 6
    %v797 = vsel %vm190, %v773, %v795
    %v798 = vsel %vm192, %v773, %v795
    %v799 = vrot.slane %v798, 2
    %v800 = vsel %vm195, %v773, %v795
    %v801 = vrot.slane %v800, 4
    %v802 = vsel %vm198, %v795, %v773
    %v803 = vrot.slane %v802, 6
    %v804 = vsel %vm190, %v775, %v796
    %v805 = vsel %vm192, %v775, %v796
    %v806 = vrot.slane %v805, 2
    %v807 = vsel %vm195, %v775, %v796
    %v808 = vrot.slane %v807, 4
    %v809 = vsel %vm198, %v796, %v775
    %v810 = vrot.slane %v809, 6
    %819 = vst.msk [vmem:[#allocation2] sm:$0x3] %vm216, %v797
    %820 = vst.msk [vmem:[#allocation2 + $0x2] sm:$0x3] %vm216, %v799
    %821 = vst.msk [vmem:[#allocation2 + $0x4] sm:$0x3] %vm216, %v801
    %822 = vst.msk [vmem:[#allocation2 + $0x6] sm:$0x3] %vm216, %v803
    %823 = vst.msk [vmem:[#allocation2 + $0x8] sm:$0x3] %vm216, %v804
    %824 = vst.msk [vmem:[#allocation2 + $0xa] sm:$0x3] %vm216, %v806
    %825 = vst.msk [vmem:[#allocation2 + $0xc] sm:$0x3] %vm216, %v808
    %826 = vst.msk [vmem:[#allocation2 + $0xe] sm:$0x3] %vm216, %v810
    %827 = vst [vmem:[#allocation1] ss:$4 sm:$0xff] %v797
    %v828 = vld.sshfl [vmem:[#allocation1] sm:$0xff pattern:$0x73625140]
    %v829 = vld.sshfl [vmem:[#allocation1 + $0x8] sm:$0xff pattern:$0x73625140]
    %s830 = scalar_lea.vmem [#allocation1], 32
    %831 = vst [vmem:[%s830] ss:$4 sm:$0xff] %v799
    %v832 = vld.sshfl [vmem:[#allocation1 + $0x20] sm:$0xff pattern:$0x73625140]
    %v833 = vld.sshfl [vmem:[#allocation1 + $0x28] sm:$0xff pattern:$0x73625140]
    %834 = vst [vmem:[#allocation1] ss:$4 sm:$0xff] %v801
    %v835 = vld.sshfl [vmem:[#allocation1] sm:$0xff pattern:$0x73625140]
    %v836 = vld.sshfl [vmem:[#allocation1 + $0x8] sm:$0xff pattern:$0x73625140]
    %837 = vst [vmem:[%s830] ss:$4 sm:$0xff] %v803
    %v838 = vld.sshfl [vmem:[#allocation1 + $0x20] sm:$0xff pattern:$0x73625140]
    %v839 = vld.sshfl [vmem:[#allocation1 + $0x28] sm:$0xff pattern:$0x73625140]
    %840 = vst [vmem:[#allocation1] ss:$4 sm:$0xff] %v804
    %v841 = vld.sshfl [vmem:[#allocation1] sm:$0xff pattern:$0x73625140]
    %v842 = vld.sshfl [vmem:[#allocation1 + $0x8] sm:$0xff pattern:$0x73625140]
    %843 = vst [vmem:[%s830] ss:$4 sm:$0xff] %v806
    %v844 = vld.sshfl [vmem:[#allocation1 + $0x20] sm:$0xff pattern:$0x73625140]
    %v845 = vld.sshfl [vmem:[#allocation1 + $0x28] sm:$0xff pattern:$0x73625140]
    %846 = vst [vmem:[#allocation1] ss:$4 sm:$0xff] %v808
    %v847 = vld.sshfl [vmem:[#allocation1] sm:$0xff pattern:$0x73625140]
    %v848 = vld.sshfl [vmem:[#allocation1 + $0x8] sm:$0xff pattern:$0x73625140]
    %849 = vst [vmem:[%s830] ss:$4 sm:$0xff] %v810
    %v850 = vld.sshfl [vmem:[#allocation1 + $0x20] sm:$0xff pattern:$0x73625140]
    %v851 = vld.sshfl [vmem:[#allocation1 + $0x28] sm:$0xff pattern:$0x73625140]
    %852 = vrot.lane.b32.xlu0 %v828, 32
    %v853 = vpop.permute.xlu0 %852
    %854 = vrot.lane.b32.xlu0 %v829, 32
    %v855 = vpop.permute.xlu0 %854
    %856 = vrot.lane.b32.xlu0 %v832, 32
    %v857 = vpop.permute.xlu0 %856
    %858 = vrot.lane.b32.xlu0 %v833, 32
    %v859 = vpop.permute.xlu0 %858
    %860 = vrot.lane.b32.xlu0 %v835, 32
    %v861 = vpop.permute.xlu0 %860
    %862 = vrot.lane.b32.xlu0 %v836, 32
    %v863 = vpop.permute.xlu0 %862
    %864 = vrot.lane.b32.xlu0 %v838, 32
    %v865 = vpop.permute.xlu0 %864
    %866 = vrot.lane.b32.xlu0 %v839, 32
    %v867 = vpop.permute.xlu0 %866
    %868 = vrot.lane.b32.xlu0 %v841, 32
    %v869 = vpop.permute.xlu0 %868
    %870 = vrot.lane.b32.xlu0 %v842, 32
    %v871 = vpop.permute.xlu0 %870
    %872 = vrot.lane.b32.xlu0 %v844, 32
    %v873 = vpop.permute.xlu0 %872
    %874 = vrot.lane.b32.xlu0 %v845, 32
    %v875 = vpop.permute.xlu0 %874
    %876 = vrot.lane.b32.xlu0 %v847, 32
    %v877 = vpop.permute.xlu0 %876
    %878 = vrot.lane.b32.xlu0 %v848, 32
    %v879 = vpop.permute.xlu0 %878
    %880 = vrot.lane.b32.xlu0 %v850, 32
    %v881 = vpop.permute.xlu0 %880
    %882 = vrot.lane.b32.xlu0 %v851, 32
    %v883 = vpop.permute.xlu0 %882
    %v884 = vsel %vm152, %v853, %v855
    %v885 = vsel %vm152, %v857, %v859
    %v886 = vsel %vm152, %v861, %v863
    %v887 = vsel %vm152, %v865, %v867
    %v888 = vsel %vm152, %v869, %v871
    %v889 = vsel %vm152, %v873, %v875
    %v890 = vsel %vm152, %v877, %v879
    %v891 = vsel %vm152, %v881, %v883
    %900 = vst.msk [vmem:[#allocation3] sm:$0x3] %vm216, %v884
    %901 = vst.msk [vmem:[#allocation3 + $0x2] sm:$0x3] %vm216, %v885
    %902 = vst.msk [vmem:[#allocation3 + $0x4] sm:$0x3] %vm216, %v886
    %903 = vst.msk [vmem:[#allocation3 + $0x6] sm:$0x3] %vm216, %v887
    %904 = vst.msk [vmem:[#allocation3 + $0x8] sm:$0x3] %vm216, %v888
    %905 = vst.msk [vmem:[#allocation3 + $0xa] sm:$0x3] %vm216, %v889
    %906 = vst.msk [vmem:[#allocation3 + $0xc] sm:$0x3] %vm216, %v890
    %907 = vst.msk [vmem:[#allocation3 + $0xe] sm:$0x3] %vm216, %v891
    %908 = vrot.lane.b32.xlu0 %v797, 64
    %v909 = vpop.permute.xlu0 %908
    %910 = vrot.lane.b32.xlu0 %v799, 64
    %v911 = vpop.permute.xlu0 %910
    %912 = vrot.lane.b32.xlu0 %v801, 64
    %v913 = vpop.permute.xlu0 %912
    %914 = vrot.lane.b32.xlu0 %v803, 64
    %v915 = vpop.permute.xlu0 %914
    %916 = vrot.lane.b32.xlu0 %v804, 64
    %v917 = vpop.permute.xlu0 %916
    %918 = vrot.lane.b32.xlu0 %v806, 64
    %v919 = vpop.permute.xlu0 %918
    %920 = vrot.lane.b32.xlu0 %v808, 64
    %v921 = vpop.permute.xlu0 %920
    %922 = vrot.lane.b32.xlu0 %v810, 64
    %v923 = vpop.permute.xlu0 %922
    %v924 = vrot.slane %v909, 2
    %v925 = vrot.slane %v911, 2
    %v926 = vrot.slane %v913, 2
    %v927 = vrot.slane %v915, 2
    %v928 = vrot.slane %v917, 2
    %v929 = vrot.slane %v919, 2
    %v930 = vrot.slane %v921, 2
    %v931 = vrot.slane %v923, 2
    %v940 = vtanh.pop %v924
    %v941 = vtanh.pop %v925
    %v942 = vtanh.pop %v926
    %v943 = vtanh.pop %v927
    %v944 = vtanh.pop %v928
    %v945 = vtanh.pop %v929
    %v946 = vtanh.pop %v930
    %v947 = vtanh.pop %v931
    loop: start=0, step=1, limit=8
    $region49: #{bert_wrapper_rnn_forward.1} parent=1 // loop_pre_header
      _
    $region50: #{bert_wrapper_rnn_forward.1} parent=1 // loop_header
      %s949 = sphi 0, %s953
      %p950 = scmp.ge.s32.totalorder %s949, 8
      %v954 = vphi 0.0, %v1069
      %v955 = vphi 0.0, %v1112
    $region51: #{bert_wrapper_rnn_forward.1} parent=1 // loop_header_branch
      %952 = sbr.rel (%p950) target = $region55
    $region52: #{bert_wrapper_rnn_forward.1} parent=1 // loop_body
      %s956 = ssub.s32 7, %s949
      %s957 = smul.u32 %s949, 2
      %s958 = scalar_lea.vmem [#allocation2], %s957
      %v959 = vld [vmem:[%s958] sm:$0x3]
      %s960 = smul.u32 %s956, 2
      %s961 = scalar_lea.vmem [#allocation3], %s960
      %v962 = vld [vmem:[%s961] sm:$0x3]
      %v963 = vpack.c.bf16 %v954, %v954
      %965 = vrot.lane.b32.xlu0 %v963, 96
      %v966 = vpop.permute.xlu0 %965
      %v971 = vunpack.c.l.b16 %v41
      %v972 = vunpack.c.l.b16 %v42
      %v973 = vunpack.c.l.b16 %v43
      %v974 = vunpack.c.l.b16 %v44
      %v975 = vpack.c.b16 %v972, %v971
      %v976 = vpack.c.b16 %v974, %v973
      %v980 = vsel %vm152, %v966, 0
      %982 = vmatpush.bf16.msra.mxu0 0
      %983 = vmatpush.bf16.msra.mxu0 0
      %984 = vmatpush.bf16.msra.mxu0 0
      %985 = vmatpush.bf16.msra.mxu0 0
      %986 = vmatpush.bf16.msra.mxu0 0
      %987 = vmatpush.bf16.msra.mxu0 0
      %988 = vmatpush.bf16.msra.mxu0 %v976
      %989 = vmatpush.bf16.msra.mxu0 %v975
      %990 = vmatmul.bf16.gmra.mxu0 %v980
      %v991 = vpop.f32.mrf.mxu0
      %v992 = vadd.f32 0.0, %v991
      %v993 = vpop.f32.mrf.mxu0
      %994 = vdwg.mxu0
      %v995 = vpack.c.bf16 %v955, %v955
      %997 = vrot.lane.b32.xlu0 %v995, 96
      %v998 = vpop.permute.xlu0 %997
      %v1003 = vunpack.c.l.b16 %v45
      %v1004 = vunpack.c.l.b16 %v46
      %v1005 = vunpack.c.l.b16 %v47
      %v1006 = vunpack.c.l.b16 %v48
      %v1007 = vpack.c.b16 %v1004, %v1003
      %v1008 = vpack.c.b16 %v1006, %v1005
      %v1012 = vsel %vm152, %v998, 0
      %1014 = vmatpush.bf16.msra.mxu0 0
      %1015 = vmatpush.bf16.msra.mxu0 0
      %1016 = vmatpush.bf16.msra.mxu0 0
      %1017 = vmatpush.bf16.msra.mxu0 0
      %1018 = vmatpush.bf16.msra.mxu0 0
      %1019 = vmatpush.bf16.msra.mxu0 0
      %1020 = vmatpush.bf16.msra.mxu0 %v1008
      %1021 = vmatpush.bf16.msra.mxu0 %v1007
      %1022 = vmatmul.bf16.gmra.mxu0 %v1012
      %v1023 = vpop.f32.mrf.mxu0
      %v1024 = vadd.f32 0.0, %v1023
      %v1025 = vpop.f32.mrf.mxu0
      %1026 = vdwg.mxu0
      %v1027 = vadd.f32 %v959, %v992
      %v1028 = vxor.u32 %v1027, 2147483648
      %v1029 = vmul.f32 %v1028, 1.442695
      %v1030 = vpow.pop %v1029
      %v1031 = vadd.f32 %v1030, 1.0
      %v1032 = vrcp.pop %v1031
      %v1033 = vmul.f32 %v1031, %v1032
      %v1034 = vsub.f32 1.0, %v1033
      %v1035 = vmul.f32 %v1032, %v1034
      %v1036 = vadd.f32 %v1032, %v1035
      %vm1037 = vweird.f32 %v1031
      %vm1038 = vweird.f32 %v1032
      %vm1039 = vmor %vm1037, %vm1038
      %v1040 = vsel %vm1039, %v1032, %v1036
      %v1041 = vand.u32 2147483647, %v1031
      %vm1042 = vcmp.eq.f32.partialorder %v1041, 8.507059e+37
      %v1043 = vand.u32 %v1031, 2147483648
      %v1044 = vor.u32 1.1754944e-38, %v1043
      %v1045 = vsel %vm1042, %v1044, %v1040
      %v1046 = vmul.f32 1.0, %v1045
      %1047 = vrot.lane.b32.xlu0 %v52, 64
      %v1048 = vpop.permute.xlu0 %1047
      %v1050 = vadd.f32 %v992, %v1048
      %1052 = vrot.lane.b32.xlu0 %v1050, 64
      %v1053 = vpop.permute.xlu0 %1052
      %v1055 = vmul.f32 %v1046, %v1053
      %1057 = vrot.lane.b32.xlu0 %v1055, 64
      %v1058 = vpop.permute.xlu0 %1057
      %v1060 = vadd.f32 %v959, %v1058
      %v1061 = vtanh.pop %v1060
      %v1062 = vsub.f32 1.0, %v1046
      %1064 = vrot.lane.b32.xlu0 %v1061, 96
      %v1065 = vpop.permute.xlu0 %1064
      %v1067 = vmul.f32 %v1062, %v1065
      %v1068 = vmul.f32 %v1046, %v954
      %v1069 = vadd.f32 %v1067, %v1068
      %v1070 = vadd.f32 %v962, %v1024
      %v1071 = vxor.u32 %v1070, 2147483648
      %v1072 = vmul.f32 %v1071, 1.442695
      %v1073 = vpow.pop %v1072
      %v1074 = vadd.f32 %v1073, 1.0
      %v1075 = vrcp.pop %v1074
      %v1076 = vmul.f32 %v1074, %v1075
      %v1077 = vsub.f32 1.0, %v1076
      %v1078 = vmul.f32 %v1075, %v1077
      %v1079 = vadd.f32 %v1075, %v1078
      %vm1080 = vweird.f32 %v1074
      %vm1081 = vweird.f32 %v1075
      %vm1082 = vmor %vm1080, %vm1081
      %v1083 = vsel %vm1082, %v1075, %v1079
      %v1084 = vand.u32 2147483647, %v1074
      %vm1085 = vcmp.eq.f32.partialorder %v1084, 8.507059e+37
      %v1086 = vand.u32 %v1074, 2147483648
      %v1087 = vor.u32 1.1754944e-38, %v1086
      %v1088 = vsel %vm1085, %v1087, %v1083
      %v1089 = vmul.f32 1.0, %v1088
      %1090 = vrot.lane.b32.xlu0 %v55, 64
      %v1091 = vpop.permute.xlu0 %1090
      %v1093 = vadd.f32 %v1024, %v1091
      %1095 = vrot.lane.b32.xlu0 %v1093, 64
      %v1096 = vpop.permute.xlu0 %1095
      %v1098 = vmul.f32 %v1089, %v1096
      %1100 = vrot.lane.b32.xlu0 %v1098, 64
      %v1101 = vpop.permute.xlu0 %1100
      %v1103 = vadd.f32 %v962, %v1101
      %v1104 = vtanh.pop %v1103
      %v1105 = vsub.f32 1.0, %v1089
      %1107 = vrot.lane.b32.xlu0 %v1104, 96
      %v1108 = vpop.permute.xlu0 %1107
      %v1110 = vmul.f32 %v1105, %v1108
      %v1111 = vmul.f32 %v1089, %v955
      %v1112 = vadd.f32 %v1110, %v1111
      %1114 = vrot.lane.b32.xlu0 %v1069, 96
      %v1115 = vpop.permute.xlu0 %1114
      %s1117 = scalar_lea.vmem [#allocation4], %s957
      %1118 = vst.msk [vmem:[%s1117] sm:$0x3] %vm588, %v1115
      %1120 = vrot.lane.b32.xlu0 %v1112, 96
      %v1121 = vpop.permute.xlu0 %1120
      %s1123 = scalar_lea.vmem [#allocation5], %s960
      %1124 = vst.msk [vmem:[%s1123] sm:$0x3] %vm588, %v1121
    $region53: #{bert_wrapper_rnn_forward.1} parent=1 // loop_footer
      %s953 = sadd.s32 1, %s949
    $region54: #{bert_wrapper_rnn_forward.1} parent=1 // loop_footer_branch
      %948 = sbr.rel target = $region50
    $region55: #{bert_wrapper_rnn_forward.1} parent=1 // loop_exit
      _
    %v1125 = vld [vmem:[#allocation4] sm:$0x3]
    %v1126 = vld [vmem:[#allocation4 + $0x2] sm:$0x3]
    %v1127 = vld [vmem:[#allocation4 + $0x4] sm:$0x3]
    %v1128 = vld [vmem:[#allocation4 + $0x6] sm:$0x3]
    %v1129 = vld [vmem:[#allocation4 + $0x8] sm:$0x3]
    %v1130 = vld [vmem:[#allocation4 + $0xa] sm:$0x3]
    %v1131 = vld [vmem:[#allocation4 + $0xc] sm:$0x3]
    %v1132 = vld [vmem:[#allocation4 + $0xe] sm:$0x3]
    %v1133 = vld [vmem:[#allocation5] sm:$0x3]
    %v1134 = vld [vmem:[#allocation5 + $0x2] sm:$0x3]
    %v1135 = vld [vmem:[#allocation5 + $0x4] sm:$0x3]
    %v1136 = vld [vmem:[#allocation5 + $0x6] sm:$0x3]
    %v1137 = vld [vmem:[#allocation5 + $0x8] sm:$0x3]
    %v1138 = vld [vmem:[#allocation5 + $0xa] sm:$0x3]
    %v1139 = vld [vmem:[#allocation5 + $0xc] sm:$0x3]
    %v1140 = vld [vmem:[#allocation5 + $0xe] sm:$0x3]
    %v1141 = vadd.f32 %v1125, %v1133
    %v1142 = vadd.f32 %v1126, %v1134
    %v1143 = vadd.f32 %v1127, %v1135
    %v1144 = vadd.f32 %v1128, %v1136
    %v1145 = vadd.f32 %v1129, %v1137
    %v1146 = vadd.f32 %v1130, %v1138
    %v1147 = vadd.f32 %v1131, %v1139
    %v1148 = vadd.f32 %v1132, %v1140
    %v1149 = vtanh.pop %v1141
    %v1150 = vtanh.pop %v1142
    %v1151 = vtanh.pop %v1143
    %v1152 = vtanh.pop %v1144
    %v1153 = vtanh.pop %v1145
    %v1154 = vtanh.pop %v1146
    %v1155 = vtanh.pop %v1147
    %v1156 = vtanh.pop %v1148
    %v1157 = vadd.f32 %v716, %v940
    %v1158 = vadd.f32 %v717, %v941
    %v1159 = vadd.f32 %v718, %v942
    %v1160 = vadd.f32 %v719, %v943
    %v1161 = vadd.f32 %v720, %v944
    %v1162 = vadd.f32 %v721, %v945
    %v1163 = vadd.f32 %v722, %v946
    %v1164 = vadd.f32 %v723, %v947
    %v1165 = vadd.f32 %v1157, %v1149
    %v1166 = vadd.f32 %v1158, %v1150
    %v1167 = vadd.f32 %v1159, %v1151
    %v1168 = vadd.f32 %v1160, %v1152
    %v1169 = vadd.f32 %v1161, %v1153
    %v1170 = vadd.f32 %v1162, %v1154
    %v1171 = vadd.f32 %v1163, %v1155
    %v1172 = vadd.f32 %v1164, %v1156
    %v1173 = vtanh.pop %v707
    %v1174 = vtanh.pop %v708
    %v1175 = vtanh.pop %v709
    %v1176 = vtanh.pop %v710
    %v1177 = vtanh.pop %v711
    %v1178 = vtanh.pop %v712
    %v1179 = vtanh.pop %v713
    %v1180 = vtanh.pop %v714
    %v1181 = vadd.f32 %v1165, %v1173
    %v1182 = vadd.f32 %v1166, %v1174
    %v1183 = vadd.f32 %v1167, %v1175
    %v1184 = vadd.f32 %v1168, %v1176
    %v1185 = vadd.f32 %v1169, %v1177
    %v1186 = vadd.f32 %v1170, %v1178
    %v1187 = vadd.f32 %v1171, %v1179
    %v1188 = vadd.f32 %v1172, %v1180
    %v1189 = vsel %vm588, %v1181, 0.0
    %v1190 = vsel %vm588, %v1182, 0.0
    %v1191 = vadd.f32 %v1189, %v1190
    %v1192 = vsel %vm588, %v1183, 0.0
    %v1193 = vadd.f32 %v1191, %v1192
    %v1194 = vsel %vm588, %v1184, 0.0
    %v1195 = vadd.f32 %v1193, %v1194
    %v1196 = vsel %vm588, %v1185, 0.0
    %v1197 = vadd.f32 %v1195, %v1196
    %v1198 = vsel %vm588, %v1186, 0.0
    %v1199 = vadd.f32 %v1197, %v1198
    %v1200 = vsel %vm588, %v1187, 0.0
    %v1201 = vadd.f32 %v1199, %v1200
    %v1202 = vsel %vm588, %v1188, 0.0
    %v1203 = vadd.f32 %v1201, %v1202
    %1204 = vadd.xlane.f32.xlu0 %v1203
    %v1205 = vpop.xlane.xlu0 %1204
    %v1206 = vmul.f32 %v1205, %v612
    %v1207 = vsub.f32 %v1181, %v1206
    %v1208 = vsub.f32 %v1182, %v1206
    %v1209 = vsub.f32 %v1183, %v1206
    %v1210 = vsub.f32 %v1184, %v1206
    %v1211 = vsub.f32 %v1185, %v1206
    %v1212 = vsub.f32 %v1186, %v1206
    %v1213 = vsub.f32 %v1187, %v1206
    %v1214 = vsub.f32 %v1188, %v1206
    %v1215 = vmul.f32 %v1207, %v1207
    %v1216 = vmul.f32 %v1208, %v1208
    %v1217 = vmul.f32 %v1209, %v1209
    %v1218 = vmul.f32 %v1210, %v1210
    %v1219 = vmul.f32 %v1211, %v1211
    %v1220 = vmul.f32 %v1212, %v1212
    %v1221 = vmul.f32 %v1213, %v1213
    %v1222 = vmul.f32 %v1214, %v1214
    %v1223 = vsel %vm588, %v1215, 0.0
    %v1224 = vsel %vm588, %v1216, 0.0
    %v1225 = vadd.f32 %v1223, %v1224
    %v1226 = vsel %vm588, %v1217, 0.0
    %v1227 = vadd.f32 %v1225, %v1226
    %v1228 = vsel %vm588, %v1218, 0.0
    %v1229 = vadd.f32 %v1227, %v1228
    %v1230 = vsel %vm588, %v1219, 0.0
    %v1231 = vadd.f32 %v1229, %v1230
    %v1232 = vsel %vm588, %v1220, 0.0
    %v1233 = vadd.f32 %v1231, %v1232
    %v1234 = vsel %vm588, %v1221, 0.0
    %v1235 = vadd.f32 %v1233, %v1234
    %v1236 = vsel %vm588, %v1222, 0.0
    %v1237 = vadd.f32 %v1235, %v1236
    %1238 = vadd.xlane.f32.xlu0 %v1237
    %v1239 = vpop.xlane.xlu0 %1238
    %v1240 = vmul.f32 %v1239, %v612
    %v1241 = vadd.f32 %v1240, 1e-12
    %v1242 = vrsqrt.pop %v1241
    %v1243 = vmul.f32 %v1242, %v1241
    %v1244 = vmul.f32 %v1243, %v1242
    %v1245 = vmul.f32 0.5, %v1244
    %v1246 = vsub.f32 1.5, %v1245
    %v1247 = vmul.f32 %v1242, %v1246
    %vm1248 = vweird.f32 %v1241
    %vm1249 = vweird.f32 %v1242
    %vm1250 = vmor %vm1248, %vm1249
    %v1251 = vsel %vm1250, %v1242, %v1247
    %v1252 = vmul.f32 %v1207, %v1251
    %v1253 = vmul.f32 %v1208, %v1251
    %v1254 = vmul.f32 %v1209, %v1251
    %v1255 = vmul.f32 %v1210, %v1251
    %v1256 = vmul.f32 %v1211, %v1251
    %v1257 = vmul.f32 %v1212, %v1251
    %v1258 = vmul.f32 %v1213, %v1251
    %v1259 = vmul.f32 %v1214, %v1251
    %v1260 = vmul.f32 %v1252, %v667
    %v1261 = vmul.f32 %v1253, %v668
    %v1262 = vmul.f32 %v1254, %v669
    %v1263 = vmul.f32 %v1255, %v670
    %v1264 = vmul.f32 %v1256, %v671
    %v1265 = vmul.f32 %v1257, %v672
    %v1266 = vmul.f32 %v1258, %v673
    %v1267 = vmul.f32 %v1259, %v674
    %v1268 = vadd.f32 %v1260, %v691
    %v1269 = vadd.f32 %v1261, %v692
    %v1270 = vadd.f32 %v1262, %v693
    %v1271 = vadd.f32 %v1263, %v694
    %v1272 = vadd.f32 %v1264, %v695
    %v1273 = vadd.f32 %v1265, %v696
    %v1274 = vadd.f32 %v1266, %v697
    %v1275 = vadd.f32 %v1267, %v698
    %s1276 = scalar_lea.vmem %s0, 48
    %v1277 = vld [vmem:[%s1276] sm:$0x3]
    %v1278 = vld [vmem:[%s1276 + $0x2] sm:$0x3]
    %v1279 = vld [vmem:[%s1276 + $0x4] sm:$0x3]
    %v1280 = vld [vmem:[%s1276 + $0x6] sm:$0x3]
    %v1281 = vld [vmem:[%s1276 + $0x8] sm:$0x3]
    %v1282 = vld [vmem:[%s1276 + $0xa] sm:$0x3]
    %v1283 = vld [vmem:[%s1276 + $0xc] sm:$0x3]
    %v1284 = vld [vmem:[%s1276 + $0xe] sm:$0x3]
    %v1285 = vadd.f32 %v1277, %v1268
    %v1286 = vadd.f32 %v1278, %v1269
    %v1287 = vadd.f32 %v1279, %v1270
    %v1288 = vadd.f32 %v1280, %v1271
    %v1289 = vadd.f32 %v1281, %v1272
    %v1290 = vadd.f32 %v1282, %v1273
    %v1291 = vadd.f32 %v1283, %v1274
    %v1292 = vadd.f32 %v1284, %v1275
    %1301 = vst [vmem:[#allocation1] ss:$4 sm:$0xff] %v1285
    %s1302 = scalar_lea.vmem [#allocation1], 1
    %1303 = vst [vmem:[%s1302] ss:$4 sm:$0xff] %v1286
    %s1304 = scalar_lea.vmem [#allocation1], 2
    %1305 = vst [vmem:[%s1304] ss:$4 sm:$0xff] %v1287
    %s1306 = scalar_lea.vmem [#allocation1], 3
    %1307 = vst [vmem:[%s1306] ss:$4 sm:$0xff] %v1288
    %s1308 = scalar_lea.vmem [#allocation1], 32
    %1309 = vst [vmem:[%s1308] ss:$4 sm:$0xff] %v1289
    %s1310 = scalar_lea.vmem [#allocation1], 33
    %1311 = vst [vmem:[%s1310] ss:$4 sm:$0xff] %v1290
    %s1312 = scalar_lea.vmem [#allocation1], 34
    %1313 = vst [vmem:[%s1312] ss:$4 sm:$0xff] %v1291
    %s1314 = scalar_lea.vmem [#allocation1], 35
    %1315 = vst [vmem:[%s1314] ss:$4 sm:$0xff] %v1292
    %v1316 = vld.sshfl [vmem:[#allocation1] sm:$0xff pattern:$0x73625140]
    %v1317 = vld.sshfl [vmem:[#allocation1 + $0x20] sm:$0xff pattern:$0x73625140]
    %v1320 = vpack.c.bf16 %v1317, %v1316
    %v1322 = vsel %vm152, %v1320, 0
    %1324 = vmatpush.bf16.msra.mxu0 0
    %1325 = vmatpush.bf16.msra.mxu0 0
    %1326 = vmatpush.bf16.msra.mxu0 0
    %1327 = vmatpush.bf16.msra.mxu0 0
    %1328 = vmatpush.bf16.msra.mxu0 0
    %1329 = vmatpush.bf16.msra.mxu0 0
    %1330 = vmatpush.bf16.msra.mxu0 %v146
    %1331 = vmatpush.bf16.msra.mxu0 %v144
    %1332 = vmatmul.bf16.gmra.mxu0 %v1322
    %v1333 = vpop.f32.mrf.mxu0
    %v1334 = vadd.f32 %v128, %v1333
    %v1335 = vpop.f32.mrf.mxu0
    %v1336 = vadd.f32 %v128, %v1335
    %1337 = vdwg.mxu0
    %1338 = vmatpush.bf16.msra.mxu0 0
    %1339 = vmatpush.bf16.msra.mxu0 0
    %1340 = vmatpush.bf16.msra.mxu0 0
    %1341 = vmatpush.bf16.msra.mxu0 0
    %1342 = vmatpush.bf16.msra.mxu0 0
    %1343 = vmatpush.bf16.msra.mxu0 0
    %1344 = vmatpush.bf16.msra.mxu0 %v147
    %1345 = vmatpush.bf16.msra.mxu0 %v145
    %1346 = vmatmul.bf16.gmra.mxu0 %v1322
    %v1347 = vpop.f32.mrf.mxu0
    %v1348 = vadd.f32 %v129, %v1347
    %v1349 = vpop.f32.mrf.mxu0
    %v1350 = vadd.f32 %v129, %v1349
    %1351 = vdwg.mxu0
    %v1356 = vrot.slane %v1348, 6
    %v1357 = vrot.slane %v1350, 6
    %v1358 = vsel %vm190, %v1334, %v1356
    %v1359 = vsel %vm192, %v1334, %v1356
    %v1360 = vrot.slane %v1359, 2
    %v1361 = vsel %vm195, %v1334, %v1356
    %v1362 = vrot.slane %v1361, 4
    %v1363 = vsel %vm198, %v1356, %v1334
    %v1364 = vrot.slane %v1363, 6
    %v1365 = vsel %vm190, %v1336, %v1357
    %v1366 = vsel %vm192, %v1336, %v1357
    %v1367 = vrot.slane %v1366, 2
    %v1368 = vsel %vm195, %v1336, %v1357
    %v1369 = vrot.slane %v1368, 4
    %v1370 = vsel %vm198, %v1357, %v1336
    %v1371 = vrot.slane %v1370, 6
    %1380 = vst.msk [vmem:[#allocation2] sm:$0x3] %vm216, %v1358
    %1381 = vst.msk [vmem:[#allocation2 + $0x2] sm:$0x3] %vm216, %v1360
    %1382 = vst.msk [vmem:[#allocation2 + $0x4] sm:$0x3] %vm216, %v1362
    %1383 = vst.msk [vmem:[#allocation2 + $0x6] sm:$0x3] %vm216, %v1364
    %1384 = vst.msk [vmem:[#allocation2 + $0x8] sm:$0x3] %vm216, %v1365
    %1385 = vst.msk [vmem:[#allocation2 + $0xa] sm:$0x3] %vm216, %v1367
    %1386 = vst.msk [vmem:[#allocation2 + $0xc] sm:$0x3] %vm216, %v1369
    %1387 = vst.msk [vmem:[#allocation2 + $0xe] sm:$0x3] %vm216, %v1371
    %1388 = vst [vmem:[#allocation1] ss:$4 sm:$0xff] %v1358
    %v1389 = vld.sshfl [vmem:[#allocation1] sm:$0xff pattern:$0x73625140]
    %v1390 = vld.sshfl [vmem:[#allocation1 + $0x8] sm:$0xff pattern:$0x73625140]
    %s1391 = scalar_lea.vmem [#allocation1], 32
    %1392 = vst [vmem:[%s1391] ss:$4 sm:$0xff] %v1360
    %v1393 = vld.sshfl [vmem:[#allocation1 + $0x20] sm:$0xff pattern:$0x73625140]
    %v1394 = vld.sshfl [vmem:[#allocation1 + $0x28] sm:$0xff pattern:$0x73625140]
    %1395 = vst [vmem:[#allocation1] ss:$4 sm:$0xff] %v1362
    %v1396 = vld.sshfl [vmem:[#allocation1] sm:$0xff pattern:$0x73625140]
    %v1397 = vld.sshfl [vmem:[#allocation1 + $0x8] sm:$0xff pattern:$0x73625140]
    %1398 = vst [vmem:[%s1391] ss:$4 sm:$0xff] %v1364
    %v1399 = vld.sshfl [vmem:[#allocation1 + $0x20] sm:$0xff pattern:$0x73625140]
    %v1400 = vld.sshfl [vmem:[#allocation1 + $0x28] sm:$0xff pattern:$0x73625140]
    %1401 = vst [vmem:[#allocation1] ss:$4 sm:$0xff] %v1365
    %v1402 = vld.sshfl [vmem:[#allocation1] sm:$0xff pattern:$0x73625140]
    %v1403 = vld.sshfl [vmem:[#allocation1 + $0x8] sm:$0xff pattern:$0x73625140]
    %1404 = vst [vmem:[%s1391] ss:$4 sm:$0xff] %v1367
    %v1405 = vld.sshfl [vmem:[#allocation1 + $0x20] sm:$0xff pattern:$0x73625140]
    %v1406 = vld.sshfl [vmem:[#allocation1 + $0x28] sm:$0xff pattern:$0x73625140]
    %1407 = vst [vmem:[#allocation1] ss:$4 sm:$0xff] %v1369
    %v1408 = vld.sshfl [vmem:[#allocation1] sm:$0xff pattern:$0x73625140]
    %v1409 = vld.sshfl [vmem:[#allocation1 + $0x8] sm:$0xff pattern:$0x73625140]
    %1410 = vst [vmem:[%s1391] ss:$4 sm:$0xff] %v1371
    %v1411 = vld.sshfl [vmem:[#allocation1 + $0x20] sm:$0xff pattern:$0x73625140]
    %v1412 = vld.sshfl [vmem:[#allocation1 + $0x28] sm:$0xff pattern:$0x73625140]
    %1413 = vrot.lane.b32.xlu0 %v1389, 32
    %v1414 = vpop.permute.xlu0 %1413
    %1415 = vrot.lane.b32.xlu0 %v1390, 32
    %v1416 = vpop.permute.xlu0 %1415
    %1417 = vrot.lane.b32.xlu0 %v1393, 32
    %v1418 = vpop.permute.xlu0 %1417
    %1419 = vrot.lane.b32.xlu0 %v1394, 32
    %v1420 = vpop.permute.xlu0 %1419
    %1421 = vrot.lane.b32.xlu0 %v1396, 32
    %v1422 = vpop.permute.xlu0 %1421
    %1423 = vrot.lane.b32.xlu0 %v1397, 32
    %v1424 = vpop.permute.xlu0 %1423
    %1425 = vrot.lane.b32.xlu0 %v1399, 32
    %v1426 = vpop.permute.xlu0 %1425
    %1427 = vrot.lane.b32.xlu0 %v1400, 32
    %v1428 = vpop.permute.xlu0 %1427
    %1429 = vrot.lane.b32.xlu0 %v1402, 32
    %v1430 = vpop.permute.xlu0 %1429
    %1431 = vrot.lane.b32.xlu0 %v1403, 32
    %v1432 = vpop.permute.xlu0 %1431
    %1433 = vrot.lane.b32.xlu0 %v1405, 32
    %v1434 = vpop.permute.xlu0 %1433
    %1435 = vrot.lane.b32.xlu0 %v1406, 32
    %v1436 = vpop.permute.xlu0 %1435
    %1437 = vrot.lane.b32.xlu0 %v1408, 32
    %v1438 = vpop.permute.xlu0 %1437
    %1439 = vrot.lane.b32.xlu0 %v1409, 32
    %v1440 = vpop.permute.xlu0 %1439
    %1441 = vrot.lane.b32.xlu0 %v1411, 32
    %v1442 = vpop.permute.xlu0 %1441
    %1443 = vrot.lane.b32.xlu0 %v1412, 32
    %v1444 = vpop.permute.xlu0 %1443
    %v1445 = vsel %vm152, %v1414, %v1416
    %v1446 = vsel %vm152, %v1418, %v1420
    %v1447 = vsel %vm152, %v1422, %v1424
    %v1448 = vsel %vm152, %v1426, %v1428
    %v1449 = vsel %vm152, %v1430, %v1432
    %v1450 = vsel %vm152, %v1434, %v1436
    %v1451 = vsel %vm152, %v1438, %v1440
    %v1452 = vsel %vm152, %v1442, %v1444
    %1461 = vst.msk [vmem:[#allocation3] sm:$0x3] %vm216, %v1445
    %1462 = vst.msk [vmem:[#allocation3 + $0x2] sm:$0x3] %vm216, %v1446
    %1463 = vst.msk [vmem:[#allocation3 + $0x4] sm:$0x3] %vm216, %v1447
    %1464 = vst.msk [vmem:[#allocation3 + $0x6] sm:$0x3] %vm216, %v1448
    %1465 = vst.msk [vmem:[#allocation3 + $0x8] sm:$0x3] %vm216, %v1449
    %1466 = vst.msk [vmem:[#allocation3 + $0xa] sm:$0x3] %vm216, %v1450
    %1467 = vst.msk [vmem:[#allocation3 + $0xc] sm:$0x3] %vm216, %v1451
    %1468 = vst.msk [vmem:[#allocation3 + $0xe] sm:$0x3] %vm216, %v1452
    %1469 = vrot.lane.b32.xlu0 %v1358, 64
    %v1470 = vpop.permute.xlu0 %1469
    %1471 = vrot.lane.b32.xlu0 %v1360, 64
    %v1472 = vpop.permute.xlu0 %1471
    %1473 = vrot.lane.b32.xlu0 %v1362, 64
    %v1474 = vpop.permute.xlu0 %1473
    %1475 = vrot.lane.b32.xlu0 %v1364, 64
    %v1476 = vpop.permute.xlu0 %1475
    %1477 = vrot.lane.b32.xlu0 %v1365, 64
    %v1478 = vpop.permute.xlu0 %1477
    %1479 = vrot.lane.b32.xlu0 %v1367, 64
    %v1480 = vpop.permute.xlu0 %1479
    %1481 = vrot.lane.b32.xlu0 %v1369, 64
    %v1482 = vpop.permute.xlu0 %1481
    %1483 = vrot.lane.b32.xlu0 %v1371, 64
    %v1484 = vpop.permute.xlu0 %1483
    %v1485 = vrot.slane %v1470, 2
    %v1486 = vrot.slane %v1472, 2
    %v1487 = vrot.slane %v1474, 2
    %v1488 = vrot.slane %v1476, 2
    %v1489 = vrot.slane %v1478, 2
    %v1490 = vrot.slane %v1480, 2
    %v1491 = vrot.slane %v1482, 2
    %v1492 = vrot.slane %v1484, 2
    %v1501 = vtanh.pop %v1485
    %v1502 = vtanh.pop %v1486
    %v1503 = vtanh.pop %v1487
    %v1504 = vtanh.pop %v1488
    %v1505 = vtanh.pop %v1489
    %v1506 = vtanh.pop %v1490
    %v1507 = vtanh.pop %v1491
    %v1508 = vtanh.pop %v1492
    loop: start=0, step=1, limit=8
    $region56: #{bert_wrapper_rnn_forward.1} parent=1 // loop_pre_header
      _
    $region57: #{bert_wrapper_rnn_forward.1} parent=1 // loop_header
      %s1510 = sphi 0, %s1514
      %p1511 = scmp.ge.s32.totalorder %s1510, 8
      %v1515 = vphi 0.0, %v1630
      %v1516 = vphi 0.0, %v1673
    $region58: #{bert_wrapper_rnn_forward.1} parent=1 // loop_header_branch
      %1513 = sbr.rel (%p1511) target = $region62
    $region59: #{bert_wrapper_rnn_forward.1} parent=1 // loop_body
      %s1517 = ssub.s32 7, %s1510
      %s1518 = smul.u32 %s1510, 2
      %s1519 = scalar_lea.vmem [#allocation2], %s1518
      %v1520 = vld [vmem:[%s1519] sm:$0x3]
      %s1521 = smul.u32 %s1517, 2
      %s1522 = scalar_lea.vmem [#allocation3], %s1521
      %v1523 = vld [vmem:[%s1522] sm:$0x3]
      %v1524 = vpack.c.bf16 %v1515, %v1515
      %1526 = vrot.lane.b32.xlu0 %v1524, 96
      %v1527 = vpop.permute.xlu0 %1526
      %v1532 = vunpack.c.l.b16 %v41
      %v1533 = vunpack.c.l.b16 %v42
      %v1534 = vunpack.c.l.b16 %v43
      %v1535 = vunpack.c.l.b16 %v44
      %v1536 = vpack.c.b16 %v1533, %v1532
      %v1537 = vpack.c.b16 %v1535, %v1534
      %v1541 = vsel %vm152, %v1527, 0
      %1543 = vmatpush.bf16.msra.mxu0 0
      %1544 = vmatpush.bf16.msra.mxu0 0
      %1545 = vmatpush.bf16.msra.mxu0 0
      %1546 = vmatpush.bf16.msra.mxu0 0
      %1547 = vmatpush.bf16.msra.mxu0 0
      %1548 = vmatpush.bf16.msra.mxu0 0
      %1549 = vmatpush.bf16.msra.mxu0 %v1537
      %1550 = vmatpush.bf16.msra.mxu0 %v1536
      %1551 = vmatmul.bf16.gmra.mxu0 %v1541
      %v1552 = vpop.f32.mrf.mxu0
      %v1553 = vadd.f32 0.0, %v1552
      %v1554 = vpop.f32.mrf.mxu0
      %1555 = vdwg.mxu0
      %v1556 = vpack.c.bf16 %v1516, %v1516
      %1558 = vrot.lane.b32.xlu0 %v1556, 96
      %v1559 = vpop.permute.xlu0 %1558
      %v1564 = vunpack.c.l.b16 %v45
      %v1565 = vunpack.c.l.b16 %v46
      %v1566 = vunpack.c.l.b16 %v47
      %v1567 = vunpack.c.l.b16 %v48
      %v1568 = vpack.c.b16 %v1565, %v1564
      %v1569 = vpack.c.b16 %v1567, %v1566
      %v1573 = vsel %vm152, %v1559, 0
      %1575 = vmatpush.bf16.msra.mxu0 0
      %1576 = vmatpush.bf16.msra.mxu0 0
      %1577 = vmatpush.bf16.msra.mxu0 0
      %1578 = vmatpush.bf16.msra.mxu0 0
      %1579 = vmatpush.bf16.msra.mxu0 0
      %1580 = vmatpush.bf16.msra.mxu0 0
      %1581 = vmatpush.bf16.msra.mxu0 %v1569
      %1582 = vmatpush.bf16.msra.mxu0 %v1568
      %1583 = vmatmul.bf16.gmra.mxu0 %v1573
      %v1584 = vpop.f32.mrf.mxu0
      %v1585 = vadd.f32 0.0, %v1584
      %v1586 = vpop.f32.mrf.mxu0
      %1587 = vdwg.mxu0
      %v1588 = vadd.f32 %v1520, %v1553
      %v1589 = vxor.u32 %v1588, 2147483648
      %v1590 = vmul.f32 %v1589, 1.442695
      %v1591 = vpow.pop %v1590
      %v1592 = vadd.f32 %v1591, 1.0
      %v1593 = vrcp.pop %v1592
      %v1594 = vmul.f32 %v1592, %v1593
      %v1595 = vsub.f32 1.0, %v1594
      %v1596 = vmul.f32 %v1593, %v1595
      %v1597 = vadd.f32 %v1593, %v1596
      %vm1598 = vweird.f32 %v1592
      %vm1599 = vweird.f32 %v1593
      %vm1600 = vmor %vm1598, %vm1599
      %v1601 = vsel %vm1600, %v1593, %v1597
      %v1602 = vand.u32 2147483647, %v1592
      %vm1603 = vcmp.eq.f32.partialorder %v1602, 8.507059e+37
      %v1604 = vand.u32 %v1592, 2147483648
      %v1605 = vor.u32 1.1754944e-38, %v1604
      %v1606 = vsel %vm1603, %v1605, %v1601
      %v1607 = vmul.f32 1.0, %v1606
      %1608 = vrot.lane.b32.xlu0 %v52, 64
      %v1609 = vpop.permute.xlu0 %1608
      %v1611 = vadd.f32 %v1553, %v1609
      %1613 = vrot.lane.b32.xlu0 %v1611, 64
      %v1614 = vpop.permute.xlu0 %1613
      %v1616 = vmul.f32 %v1607, %v1614
      %1618 = vrot.lane.b32.xlu0 %v1616, 64
      %v1619 = vpop.permute.xlu0 %1618
      %v1621 = vadd.f32 %v1520, %v1619
      %v1622 = vtanh.pop %v1621
      %v1623 = vsub.f32 1.0, %v1607
      %1625 = vrot.lane.b32.xlu0 %v1622, 96
      %v1626 = vpop.permute.xlu0 %1625
      %v1628 = vmul.f32 %v1623, %v1626
      %v1629 = vmul.f32 %v1607, %v1515
      %v1630 = vadd.f32 %v1628, %v1629
      %v1631 = vadd.f32 %v1523, %v1585
      %v1632 = vxor.u32 %v1631, 2147483648
      %v1633 = vmul.f32 %v1632, 1.442695
      %v1634 = vpow.pop %v1633
      %v1635 = vadd.f32 %v1634, 1.0
      %v1636 = vrcp.pop %v1635
      %v1637 = vmul.f32 %v1635, %v1636
      %v1638 = vsub.f32 1.0, %v1637
      %v1639 = vmul.f32 %v1636, %v1638
      %v1640 = vadd.f32 %v1636, %v1639
      %vm1641 = vweird.f32 %v1635
      %vm1642 = vweird.f32 %v1636
      %vm1643 = vmor %vm1641, %vm1642
      %v1644 = vsel %vm1643, %v1636, %v1640
      %v1645 = vand.u32 2147483647, %v1635
      %vm1646 = vcmp.eq.f32.partialorder %v1645, 8.507059e+37
      %v1647 = vand.u32 %v1635, 2147483648
      %v1648 = vor.u32 1.1754944e-38, %v1647
      %v1649 = vsel %vm1646, %v1648, %v1644
      %v1650 = vmul.f32 1.0, %v1649
      %1651 = vrot.lane.b32.xlu0 %v55, 64
      %v1652 = vpop.permute.xlu0 %1651
      %v1654 = vadd.f32 %v1585, %v1652
      %1656 = vrot.lane.b32.xlu0 %v1654, 64
      %v1657 = vpop.permute.xlu0 %1656
      %v1659 = vmul.f32 %v1650, %v1657
      %1661 = vrot.lane.b32.xlu0 %v1659, 64
      %v1662 = vpop.permute.xlu0 %1661
      %v1664 = vadd.f32 %v1523, %v1662
      %v1665 = vtanh.pop %v1664
      %v1666 = vsub.f32 1.0, %v1650
      %1668 = vrot.lane.b32.xlu0 %v1665, 96
      %v1669 = vpop.permute.xlu0 %1668
      %v1671 = vmul.f32 %v1666, %v1669
      %v1672 = vmul.f32 %v1650, %v1516
      %v1673 = vadd.f32 %v1671, %v1672
      %1675 = vrot.lane.b32.xlu0 %v1630, 96
      %v1676 = vpop.permute.xlu0 %1675
      %s1678 = scalar_lea.vmem [#allocation4], %s1518
      %1679 = vst.msk [vmem:[%s1678] sm:$0x3] %vm588, %v1676
      %1681 = vrot.lane.b32.xlu0 %v1673, 96
      %v1682 = vpop.permute.xlu0 %1681
      %s1684 = scalar_lea.vmem [#allocation5], %s1521
      %1685 = vst.msk [vmem:[%s1684] sm:$0x3] %vm588, %v1682
    $region60: #{bert_wrapper_rnn_forward.1} parent=1 // loop_footer
      %s1514 = sadd.s32 1, %s1510
    $region61: #{bert_wrapper_rnn_forward.1} parent=1 // loop_footer_branch
      %1509 = sbr.rel target = $region57
    $region62: #{bert_wrapper_rnn_forward.1} parent=1 // loop_exit
      _
    %v1686 = vld [vmem:[#allocation4] sm:$0x3]
    %v1687 = vld [vmem:[#allocation4 + $0x2] sm:$0x3]
    %v1688 = vld [vmem:[#allocation4 + $0x4] sm:$0x3]
    %v1689 = vld [vmem:[#allocation4 + $0x6] sm:$0x3]
    %v1690 = vld [vmem:[#allocation4 + $0x8] sm:$0x3]
    %v1691 = vld [vmem:[#allocation4 + $0xa] sm:$0x3]
    %v1692 = vld [vmem:[#allocation4 + $0xc] sm:$0x3]
    %v1693 = vld [vmem:[#allocation4 + $0xe] sm:$0x3]
    %v1694 = vld [vmem:[#allocation5] sm:$0x3]
    %v1695 = vld [vmem:[#allocation5 + $0x2] sm:$0x3]
    %v1696 = vld [vmem:[#allocation5 + $0x4] sm:$0x3]
    %v1697 = vld [vmem:[#allocation5 + $0x6] sm:$0x3]
    %v1698 = vld [vmem:[#allocation5 + $0x8] sm:$0x3]
    %v1699 = vld [vmem:[#allocation5 + $0xa] sm:$0x3]
    %v1700 = vld [vmem:[#allocation5 + $0xc] sm:$0x3]
    %v1701 = vld [vmem:[#allocation5 + $0xe] sm:$0x3]
    %v1702 = vadd.f32 %v1686, %v1694
    %v1703 = vadd.f32 %v1687, %v1695
    %v1704 = vadd.f32 %v1688, %v1696
    %v1705 = vadd.f32 %v1689, %v1697
    %v1706 = vadd.f32 %v1690, %v1698
    %v1707 = vadd.f32 %v1691, %v1699
    %v1708 = vadd.f32 %v1692, %v1700
    %v1709 = vadd.f32 %v1693, %v1701
    %v1710 = vtanh.pop %v1702
    %v1711 = vtanh.pop %v1703
    %v1712 = vtanh.pop %v1704
    %v1713 = vtanh.pop %v1705
    %v1714 = vtanh.pop %v1706
    %v1715 = vtanh.pop %v1707
    %v1716 = vtanh.pop %v1708
    %v1717 = vtanh.pop %v1709
    %v1718 = vadd.f32 %v1277, %v1501
    %v1719 = vadd.f32 %v1278, %v1502
    %v1720 = vadd.f32 %v1279, %v1503
    %v1721 = vadd.f32 %v1280, %v1504
    %v1722 = vadd.f32 %v1281, %v1505
    %v1723 = vadd.f32 %v1282, %v1506
    %v1724 = vadd.f32 %v1283, %v1507
    %v1725 = vadd.f32 %v1284, %v1508
    %v1726 = vadd.f32 %v1718, %v1710
    %v1727 = vadd.f32 %v1719, %v1711
    %v1728 = vadd.f32 %v1720, %v1712
    %v1729 = vadd.f32 %v1721, %v1713
    %v1730 = vadd.f32 %v1722, %v1714
    %v1731 = vadd.f32 %v1723, %v1715
    %v1732 = vadd.f32 %v1724, %v1716
    %v1733 = vadd.f32 %v1725, %v1717
    %v1734 = vtanh.pop %v1268
    %v1735 = vtanh.pop %v1269
    %v1736 = vtanh.pop %v1270
    %v1737 = vtanh.pop %v1271
    %v1738 = vtanh.pop %v1272
    %v1739 = vtanh.pop %v1273
    %v1740 = vtanh.pop %v1274
    %v1741 = vtanh.pop %v1275
    %v1742 = vadd.f32 %v1726, %v1734
    %v1743 = vadd.f32 %v1727, %v1735
    %v1744 = vadd.f32 %v1728, %v1736
    %v1745 = vadd.f32 %v1729, %v1737
    %v1746 = vadd.f32 %v1730, %v1738
    %v1747 = vadd.f32 %v1731, %v1739
    %v1748 = vadd.f32 %v1732, %v1740
    %v1749 = vadd.f32 %v1733, %v1741
    %v1750 = vsel %vm588, %v1742, 0.0
    %v1751 = vsel %vm588, %v1743, 0.0
    %v1752 = vadd.f32 %v1750, %v1751
    %v1753 = vsel %vm588, %v1744, 0.0
    %v1754 = vadd.f32 %v1752, %v1753
    %v1755 = vsel %vm588, %v1745, 0.0
    %v1756 = vadd.f32 %v1754, %v1755
    %v1757 = vsel %vm588, %v1746, 0.0
    %v1758 = vadd.f32 %v1756, %v1757
    %v1759 = vsel %vm588, %v1747, 0.0
    %v1760 = vadd.f32 %v1758, %v1759
    %v1761 = vsel %vm588, %v1748, 0.0
    %v1762 = vadd.f32 %v1760, %v1761
    %v1763 = vsel %vm588, %v1749, 0.0
    %v1764 = vadd.f32 %v1762, %v1763
    %1765 = vadd.xlane.f32.xlu0 %v1764
    %v1766 = vpop.xlane.xlu0 %1765
    %v1767 = vmul.f32 %v1766, %v612
    %v1768 = vsub.f32 %v1742, %v1767
    %v1769 = vsub.f32 %v1743, %v1767
    %v1770 = vsub.f32 %v1744, %v1767
    %v1771 = vsub.f32 %v1745, %v1767
    %v1772 = vsub.f32 %v1746, %v1767
    %v1773 = vsub.f32 %v1747, %v1767
    %v1774 = vsub.f32 %v1748, %v1767
    %v1775 = vsub.f32 %v1749, %v1767
    %v1776 = vmul.f32 %v1768, %v1768
    %v1777 = vmul.f32 %v1769, %v1769
    %v1778 = vmul.f32 %v1770, %v1770
    %v1779 = vmul.f32 %v1771, %v1771
    %v1780 = vmul.f32 %v1772, %v1772
    %v1781 = vmul.f32 %v1773, %v1773
    %v1782 = vmul.f32 %v1774, %v1774
    %v1783 = vmul.f32 %v1775, %v1775
    %v1784 = vsel %vm588, %v1776, 0.0
    %v1785 = vsel %vm588, %v1777, 0.0
    %v1786 = vadd.f32 %v1784, %v1785
    %v1787 = vsel %vm588, %v1778, 0.0
    %v1788 = vadd.f32 %v1786, %v1787
    %v1789 = vsel %vm588, %v1779, 0.0
    %v1790 = vadd.f32 %v1788, %v1789
    %v1791 = vsel %vm588, %v1780, 0.0
    %v1792 = vadd.f32 %v1790, %v1791
    %v1793 = vsel %vm588, %v1781, 0.0
    %v1794 = vadd.f32 %v1792, %v1793
    %v1795 = vsel %vm588, %v1782, 0.0
    %v1796 = vadd.f32 %v1794, %v1795
    %v1797 = vsel %vm588, %v1783, 0.0
    %v1798 = vadd.f32 %v1796, %v1797
    %1799 = vadd.xlane.f32.xlu0 %v1798
    %v1800 = vpop.xlane.xlu0 %1799
    %v1801 = vmul.f32 %v1800, %v612
    %v1802 = vadd.f32 %v1801, 1e-12
    %v1803 = vrsqrt.pop %v1802
    %v1804 = vmul.f32 %v1803, %v1802
    %v1805 = vmul.f32 %v1804, %v1803
    %v1806 = vmul.f32 0.5, %v1805
    %v1807 = vsub.f32 1.5, %v1806
    %v1808 = vmul.f32 %v1803, %v1807
    %vm1809 = vweird.f32 %v1802
    %vm1810 = vweird.f32 %v1803
    %vm1811 = vmor %vm1809, %vm1810
    %v1812 = vsel %vm1811, %v1803, %v1808
    %v1813 = vmul.f32 %v1768, %v1812
    %v1814 = vmul.f32 %v1769, %v1812
    %v1815 = vmul.f32 %v1770, %v1812
    %v1816 = vmul.f32 %v1771, %v1812
    %v1817 = vmul.f32 %v1772, %v1812
    %v1818 = vmul.f32 %v1773, %v1812
    %v1819 = vmul.f32 %v1774, %v1812
    %v1820 = vmul.f32 %v1775, %v1812
    %v1821 = vmul.f32 %v1813, %v667
    %v1822 = vmul.f32 %v1814, %v668
    %v1823 = vmul.f32 %v1815, %v669
    %v1824 = vmul.f32 %v1816, %v670
    %v1825 = vmul.f32 %v1817, %v671
    %v1826 = vmul.f32 %v1818, %v672
    %v1827 = vmul.f32 %v1819, %v673
    %v1828 = vmul.f32 %v1820, %v674
    %v1829 = vadd.f32 %v1821, %v691
    %v1830 = vadd.f32 %v1822, %v692
    %v1831 = vadd.f32 %v1823, %v693
    %v1832 = vadd.f32 %v1824, %v694
    %v1833 = vadd.f32 %v1825, %v695
    %v1834 = vadd.f32 %v1826, %v696
    %v1835 = vadd.f32 %v1827, %v697
    %v1836 = vadd.f32 %v1828, %v698
    %s1837 = scalar_lea.vmem %s0, 64
    %v1838 = vld [vmem:[%s1837] sm:$0x3]
    %v1839 = vld [vmem:[%s1837 + $0x2] sm:$0x3]
    %v1840 = vld [vmem:[%s1837 + $0x4] sm:$0x3]
    %v1841 = vld [vmem:[%s1837 + $0x6] sm:$0x3]
    %v1842 = vld [vmem:[%s1837 + $0x8] sm:$0x3]
    %v1843 = vld [vmem:[%s1837 + $0xa] sm:$0x3]
    %v1844 = vld [vmem:[%s1837 + $0xc] sm:$0x3]
    %v1845 = vld [vmem:[%s1837 + $0xe] sm:$0x3]
    %v1846 = vadd.f32 %v1838, %v1829
    %v1847 = vadd.f32 %v1839, %v1830
    %v1848 = vadd.f32 %v1840, %v1831
    %v1849 = vadd.f32 %v1841, %v1832
    %v1850 = vadd.f32 %v1842, %v1833
    %v1851 = vadd.f32 %v1843, %v1834
    %v1852 = vadd.f32 %v1844, %v1835
    %v1853 = vadd.f32 %v1845, %v1836
    %1862 = vst [vmem:[#allocation1] ss:$4 sm:$0xff] %v1846
    %s1863 = scalar_lea.vmem [#allocation1], 1
    %1864 = vst [vmem:[%s1863] ss:$4 sm:$0xff] %v1847
    %s1865 = scalar_lea.vmem [#allocation1], 2
    %1866 = vst [vmem:[%s1865] ss:$4 sm:$0xff] %v1848
    %s1867 = scalar_lea.vmem [#allocation1], 3
    %1868 = vst [vmem:[%s1867] ss:$4 sm:$0xff] %v1849
    %s1869 = scalar_lea.vmem [#allocation1], 32
    %1870 = vst [vmem:[%s1869] ss:$4 sm:$0xff] %v1850
    %s1871 = scalar_lea.vmem [#allocation1], 33
    %1872 = vst [vmem:[%s1871] ss:$4 sm:$0xff] %v1851
    %s1873 = scalar_lea.vmem [#allocation1], 34
    %1874 = vst [vmem:[%s1873] ss:$4 sm:$0xff] %v1852
    %s1875 = scalar_lea.vmem [#allocation1], 35
    %1876 = vst [vmem:[%s1875] ss:$4 sm:$0xff] %v1853
    %v1877 = vld.sshfl [vmem:[#allocation1] sm:$0xff pattern:$0x73625140]
    %v1878 = vld.sshfl [vmem:[#allocation1 + $0x20] sm:$0xff pattern:$0x73625140]
    %v1881 = vpack.c.bf16 %v1878, %v1877
    %v1883 = vsel %vm152, %v1881, 0
    %1885 = vmatpush.bf16.msra.mxu0 0
    %1886 = vmatpush.bf16.msra.mxu0 0
    %1887 = vmatpush.bf16.msra.mxu0 0
    %1888 = vmatpush.bf16.msra.mxu0 0
    %1889 = vmatpush.bf16.msra.mxu0 0
    %1890 = vmatpush.bf16.msra.mxu0 0
    %1891 = vmatpush.bf16.msra.mxu0 %v146
    %1892 = vmatpush.bf16.msra.mxu0 %v144
    %1893 = vmatmul.bf16.gmra.mxu0 %v1883
    %v1894 = vpop.f32.mrf.mxu0
    %v1895 = vadd.f32 %v128, %v1894
    %v1896 = vpop.f32.mrf.mxu0
    %v1897 = vadd.f32 %v128, %v1896
    %1898 = vdwg.mxu0
    %1899 = vmatpush.bf16.msra.mxu0 0
    %1900 = vmatpush.bf16.msra.mxu0 0
    %1901 = vmatpush.bf16.msra.mxu0 0
    %1902 = vmatpush.bf16.msra.mxu0 0
    %1903 = vmatpush.bf16.msra.mxu0 0
    %1904 = vmatpush.bf16.msra.mxu0 0
    %1905 = vmatpush.bf16.msra.mxu0 %v147
    %1906 = vmatpush.bf16.msra.mxu0 %v145
    %1907 = vmatmul.bf16.gmra.mxu0 %v1883
    %v1908 = vpop.f32.mrf.mxu0
    %v1909 = vadd.f32 %v129, %v1908
    %v1910 = vpop.f32.mrf.mxu0
    %v1911 = vadd.f32 %v129, %v1910
    %1912 = vdwg.mxu0
    %v1917 = vrot.slane %v1909, 6
    %v1918 = vrot.slane %v1911, 6
    %v1919 = vsel %vm190, %v1895, %v1917
    %v1920 = vsel %vm192, %v1895, %v1917
    %v1921 = vrot.slane %v1920, 2
    %v1922 = vsel %vm195, %v1895, %v1917
    %v1923 = vrot.slane %v1922, 4
    %v1924 = vsel %vm198, %v1917, %v1895
    %v1925 = vrot.slane %v1924, 6
    %v1926 = vsel %vm190, %v1897, %v1918
    %v1927 = vsel %vm192, %v1897, %v1918
    %v1928 = vrot.slane %v1927, 2
    %v1929 = vsel %vm195, %v1897, %v1918
    %v1930 = vrot.slane %v1929, 4
    %v1931 = vsel %vm198, %v1918, %v1897
    %v1932 = vrot.slane %v1931, 6
    %1941 = vst.msk [vmem:[#allocation2] sm:$0x3] %vm216, %v1919
    %1942 = vst.msk [vmem:[#allocation2 + $0x2] sm:$0x3] %vm216, %v1921
    %1943 = vst.msk [vmem:[#allocation2 + $0x4] sm:$0x3] %vm216, %v1923
    %1944 = vst.msk [vmem:[#allocation2 + $0x6] sm:$0x3] %vm216, %v1925
    %1945 = vst.msk [vmem:[#allocation2 + $0x8] sm:$0x3] %vm216, %v1926
    %1946 = vst.msk [vmem:[#allocation2 + $0xa] sm:$0x3] %vm216, %v1928
    %1947 = vst.msk [vmem:[#allocation2 + $0xc] sm:$0x3] %vm216, %v1930
    %1948 = vst.msk [vmem:[#allocation2 + $0xe] sm:$0x3] %vm216, %v1932
    %1949 = vst [vmem:[#allocation1] ss:$4 sm:$0xff] %v1919
    %v1950 = vld.sshfl [vmem:[#allocation1] sm:$0xff pattern:$0x73625140]
    %v1951 = vld.sshfl [vmem:[#allocation1 + $0x8] sm:$0xff pattern:$0x73625140]
    %s1952 = scalar_lea.vmem [#allocation1], 32
    %1953 = vst [vmem:[%s1952] ss:$4 sm:$0xff] %v1921
    %v1954 = vld.sshfl [vmem:[#allocation1 + $0x20] sm:$0xff pattern:$0x73625140]
    %v1955 = vld.sshfl [vmem:[#allocation1 + $0x28] sm:$0xff pattern:$0x73625140]
    %1956 = vst [vmem:[#allocation1] ss:$4 sm:$0xff] %v1923
    %v1957 = vld.sshfl [vmem:[#allocation1] sm:$0xff pattern:$0x73625140]
    %v1958 = vld.sshfl [vmem:[#allocation1 + $0x8] sm:$0xff pattern:$0x73625140]
    %1959 = vst [vmem:[%s1952] ss:$4 sm:$0xff] %v1925
    %v1960 = vld.sshfl [vmem:[#allocation1 + $0x20] sm:$0xff pattern:$0x73625140]
    %v1961 = vld.sshfl [vmem:[#allocation1 + $0x28] sm:$0xff pattern:$0x73625140]
    %1962 = vst [vmem:[#allocation1] ss:$4 sm:$0xff] %v1926
    %v1963 = vld.sshfl [vmem:[#allocation1] sm:$0xff pattern:$0x73625140]
    %v1964 = vld.sshfl [vmem:[#allocation1 + $0x8] sm:$0xff pattern:$0x73625140]
    %1965 = vst [vmem:[%s1952] ss:$4 sm:$0xff] %v1928
    %v1966 = vld.sshfl [vmem:[#allocation1 + $0x20] sm:$0xff pattern:$0x73625140]
    %v1967 = vld.sshfl [vmem:[#allocation1 + $0x28] sm:$0xff pattern:$0x73625140]
    %1968 = vst [vmem:[#allocation1] ss:$4 sm:$0xff] %v1930
    %v1969 = vld.sshfl [vmem:[#allocation1] sm:$0xff pattern:$0x73625140]
    %v1970 = vld.sshfl [vmem:[#allocation1 + $0x8] sm:$0xff pattern:$0x73625140]
    %1971 = vst [vmem:[%s1952] ss:$4 sm:$0xff] %v1932
    %v1972 = vld.sshfl [vmem:[#allocation1 + $0x20] sm:$0xff pattern:$0x73625140]
    %v1973 = vld.sshfl [vmem:[#allocation1 + $0x28] sm:$0xff pattern:$0x73625140]
    %1974 = vrot.lane.b32.xlu0 %v1950, 32
    %v1975 = vpop.permute.xlu0 %1974
    %1976 = vrot.lane.b32.xlu0 %v1951, 32
    %v1977 = vpop.permute.xlu0 %1976
    %1978 = vrot.lane.b32.xlu0 %v1954, 32
    %v1979 = vpop.permute.xlu0 %1978
    %1980 = vrot.lane.b32.xlu0 %v1955, 32
    %v1981 = vpop.permute.xlu0 %1980
    %1982 = vrot.lane.b32.xlu0 %v1957, 32
    %v1983 = vpop.permute.xlu0 %1982
    %1984 = vrot.lane.b32.xlu0 %v1958, 32
    %v1985 = vpop.permute.xlu0 %1984
    %1986 = vrot.lane.b32.xlu0 %v1960, 32
    %v1987 = vpop.permute.xlu0 %1986
    %1988 = vrot.lane.b32.xlu0 %v1961, 32
    %v1989 = vpop.permute.xlu0 %1988
    %1990 = vrot.lane.b32.xlu0 %v1963, 32
    %v1991 = vpop.permute.xlu0 %1990
    %1992 = vrot.lane.b32.xlu0 %v1964, 32
    %v1993 = vpop.permute.xlu0 %1992
    %1994 = vrot.lane.b32.xlu0 %v1966, 32
    %v1995 = vpop.permute.xlu0 %1994
    %1996 = vrot.lane.b32.xlu0 %v1967, 32
    %v1997 = vpop.permute.xlu0 %1996
    %1998 = vrot.lane.b32.xlu0 %v1969, 32
    %v1999 = vpop.permute.xlu0 %1998
    %2000 = vrot.lane.b32.xlu0 %v1970, 32
    %v2001 = vpop.permute.xlu0 %2000
    %2002 = vrot.lane.b32.xlu0 %v1972, 32
    %v2003 = vpop.permute.xlu0 %2002
    %2004 = vrot.lane.b32.xlu0 %v1973, 32
    %v2005 = vpop.permute.xlu0 %2004
    %v2006 = vsel %vm152, %v1975, %v1977
    %v2007 = vsel %vm152, %v1979, %v1981
    %v2008 = vsel %vm152, %v1983, %v1985
    %v2009 = vsel %vm152, %v1987, %v1989
    %v2010 = vsel %vm152, %v1991, %v1993
    %v2011 = vsel %vm152, %v1995, %v1997
    %v2012 = vsel %vm152, %v1999, %v2001
    %v2013 = vsel %vm152, %v2003, %v2005
    %2022 = vst.msk [vmem:[#allocation3] sm:$0x3] %vm216, %v2006
    %2023 = vst.msk [vmem:[#allocation3 + $0x2] sm:$0x3] %vm216, %v2007
    %2024 = vst.msk [vmem:[#allocation3 + $0x4] sm:$0x3] %vm216, %v2008
    %2025 = vst.msk [vmem:[#allocation3 + $0x6] sm:$0x3] %vm216, %v2009
    %2026 = vst.msk [vmem:[#allocation3 + $0x8] sm:$0x3] %vm216, %v2010
    %2027 = vst.msk [vmem:[#allocation3 + $0xa] sm:$0x3] %vm216, %v2011
    %2028 = vst.msk [vmem:[#allocation3 + $0xc] sm:$0x3] %vm216, %v2012
    %2029 = vst.msk [vmem:[#allocation3 + $0xe] sm:$0x3] %vm216, %v2013
    %2030 = vrot.lane.b32.xlu0 %v1919, 64
    %v2031 = vpop.permute.xlu0 %2030
    %2032 = vrot.lane.b32.xlu0 %v1921, 64
    %v2033 = vpop.permute.xlu0 %2032
    %2034 = vrot.lane.b32.xlu0 %v1923, 64
    %v2035 = vpop.permute.xlu0 %2034
    %2036 = vrot.lane.b32.xlu0 %v1925, 64
    %v2037 = vpop.permute.xlu0 %2036
    %2038 = vrot.lane.b32.xlu0 %v1926, 64
    %v2039 = vpop.permute.xlu0 %2038
    %2040 = vrot.lane.b32.xlu0 %v1928, 64
    %v2041 = vpop.permute.xlu0 %2040
    %2042 = vrot.lane.b32.xlu0 %v1930, 64
    %v2043 = vpop.permute.xlu0 %2042
    %2044 = vrot.lane.b32.xlu0 %v1932, 64
    %v2045 = vpop.permute.xlu0 %2044
    %v2046 = vrot.slane %v2031, 2
    %v2047 = vrot.slane %v2033, 2
    %v2048 = vrot.slane %v2035, 2
    %v2049 = vrot.slane %v2037, 2
    %v2050 = vrot.slane %v2039, 2
    %v2051 = vrot.slane %v2041, 2
    %v2052 = vrot.slane %v2043, 2
    %v2053 = vrot.slane %v2045, 2
    %v2062 = vtanh.pop %v2046
    %v2063 = vtanh.pop %v2047
    %v2064 = vtanh.pop %v2048
    %v2065 = vtanh.pop %v2049
    %v2066 = vtanh.pop %v2050
    %v2067 = vtanh.pop %v2051
    %v2068 = vtanh.pop %v2052
    %v2069 = vtanh.pop %v2053
    loop: start=0, step=1, limit=8
    $region63: #{bert_wrapper_rnn_forward.1} parent=1 // loop_pre_header
      _
    $region64: #{bert_wrapper_rnn_forward.1} parent=1 // loop_header
      %s2071 = sphi 0, %s2075
      %p2072 = scmp.ge.s32.totalorder %s2071, 8
      %v2076 = vphi 0.0, %v2191
      %v2077 = vphi 0.0, %v2234
    $region65: #{bert_wrapper_rnn_forward.1} parent=1 // loop_header_branch
      %2074 = sbr.rel (%p2072) target = $region69
    $region66: #{bert_wrapper_rnn_forward.1} parent=1 // loop_body
      %s2078 = ssub.s32 7, %s2071
      %s2079 = smul.u32 %s2071, 2
      %s2080 = scalar_lea.vmem [#allocation2], %s2079
      %v2081 = vld [vmem:[%s2080] sm:$0x3]
      %s2082 = smul.u32 %s2078, 2
      %s2083 = scalar_lea.vmem [#allocation3], %s2082
      %v2084 = vld [vmem:[%s2083] sm:$0x3]
      %v2085 = vpack.c.bf16 %v2076, %v2076
      %2087 = vrot.lane.b32.xlu0 %v2085, 96
      %v2088 = vpop.permute.xlu0 %2087
      %v2093 = vunpack.c.l.b16 %v41
      %v2094 = vunpack.c.l.b16 %v42
      %v2095 = vunpack.c.l.b16 %v43
      %v2096 = vunpack.c.l.b16 %v44
      %v2097 = vpack.c.b16 %v2094, %v2093
      %v2098 = vpack.c.b16 %v2096, %v2095
      %v2102 = vsel %vm152, %v2088, 0
      %2104 = vmatpush.bf16.msra.mxu0 0
      %2105 = vmatpush.bf16.msra.mxu0 0
      %2106 = vmatpush.bf16.msra.mxu0 0
      %2107 = vmatpush.bf16.msra.mxu0 0
      %2108 = vmatpush.bf16.msra.mxu0 0
      %2109 = vmatpush.bf16.msra.mxu0 0
      %2110 = vmatpush.bf16.msra.mxu0 %v2098
      %2111 = vmatpush.bf16.msra.mxu0 %v2097
      %2112 = vmatmul.bf16.gmra.mxu0 %v2102
      %v2113 = vpop.f32.mrf.mxu0
      %v2114 = vadd.f32 0.0, %v2113
      %v2115 = vpop.f32.mrf.mxu0
      %2116 = vdwg.mxu0
      %v2117 = vpack.c.bf16 %v2077, %v2077
      %2119 = vrot.lane.b32.xlu0 %v2117, 96
      %v2120 = vpop.permute.xlu0 %2119
      %v2125 = vunpack.c.l.b16 %v45
      %v2126 = vunpack.c.l.b16 %v46
      %v2127 = vunpack.c.l.b16 %v47
      %v2128 = vunpack.c.l.b16 %v48
      %v2129 = vpack.c.b16 %v2126, %v2125
      %v2130 = vpack.c.b16 %v2128, %v2127
      %v2134 = vsel %vm152, %v2120, 0
      %2136 = vmatpush.bf16.msra.mxu0 0
      %2137 = vmatpush.bf16.msra.mxu0 0
      %2138 = vmatpush.bf16.msra.mxu0 0
      %2139 = vmatpush.bf16.msra.mxu0 0
      %2140 = vmatpush.bf16.msra.mxu0 0
      %2141 = vmatpush.bf16.msra.mxu0 0
      %2142 = vmatpush.bf16.msra.mxu0 %v2130
      %2143 = vmatpush.bf16.msra.mxu0 %v2129
      %2144 = vmatmul.bf16.gmra.mxu0 %v2134
      %v2145 = vpop.f32.mrf.mxu0
      %v2146 = vadd.f32 0.0, %v2145
      %v2147 = vpop.f32.mrf.mxu0
      %2148 = vdwg.mxu0
      %v2149 = vadd.f32 %v2081, %v2114
      %v2150 = vxor.u32 %v2149, 2147483648
      %v2151 = vmul.f32 %v2150, 1.442695
      %v2152 = vpow.pop %v2151
      %v2153 = vadd.f32 %v2152, 1.0
      %v2154 = vrcp.pop %v2153
      %v2155 = vmul.f32 %v2153, %v2154
      %v2156 = vsub.f32 1.0, %v2155
      %v2157 = vmul.f32 %v2154, %v2156
      %v2158 = vadd.f32 %v2154, %v2157
      %vm2159 = vweird.f32 %v2153
      %vm2160 = vweird.f32 %v2154
      %vm2161 = vmor %vm2159, %vm2160
      %v2162 = vsel %vm2161, %v2154, %v2158
      %v2163 = vand.u32 2147483647, %v2153
      %vm2164 = vcmp.eq.f32.partialorder %v2163, 8.507059e+37
      %v2165 = vand.u32 %v2153, 2147483648
      %v2166 = vor.u32 1.1754944e-38, %v2165
      %v2167 = vsel %vm2164, %v2166, %v2162
      %v2168 = vmul.f32 1.0, %v2167
      %2169 = vrot.lane.b32.xlu0 %v52, 64
      %v2170 = vpop.permute.xlu0 %2169
      %v2172 = vadd.f32 %v2114, %v2170
      %2174 = vrot.lane.b32.xlu0 %v2172, 64
      %v2175 = vpop.permute.xlu0 %2174
      %v2177 = vmul.f32 %v2168, %v2175
      %2179 = vrot.lane.b32.xlu0 %v2177, 64
      %v2180 = vpop.permute.xlu0 %2179
      %v2182 = vadd.f32 %v2081, %v2180
      %v2183 = vtanh.pop %v2182
      %v2184 = vsub.f32 1.0, %v2168
      %2186 = vrot.lane.b32.xlu0 %v2183, 96
      %v2187 = vpop.permute.xlu0 %2186
      %v2189 = vmul.f32 %v2184, %v2187
      %v2190 = vmul.f32 %v2168, %v2076
      %v2191 = vadd.f32 %v2189, %v2190
      %v2192 = vadd.f32 %v2084, %v2146
      %v2193 = vxor.u32 %v2192, 2147483648
      %v2194 = vmul.f32 %v2193, 1.442695
      %v2195 = vpow.pop %v2194
      %v2196 = vadd.f32 %v2195, 1.0
      %v2197 = vrcp.pop %v2196
      %v2198 = vmul.f32 %v2196, %v2197
      %v2199 = vsub.f32 1.0, %v2198
      %v2200 = vmul.f32 %v2197, %v2199
      %v2201 = vadd.f32 %v2197, %v2200
      %vm2202 = vweird.f32 %v2196
      %vm2203 = vweird.f32 %v2197
      %vm2204 = vmor %vm2202, %vm2203
      %v2205 = vsel %vm2204, %v2197, %v2201
      %v2206 = vand.u32 2147483647, %v2196
      %vm2207 = vcmp.eq.f32.partialorder %v2206, 8.507059e+37
      %v2208 = vand.u32 %v2196, 2147483648
      %v2209 = vor.u32 1.1754944e-38, %v2208
      %v2210 = vsel %vm2207, %v2209, %v2205
      %v2211 = vmul.f32 1.0, %v2210
      %2212 = vrot.lane.b32.xlu0 %v55, 64
      %v2213 = vpop.permute.xlu0 %2212
      %v2215 = vadd.f32 %v2146, %v2213
      %2217 = vrot.lane.b32.xlu0 %v2215, 64
      %v2218 = vpop.permute.xlu0 %2217
      %v2220 = vmul.f32 %v2211, %v2218
      %2222 = vrot.lane.b32.xlu0 %v2220, 64
      %v2223 = vpop.permute.xlu0 %2222
      %v2225 = vadd.f32 %v2084, %v2223
      %v2226 = vtanh.pop %v2225
      %v2227 = vsub.f32 1.0, %v2211
      %2229 = vrot.lane.b32.xlu0 %v2226, 96
      %v2230 = vpop.permute.xlu0 %2229
      %v2232 = vmul.f32 %v2227, %v2230
      %v2233 = vmul.f32 %v2211, %v2077
      %v2234 = vadd.f32 %v2232, %v2233
      %2236 = vrot.lane.b32.xlu0 %v2191, 96
      %v2237 = vpop.permute.xlu0 %2236
      %s2239 = scalar_lea.vmem [#allocation4], %s2079
      %2240 = vst.msk [vmem:[%s2239] sm:$0x3] %vm588, %v2237
      %2242 = vrot.lane.b32.xlu0 %v2234, 96
      %v2243 = vpop.permute.xlu0 %2242
      %s2245 = scalar_lea.vmem [#allocation5], %s2082
      %2246 = vst.msk [vmem:[%s2245] sm:$0x3] %vm588, %v2243
    $region67: #{bert_wrapper_rnn_forward.1} parent=1 // loop_footer
      %s2075 = sadd.s32 1, %s2071
    $region68: #{bert_wrapper_rnn_forward.1} parent=1 // loop_footer_branch
      %2070 = sbr.rel target = $region64
    $region69: #{bert_wrapper_rnn_forward.1} parent=1 // loop_exit
      _
    %v2247 = vld [vmem:[#allocation4] sm:$0x3]
    %v2248 = vld [vmem:[#allocation4 + $0x2] sm:$0x3]
    %v2249 = vld [vmem:[#allocation4 + $0x4] sm:$0x3]
    %v2250 = vld [vmem:[#allocation4 + $0x6] sm:$0x3]
    %v2251 = vld [vmem:[#allocation4 + $0x8] sm:$0x3]
    %v2252 = vld [vmem:[#allocation4 + $0xa] sm:$0x3]
    %v2253 = vld [vmem:[#allocation4 + $0xc] sm:$0x3]
    %v2254 = vld [vmem:[#allocation4 + $0xe] sm:$0x3]
    %v2255 = vld [vmem:[#allocation5] sm:$0x3]
    %v2256 = vld [vmem:[#allocation5 + $0x2] sm:$0x3]
    %v2257 = vld [vmem:[#allocation5 + $0x4] sm:$0x3]
    %v2258 = vld [vmem:[#allocation5 + $0x6] sm:$0x3]
    %v2259 = vld [vmem:[#allocation5 + $0x8] sm:$0x3]
    %v2260 = vld [vmem:[#allocation5 + $0xa] sm:$0x3]
    %v2261 = vld [vmem:[#allocation5 + $0xc] sm:$0x3]
    %v2262 = vld [vmem:[#allocation5 + $0xe] sm:$0x3]
    %v2263 = vadd.f32 %v2247, %v2255
    %v2264 = vadd.f32 %v2248, %v2256
    %v2265 = vadd.f32 %v2249, %v2257
    %v2266 = vadd.f32 %v2250, %v2258
    %v2267 = vadd.f32 %v2251, %v2259
    %v2268 = vadd.f32 %v2252, %v2260
    %v2269 = vadd.f32 %v2253, %v2261
    %v2270 = vadd.f32 %v2254, %v2262
    %v2271 = vtanh.pop %v2263
    %v2272 = vtanh.pop %v2264
    %v2273 = vtanh.pop %v2265
    %v2274 = vtanh.pop %v2266
    %v2275 = vtanh.pop %v2267
    %v2276 = vtanh.pop %v2268
    %v2277 = vtanh.pop %v2269
    %v2278 = vtanh.pop %v2270
    %v2279 = vadd.f32 %v1838, %v2062
    %v2280 = vadd.f32 %v1839, %v2063
    %v2281 = vadd.f32 %v1840, %v2064
    %v2282 = vadd.f32 %v1841, %v2065
    %v2283 = vadd.f32 %v1842, %v2066
    %v2284 = vadd.f32 %v1843, %v2067
    %v2285 = vadd.f32 %v1844, %v2068
    %v2286 = vadd.f32 %v1845, %v2069
    %v2287 = vadd.f32 %v2279, %v2271
    %v2288 = vadd.f32 %v2280, %v2272
    %v2289 = vadd.f32 %v2281, %v2273
    %v2290 = vadd.f32 %v2282, %v2274
    %v2291 = vadd.f32 %v2283, %v2275
    %v2292 = vadd.f32 %v2284, %v2276
    %v2293 = vadd.f32 %v2285, %v2277
    %v2294 = vadd.f32 %v2286, %v2278
    %v2295 = vtanh.pop %v1829
    %v2296 = vtanh.pop %v1830
    %v2297 = vtanh.pop %v1831
    %v2298 = vtanh.pop %v1832
    %v2299 = vtanh.pop %v1833
    %v2300 = vtanh.pop %v1834
    %v2301 = vtanh.pop %v1835
    %v2302 = vtanh.pop %v1836
    %v2303 = vadd.f32 %v2287, %v2295
    %v2304 = vadd.f32 %v2288, %v2296
    %v2305 = vadd.f32 %v2289, %v2297
    %v2306 = vadd.f32 %v2290, %v2298
    %v2307 = vadd.f32 %v2291, %v2299
    %v2308 = vadd.f32 %v2292, %v2300
    %v2309 = vadd.f32 %v2293, %v2301
    %v2310 = vadd.f32 %v2294, %v2302
    %v2311 = vsel %vm588, %v2303, 0.0
    %v2312 = vsel %vm588, %v2304, 0.0
    %v2313 = vadd.f32 %v2311, %v2312
    %v2314 = vsel %vm588, %v2305, 0.0
    %v2315 = vadd.f32 %v2313, %v2314
    %v2316 = vsel %vm588, %v2306, 0.0
    %v2317 = vadd.f32 %v2315, %v2316
    %v2318 = vsel %vm588, %v2307, 0.0
    %v2319 = vadd.f32 %v2317, %v2318
    %v2320 = vsel %vm588, %v2308, 0.0
    %v2321 = vadd.f32 %v2319, %v2320
    %v2322 = vsel %vm588, %v2309, 0.0
    %v2323 = vadd.f32 %v2321, %v2322
    %v2324 = vsel %vm588, %v2310, 0.0
    %v2325 = vadd.f32 %v2323, %v2324
    %2326 = vadd.xlane.f32.xlu0 %v2325
    %v2327 = vpop.xlane.xlu0 %2326
    %v2328 = vmul.f32 %v2327, %v612
    %v2329 = vsub.f32 %v2303, %v2328
    %v2330 = vsub.f32 %v2304, %v2328
    %v2331 = vsub.f32 %v2305, %v2328
    %v2332 = vsub.f32 %v2306, %v2328
    %v2333 = vsub.f32 %v2307, %v2328
    %v2334 = vsub.f32 %v2308, %v2328
    %v2335 = vsub.f32 %v2309, %v2328
    %v2336 = vsub.f32 %v2310, %v2328
    %v2337 = vmul.f32 %v2329, %v2329
    %v2338 = vmul.f32 %v2330, %v2330
    %v2339 = vmul.f32 %v2331, %v2331
    %v2340 = vmul.f32 %v2332, %v2332
    %v2341 = vmul.f32 %v2333, %v2333
    %v2342 = vmul.f32 %v2334, %v2334
    %v2343 = vmul.f32 %v2335, %v2335
    %v2344 = vmul.f32 %v2336, %v2336
    %v2345 = vsel %vm588, %v2337, 0.0
    %v2346 = vsel %vm588, %v2338, 0.0
    %v2347 = vadd.f32 %v2345, %v2346
    %v2348 = vsel %vm588, %v2339, 0.0
    %v2349 = vadd.f32 %v2347, %v2348
    %v2350 = vsel %vm588, %v2340, 0.0
    %v2351 = vadd.f32 %v2349, %v2350
    %v2352 = vsel %vm588, %v2341, 0.0
    %v2353 = vadd.f32 %v2351, %v2352
    %v2354 = vsel %vm588, %v2342, 0.0
    %v2355 = vadd.f32 %v2353, %v2354
    %v2356 = vsel %vm588, %v2343, 0.0
    %v2357 = vadd.f32 %v2355, %v2356
    %v2358 = vsel %vm588, %v2344, 0.0
    %v2359 = vadd.f32 %v2357, %v2358
    %2360 = vadd.xlane.f32.xlu0 %v2359
    %v2361 = vpop.xlane.xlu0 %2360
    %v2362 = vmul.f32 %v2361, %v612
    %v2363 = vadd.f32 %v2362, 1e-12
    %v2364 = vrsqrt.pop %v2363
    %v2365 = vmul.f32 %v2364, %v2363
    %v2366 = vmul.f32 %v2365, %v2364
    %v2367 = vmul.f32 0.5, %v2366
    %v2368 = vsub.f32 1.5, %v2367
    %v2369 = vmul.f32 %v2364, %v2368
    %vm2370 = vweird.f32 %v2363
    %vm2371 = vweird.f32 %v2364
    %vm2372 = vmor %vm2370, %vm2371
    %v2373 = vsel %vm2372, %v2364, %v2369
    %v2374 = vmul.f32 %v2329, %v2373
    %v2375 = vmul.f32 %v2330, %v2373
    %v2376 = vmul.f32 %v2331, %v2373
    %v2377 = vmul.f32 %v2332, %v2373
    %v2378 = vmul.f32 %v2333, %v2373
    %v2379 = vmul.f32 %v2334, %v2373
    %v2380 = vmul.f32 %v2335, %v2373
    %v2381 = vmul.f32 %v2336, %v2373
    %v2382 = vmul.f32 %v2374, %v667
    %v2383 = vmul.f32 %v2375, %v668
    %v2384 = vmul.f32 %v2376, %v669
    %v2385 = vmul.f32 %v2377, %v670
    %v2386 = vmul.f32 %v2378, %v671
    %v2387 = vmul.f32 %v2379, %v672
    %v2388 = vmul.f32 %v2380, %v673
    %v2389 = vmul.f32 %v2381, %v674
    %v2390 = vadd.f32 %v2382, %v691
    %v2391 = vadd.f32 %v2383, %v692
    %v2392 = vadd.f32 %v2384, %v693
    %v2393 = vadd.f32 %v2385, %v694
    %v2394 = vadd.f32 %v2386, %v695
    %v2395 = vadd.f32 %v2387, %v696
    %v2396 = vadd.f32 %v2388, %v697
    %v2397 = vadd.f32 %v2389, %v698
    %s2398 = scalar_lea.vmem %s0, 80
    %v2399 = vld [vmem:[%s2398] sm:$0x3]
    %v2400 = vld [vmem:[%s2398 + $0x2] sm:$0x3]
    %v2401 = vld [vmem:[%s2398 + $0x4] sm:$0x3]
    %v2402 = vld [vmem:[%s2398 + $0x6] sm:$0x3]
    %v2403 = vld [vmem:[%s2398 + $0x8] sm:$0x3]
    %v2404 = vld [vmem:[%s2398 + $0xa] sm:$0x3]
    %v2405 = vld [vmem:[%s2398 + $0xc] sm:$0x3]
    %v2406 = vld [vmem:[%s2398 + $0xe] sm:$0x3]
    %v2407 = vadd.f32 %v2399, %v2390
    %v2408 = vadd.f32 %v2400, %v2391
    %v2409 = vadd.f32 %v2401, %v2392
    %v2410 = vadd.f32 %v2402, %v2393
    %v2411 = vadd.f32 %v2403, %v2394
    %v2412 = vadd.f32 %v2404, %v2395
    %v2413 = vadd.f32 %v2405, %v2396
    %v2414 = vadd.f32 %v2406, %v2397
    %2423 = vst [vmem:[#allocation1] ss:$4 sm:$0xff] %v2407
    %s2424 = scalar_lea.vmem [#allocation1], 1
    %2425 = vst [vmem:[%s2424] ss:$4 sm:$0xff] %v2408
    %s2426 = scalar_lea.vmem [#allocation1], 2
    %2427 = vst [vmem:[%s2426] ss:$4 sm:$0xff] %v2409
    %s2428 = scalar_lea.vmem [#allocation1], 3
    %2429 = vst [vmem:[%s2428] ss:$4 sm:$0xff] %v2410
    %s2430 = scalar_lea.vmem [#allocation1], 32
    %2431 = vst [vmem:[%s2430] ss:$4 sm:$0xff] %v2411
    %s2432 = scalar_lea.vmem [#allocation1], 33
    %2433 = vst [vmem:[%s2432] ss:$4 sm:$0xff] %v2412
    %s2434 = scalar_lea.vmem [#allocation1], 34
    %2435 = vst [vmem:[%s2434] ss:$4 sm:$0xff] %v2413
    %s2436 = scalar_lea.vmem [#allocation1], 35
    %2437 = vst [vmem:[%s2436] ss:$4 sm:$0xff] %v2414
    %v2438 = vld.sshfl [vmem:[#allocation1] sm:$0xff pattern:$0x73625140]
    %v2439 = vld.sshfl [vmem:[#allocation1 + $0x20] sm:$0xff pattern:$0x73625140]
    %v2442 = vpack.c.bf16 %v2439, %v2438
    %v2444 = vsel %vm152, %v2442, 0
    %2446 = vmatpush.bf16.msra.mxu0 0
    %2447 = vmatpush.bf16.msra.mxu0 0
    %2448 = vmatpush.bf16.msra.mxu0 0
    %2449 = vmatpush.bf16.msra.mxu0 0
    %2450 = vmatpush.bf16.msra.mxu0 0
    %2451 = vmatpush.bf16.msra.mxu0 0
    %2452 = vmatpush.bf16.msra.mxu0 %v146
    %2453 = vmatpush.bf16.msra.mxu0 %v144
    %2454 = vmatmul.bf16.gmra.mxu0 %v2444
    %v2455 = vpop.f32.mrf.mxu0
    %v2456 = vadd.f32 %v128, %v2455
    %v2457 = vpop.f32.mrf.mxu0
    %v2458 = vadd.f32 %v128, %v2457
    %2459 = vdwg.mxu0
    %2460 = vmatpush.bf16.msra.mxu0 0
    %2461 = vmatpush.bf16.msra.mxu0 0
    %2462 = vmatpush.bf16.msra.mxu0 0
    %2463 = vmatpush.bf16.msra.mxu0 0
    %2464 = vmatpush.bf16.msra.mxu0 0
    %2465 = vmatpush.bf16.msra.mxu0 0
    %2466 = vmatpush.bf16.msra.mxu0 %v147
    %2467 = vmatpush.bf16.msra.mxu0 %v145
    %2468 = vmatmul.bf16.gmra.mxu0 %v2444
    %v2469 = vpop.f32.mrf.mxu0
    %v2470 = vadd.f32 %v129, %v2469
    %v2471 = vpop.f32.mrf.mxu0
    %v2472 = vadd.f32 %v129, %v2471
    %2473 = vdwg.mxu0
    %v2478 = vrot.slane %v2470, 6
    %v2479 = vrot.slane %v2472, 6
    %v2480 = vsel %vm190, %v2456, %v2478
    %v2481 = vsel %vm192, %v2456, %v2478
    %v2482 = vrot.slane %v2481, 2
    %v2483 = vsel %vm195, %v2456, %v2478
    %v2484 = vrot.slane %v2483, 4
    %v2485 = vsel %vm198, %v2478, %v2456
    %v2486 = vrot.slane %v2485, 6
    %v2487 = vsel %vm190, %v2458, %v2479
    %v2488 = vsel %vm192, %v2458, %v2479
    %v2489 = vrot.slane %v2488, 2
    %v2490 = vsel %vm195, %v2458, %v2479
    %v2491 = vrot.slane %v2490, 4
    %v2492 = vsel %vm198, %v2479, %v2458
    %v2493 = vrot.slane %v2492, 6
    %2502 = vst.msk [vmem:[#allocation2] sm:$0x3] %vm216, %v2480
    %2503 = vst.msk [vmem:[#allocation2 + $0x2] sm:$0x3] %vm216, %v2482
    %2504 = vst.msk [vmem:[#allocation2 + $0x4] sm:$0x3] %vm216, %v2484
    %2505 = vst.msk [vmem:[#allocation2 + $0x6] sm:$0x3] %vm216, %v2486
    %2506 = vst.msk [vmem:[#allocation2 + $0x8] sm:$0x3] %vm216, %v2487
    %2507 = vst.msk [vmem:[#allocation2 + $0xa] sm:$0x3] %vm216, %v2489
    %2508 = vst.msk [vmem:[#allocation2 + $0xc] sm:$0x3] %vm216, %v2491
    %2509 = vst.msk [vmem:[#allocation2 + $0xe] sm:$0x3] %vm216, %v2493
    %2510 = vst [vmem:[#allocation1] ss:$4 sm:$0xff] %v2480
    %v2511 = vld.sshfl [vmem:[#allocation1] sm:$0xff pattern:$0x73625140]
    %v2512 = vld.sshfl [vmem:[#allocation1 + $0x8] sm:$0xff pattern:$0x73625140]
    %s2513 = scalar_lea.vmem [#allocation1], 32
    %2514 = vst [vmem:[%s2513] ss:$4 sm:$0xff] %v2482
    %v2515 = vld.sshfl [vmem:[#allocation1 + $0x20] sm:$0xff pattern:$0x73625140]
    %v2516 = vld.sshfl [vmem:[#allocation1 + $0x28] sm:$0xff pattern:$0x73625140]
    %2517 = vst [vmem:[#allocation1] ss:$4 sm:$0xff] %v2484
    %v2518 = vld.sshfl [vmem:[#allocation1] sm:$0xff pattern:$0x73625140]
    %v2519 = vld.sshfl [vmem:[#allocation1 + $0x8] sm:$0xff pattern:$0x73625140]
    %2520 = vst [vmem:[%s2513] ss:$4 sm:$0xff] %v2486
    %v2521 = vld.sshfl [vmem:[#allocation1 + $0x20] sm:$0xff pattern:$0x73625140]
    %v2522 = vld.sshfl [vmem:[#allocation1 + $0x28] sm:$0xff pattern:$0x73625140]
    %2523 = vst [vmem:[#allocation1] ss:$4 sm:$0xff] %v2487
    %v2524 = vld.sshfl [vmem:[#allocation1] sm:$0xff pattern:$0x73625140]
    %v2525 = vld.sshfl [vmem:[#allocation1 + $0x8] sm:$0xff pattern:$0x73625140]
    %2526 = vst [vmem:[%s2513] ss:$4 sm:$0xff] %v2489
    %v2527 = vld.sshfl [vmem:[#allocation1 + $0x20] sm:$0xff pattern:$0x73625140]
    %v2528 = vld.sshfl [vmem:[#allocation1 + $0x28] sm:$0xff pattern:$0x73625140]
    %2529 = vst [vmem:[#allocation1] ss:$4 sm:$0xff] %v2491
    %v2530 = vld.sshfl [vmem:[#allocation1] sm:$0xff pattern:$0x73625140]
    %v2531 = vld.sshfl [vmem:[#allocation1 + $0x8] sm:$0xff pattern:$0x73625140]
    %2532 = vst [vmem:[%s2513] ss:$4 sm:$0xff] %v2493
    %v2533 = vld.sshfl [vmem:[#allocation1 + $0x20] sm:$0xff pattern:$0x73625140]
    %v2534 = vld.sshfl [vmem:[#allocation1 + $0x28] sm:$0xff pattern:$0x73625140]
    %2535 = vrot.lane.b32.xlu0 %v2511, 32
    %v2536 = vpop.permute.xlu0 %2535
    %2537 = vrot.lane.b32.xlu0 %v2512, 32
    %v2538 = vpop.permute.xlu0 %2537
    %2539 = vrot.lane.b32.xlu0 %v2515, 32
    %v2540 = vpop.permute.xlu0 %2539
    %2541 = vrot.lane.b32.xlu0 %v2516, 32
    %v2542 = vpop.permute.xlu0 %2541
    %2543 = vrot.lane.b32.xlu0 %v2518, 32
    %v2544 = vpop.permute.xlu0 %2543
    %2545 = vrot.lane.b32.xlu0 %v2519, 32
    %v2546 = vpop.permute.xlu0 %2545
    %2547 = vrot.lane.b32.xlu0 %v2521, 32
    %v2548 = vpop.permute.xlu0 %2547
    %2549 = vrot.lane.b32.xlu0 %v2522, 32
    %v2550 = vpop.permute.xlu0 %2549
    %2551 = vrot.lane.b32.xlu0 %v2524, 32
    %v2552 = vpop.permute.xlu0 %2551
    %2553 = vrot.lane.b32.xlu0 %v2525, 32
    %v2554 = vpop.permute.xlu0 %2553
    %2555 = vrot.lane.b32.xlu0 %v2527, 32
    %v2556 = vpop.permute.xlu0 %2555
    %2557 = vrot.lane.b32.xlu0 %v2528, 32
    %v2558 = vpop.permute.xlu0 %2557
    %2559 = vrot.lane.b32.xlu0 %v2530, 32
    %v2560 = vpop.permute.xlu0 %2559
    %2561 = vrot.lane.b32.xlu0 %v2531, 32
    %v2562 = vpop.permute.xlu0 %2561
    %2563 = vrot.lane.b32.xlu0 %v2533, 32
    %v2564 = vpop.permute.xlu0 %2563
    %2565 = vrot.lane.b32.xlu0 %v2534, 32
    %v2566 = vpop.permute.xlu0 %2565
    %v2567 = vsel %vm152, %v2536, %v2538
    %v2568 = vsel %vm152, %v2540, %v2542
    %v2569 = vsel %vm152, %v2544, %v2546
    %v2570 = vsel %vm152, %v2548, %v2550
    %v2571 = vsel %vm152, %v2552, %v2554
    %v2572 = vsel %vm152, %v2556, %v2558
    %v2573 = vsel %vm152, %v2560, %v2562
    %v2574 = vsel %vm152, %v2564, %v2566
    %2583 = vst.msk [vmem:[#allocation3] sm:$0x3] %vm216, %v2567
    %2584 = vst.msk [vmem:[#allocation3 + $0x2] sm:$0x3] %vm216, %v2568
    %2585 = vst.msk [vmem:[#allocation3 + $0x4] sm:$0x3] %vm216, %v2569
    %2586 = vst.msk [vmem:[#allocation3 + $0x6] sm:$0x3] %vm216, %v2570
    %2587 = vst.msk [vmem:[#allocation3 + $0x8] sm:$0x3] %vm216, %v2571
    %2588 = vst.msk [vmem:[#allocation3 + $0xa] sm:$0x3] %vm216, %v2572
    %2589 = vst.msk [vmem:[#allocation3 + $0xc] sm:$0x3] %vm216, %v2573
    %2590 = vst.msk [vmem:[#allocation3 + $0xe] sm:$0x3] %vm216, %v2574
    %2591 = vrot.lane.b32.xlu0 %v2480, 64
    %v2592 = vpop.permute.xlu0 %2591
    %2593 = vrot.lane.b32.xlu0 %v2482, 64
    %v2594 = vpop.permute.xlu0 %2593
    %2595 = vrot.lane.b32.xlu0 %v2484, 64
    %v2596 = vpop.permute.xlu0 %2595
    %2597 = vrot.lane.b32.xlu0 %v2486, 64
    %v2598 = vpop.permute.xlu0 %2597
    %2599 = vrot.lane.b32.xlu0 %v2487, 64
    %v2600 = vpop.permute.xlu0 %2599
    %2601 = vrot.lane.b32.xlu0 %v2489, 64
    %v2602 = vpop.permute.xlu0 %2601
    %2603 = vrot.lane.b32.xlu0 %v2491, 64
    %v2604 = vpop.permute.xlu0 %2603
    %2605 = vrot.lane.b32.xlu0 %v2493, 64
    %v2606 = vpop.permute.xlu0 %2605
    %v2607 = vrot.slane %v2592, 2
    %v2608 = vrot.slane %v2594, 2
    %v2609 = vrot.slane %v2596, 2
    %v2610 = vrot.slane %v2598, 2
    %v2611 = vrot.slane %v2600, 2
    %v2612 = vrot.slane %v2602, 2
    %v2613 = vrot.slane %v2604, 2
    %v2614 = vrot.slane %v2606, 2
    %v2623 = vtanh.pop %v2607
    %v2624 = vtanh.pop %v2608
    %v2625 = vtanh.pop %v2609
    %v2626 = vtanh.pop %v2610
    %v2627 = vtanh.pop %v2611
    %v2628 = vtanh.pop %v2612
    %v2629 = vtanh.pop %v2613
    %v2630 = vtanh.pop %v2614
    loop: start=0, step=1, limit=8
    $region70: #{bert_wrapper_rnn_forward.1} parent=1 // loop_pre_header
      _
    $region71: #{bert_wrapper_rnn_forward.1} parent=1 // loop_header
      %s2632 = sphi 0, %s2636
      %p2633 = scmp.ge.s32.totalorder %s2632, 8
      %v2637 = vphi 0.0, %v2752
      %v2638 = vphi 0.0, %v2795
    $region72: #{bert_wrapper_rnn_forward.1} parent=1 // loop_header_branch
      %2635 = sbr.rel (%p2633) target = $region76
    $region73: #{bert_wrapper_rnn_forward.1} parent=1 // loop_body
      %s2639 = ssub.s32 7, %s2632
      %s2640 = smul.u32 %s2632, 2
      %s2641 = scalar_lea.vmem [#allocation2], %s2640
      %v2642 = vld [vmem:[%s2641] sm:$0x3]
      %s2643 = smul.u32 %s2639, 2
      %s2644 = scalar_lea.vmem [#allocation3], %s2643
      %v2645 = vld [vmem:[%s2644] sm:$0x3]
      %v2646 = vpack.c.bf16 %v2637, %v2637
      %2648 = vrot.lane.b32.xlu0 %v2646, 96
      %v2649 = vpop.permute.xlu0 %2648
      %v2654 = vunpack.c.l.b16 %v41
      %v2655 = vunpack.c.l.b16 %v42
      %v2656 = vunpack.c.l.b16 %v43
      %v2657 = vunpack.c.l.b16 %v44
      %v2658 = vpack.c.b16 %v2655, %v2654
      %v2659 = vpack.c.b16 %v2657, %v2656
      %v2663 = vsel %vm152, %v2649, 0
      %2665 = vmatpush.bf16.msra.mxu0 0
      %2666 = vmatpush.bf16.msra.mxu0 0
      %2667 = vmatpush.bf16.msra.mxu0 0
      %2668 = vmatpush.bf16.msra.mxu0 0
      %2669 = vmatpush.bf16.msra.mxu0 0
      %2670 = vmatpush.bf16.msra.mxu0 0
      %2671 = vmatpush.bf16.msra.mxu0 %v2659
      %2672 = vmatpush.bf16.msra.mxu0 %v2658
      %2673 = vmatmul.bf16.gmra.mxu0 %v2663
      %v2674 = vpop.f32.mrf.mxu0
      %v2675 = vadd.f32 0.0, %v2674
      %v2676 = vpop.f32.mrf.mxu0
      %2677 = vdwg.mxu0
      %v2678 = vpack.c.bf16 %v2638, %v2638
      %2680 = vrot.lane.b32.xlu0 %v2678, 96
      %v2681 = vpop.permute.xlu0 %2680
      %v2686 = vunpack.c.l.b16 %v45
      %v2687 = vunpack.c.l.b16 %v46
      %v2688 = vunpack.c.l.b16 %v47
      %v2689 = vunpack.c.l.b16 %v48
      %v2690 = vpack.c.b16 %v2687, %v2686
      %v2691 = vpack.c.b16 %v2689, %v2688
      %v2695 = vsel %vm152, %v2681, 0
      %2697 = vmatpush.bf16.msra.mxu0 0
      %2698 = vmatpush.bf16.msra.mxu0 0
      %2699 = vmatpush.bf16.msra.mxu0 0
      %2700 = vmatpush.bf16.msra.mxu0 0
      %2701 = vmatpush.bf16.msra.mxu0 0
      %2702 = vmatpush.bf16.msra.mxu0 0
      %2703 = vmatpush.bf16.msra.mxu0 %v2691
      %2704 = vmatpush.bf16.msra.mxu0 %v2690
      %2705 = vmatmul.bf16.gmra.mxu0 %v2695
      %v2706 = vpop.f32.mrf.mxu0
      %v2707 = vadd.f32 0.0, %v2706
      %v2708 = vpop.f32.mrf.mxu0
      %2709 = vdwg.mxu0
      %v2710 = vadd.f32 %v2642, %v2675
      %v2711 = vxor.u32 %v2710, 2147483648
      %v2712 = vmul.f32 %v2711, 1.442695
      %v2713 = vpow.pop %v2712
      %v2714 = vadd.f32 %v2713, 1.0
      %v2715 = vrcp.pop %v2714
      %v2716 = vmul.f32 %v2714, %v2715
      %v2717 = vsub.f32 1.0, %v2716
      %v2718 = vmul.f32 %v2715, %v2717
      %v2719 = vadd.f32 %v2715, %v2718
      %vm2720 = vweird.f32 %v2714
      %vm2721 = vweird.f32 %v2715
      %vm2722 = vmor %vm2720, %vm2721
      %v2723 = vsel %vm2722, %v2715, %v2719
      %v2724 = vand.u32 2147483647, %v2714
      %vm2725 = vcmp.eq.f32.partialorder %v2724, 8.507059e+37
      %v2726 = vand.u32 %v2714, 2147483648
      %v2727 = vor.u32 1.1754944e-38, %v2726
      %v2728 = vsel %vm2725, %v2727, %v2723
      %v2729 = vmul.f32 1.0, %v2728
      %2730 = vrot.lane.b32.xlu0 %v52, 64
      %v2731 = vpop.permute.xlu0 %2730
      %v2733 = vadd.f32 %v2675, %v2731
      %2735 = vrot.lane.b32.xlu0 %v2733, 64
      %v2736 = vpop.permute.xlu0 %2735
      %v2738 = vmul.f32 %v2729, %v2736
      %2740 = vrot.lane.b32.xlu0 %v2738, 64
      %v2741 = vpop.permute.xlu0 %2740
      %v2743 = vadd.f32 %v2642, %v2741
      %v2744 = vtanh.pop %v2743
      %v2745 = vsub.f32 1.0, %v2729
      %2747 = vrot.lane.b32.xlu0 %v2744, 96
      %v2748 = vpop.permute.xlu0 %2747
      %v2750 = vmul.f32 %v2745, %v2748
      %v2751 = vmul.f32 %v2729, %v2637
      %v2752 = vadd.f32 %v2750, %v2751
      %v2753 = vadd.f32 %v2645, %v2707
      %v2754 = vxor.u32 %v2753, 2147483648
      %v2755 = vmul.f32 %v2754, 1.442695
      %v2756 = vpow.pop %v2755
      %v2757 = vadd.f32 %v2756, 1.0
      %v2758 = vrcp.pop %v2757
      %v2759 = vmul.f32 %v2757, %v2758
      %v2760 = vsub.f32 1.0, %v2759
      %v2761 = vmul.f32 %v2758, %v2760
      %v2762 = vadd.f32 %v2758, %v2761
      %vm2763 = vweird.f32 %v2757
      %vm2764 = vweird.f32 %v2758
      %vm2765 = vmor %vm2763, %vm2764
      %v2766 = vsel %vm2765, %v2758, %v2762
      %v2767 = vand.u32 2147483647, %v2757
      %vm2768 = vcmp.eq.f32.partialorder %v2767, 8.507059e+37
      %v2769 = vand.u32 %v2757, 2147483648
      %v2770 = vor.u32 1.1754944e-38, %v2769
      %v2771 = vsel %vm2768, %v2770, %v2766
      %v2772 = vmul.f32 1.0, %v2771
      %2773 = vrot.lane.b32.xlu0 %v55, 64
      %v2774 = vpop.permute.xlu0 %2773
      %v2776 = vadd.f32 %v2707, %v2774
      %2778 = vrot.lane.b32.xlu0 %v2776, 64
      %v2779 = vpop.permute.xlu0 %2778
      %v2781 = vmul.f32 %v2772, %v2779
      %2783 = vrot.lane.b32.xlu0 %v2781, 64
      %v2784 = vpop.permute.xlu0 %2783
      %v2786 = vadd.f32 %v2645, %v2784
      %v2787 = vtanh.pop %v2786
      %v2788 = vsub.f32 1.0, %v2772
      %2790 = vrot.lane.b32.xlu0 %v2787, 96
      %v2791 = vpop.permute.xlu0 %2790
      %v2793 = vmul.f32 %v2788, %v2791
      %v2794 = vmul.f32 %v2772, %v2638
      %v2795 = vadd.f32 %v2793, %v2794
      %2797 = vrot.lane.b32.xlu0 %v2752, 96
      %v2798 = vpop.permute.xlu0 %2797
      %s2800 = scalar_lea.vmem [#allocation4], %s2640
      %2801 = vst.msk [vmem:[%s2800] sm:$0x3] %vm588, %v2798
      %2803 = vrot.lane.b32.xlu0 %v2795, 96
      %v2804 = vpop.permute.xlu0 %2803
      %s2806 = scalar_lea.vmem [#allocation5], %s2643
      %2807 = vst.msk [vmem:[%s2806] sm:$0x3] %vm588, %v2804
    $region74: #{bert_wrapper_rnn_forward.1} parent=1 // loop_footer
      %s2636 = sadd.s32 1, %s2632
    $region75: #{bert_wrapper_rnn_forward.1} parent=1 // loop_footer_branch
      %2631 = sbr.rel target = $region71
    $region76: #{bert_wrapper_rnn_forward.1} parent=1 // loop_exit
      _
    %v2808 = vld [vmem:[#allocation4] sm:$0x3]
    %v2809 = vld [vmem:[#allocation4 + $0x2] sm:$0x3]
    %v2810 = vld [vmem:[#allocation4 + $0x4] sm:$0x3]
    %v2811 = vld [vmem:[#allocation4 + $0x6] sm:$0x3]
    %v2812 = vld [vmem:[#allocation4 + $0x8] sm:$0x3]
    %v2813 = vld [vmem:[#allocation4 + $0xa] sm:$0x3]
    %v2814 = vld [vmem:[#allocation4 + $0xc] sm:$0x3]
    %v2815 = vld [vmem:[#allocation4 + $0xe] sm:$0x3]
    %v2816 = vld [vmem:[#allocation5] sm:$0x3]
    %v2817 = vld [vmem:[#allocation5 + $0x2] sm:$0x3]
    %v2818 = vld [vmem:[#allocation5 + $0x4] sm:$0x3]
    %v2819 = vld [vmem:[#allocation5 + $0x6] sm:$0x3]
    %v2820 = vld [vmem:[#allocation5 + $0x8] sm:$0x3]
    %v2821 = vld [vmem:[#allocation5 + $0xa] sm:$0x3]
    %v2822 = vld [vmem:[#allocation5 + $0xc] sm:$0x3]
    %v2823 = vld [vmem:[#allocation5 + $0xe] sm:$0x3]
    %v2824 = vadd.f32 %v2808, %v2816
    %v2825 = vadd.f32 %v2809, %v2817
    %v2826 = vadd.f32 %v2810, %v2818
    %v2827 = vadd.f32 %v2811, %v2819
    %v2828 = vadd.f32 %v2812, %v2820
    %v2829 = vadd.f32 %v2813, %v2821
    %v2830 = vadd.f32 %v2814, %v2822
    %v2831 = vadd.f32 %v2815, %v2823
    %v2832 = vtanh.pop %v2824
    %v2833 = vtanh.pop %v2825
    %v2834 = vtanh.pop %v2826
    %v2835 = vtanh.pop %v2827
    %v2836 = vtanh.pop %v2828
    %v2837 = vtanh.pop %v2829
    %v2838 = vtanh.pop %v2830
    %v2839 = vtanh.pop %v2831
    %v2840 = vadd.f32 %v2399, %v2623
    %v2841 = vadd.f32 %v2400, %v2624
    %v2842 = vadd.f32 %v2401, %v2625
    %v2843 = vadd.f32 %v2402, %v2626
    %v2844 = vadd.f32 %v2403, %v2627
    %v2845 = vadd.f32 %v2404, %v2628
    %v2846 = vadd.f32 %v2405, %v2629
    %v2847 = vadd.f32 %v2406, %v2630
    %v2848 = vadd.f32 %v2840, %v2832
    %v2849 = vadd.f32 %v2841, %v2833
    %v2850 = vadd.f32 %v2842, %v2834
    %v2851 = vadd.f32 %v2843, %v2835
    %v2852 = vadd.f32 %v2844, %v2836
    %v2853 = vadd.f32 %v2845, %v2837
    %v2854 = vadd.f32 %v2846, %v2838
    %v2855 = vadd.f32 %v2847, %v2839
    %v2856 = vtanh.pop %v2390
    %v2857 = vtanh.pop %v2391
    %v2858 = vtanh.pop %v2392
    %v2859 = vtanh.pop %v2393
    %v2860 = vtanh.pop %v2394
    %v2861 = vtanh.pop %v2395
    %v2862 = vtanh.pop %v2396
    %v2863 = vtanh.pop %v2397
    %v2864 = vadd.f32 %v2848, %v2856
    %v2865 = vadd.f32 %v2849, %v2857
    %v2866 = vadd.f32 %v2850, %v2858
    %v2867 = vadd.f32 %v2851, %v2859
    %v2868 = vadd.f32 %v2852, %v2860
    %v2869 = vadd.f32 %v2853, %v2861
    %v2870 = vadd.f32 %v2854, %v2862
    %v2871 = vadd.f32 %v2855, %v2863
    %v2872 = vsel %vm588, %v2864, 0.0
    %v2873 = vsel %vm588, %v2865, 0.0
    %v2874 = vadd.f32 %v2872, %v2873
    %v2875 = vsel %vm588, %v2866, 0.0
    %v2876 = vadd.f32 %v2874, %v2875
    %v2877 = vsel %vm588, %v2867, 0.0
    %v2878 = vadd.f32 %v2876, %v2877
    %v2879 = vsel %vm588, %v2868, 0.0
    %v2880 = vadd.f32 %v2878, %v2879
    %v2881 = vsel %vm588, %v2869, 0.0
    %v2882 = vadd.f32 %v2880, %v2881
    %v2883 = vsel %vm588, %v2870, 0.0
    %v2884 = vadd.f32 %v2882, %v2883
    %v2885 = vsel %vm588, %v2871, 0.0
    %v2886 = vadd.f32 %v2884, %v2885
    %2887 = vadd.xlane.f32.xlu0 %v2886
    %v2888 = vpop.xlane.xlu0 %2887
    %v2889 = vmul.f32 %v2888, %v612
    %v2890 = vsub.f32 %v2864, %v2889
    %v2891 = vsub.f32 %v2865, %v2889
    %v2892 = vsub.f32 %v2866, %v2889
    %v2893 = vsub.f32 %v2867, %v2889
    %v2894 = vsub.f32 %v2868, %v2889
    %v2895 = vsub.f32 %v2869, %v2889
    %v2896 = vsub.f32 %v2870, %v2889
    %v2897 = vsub.f32 %v2871, %v2889
    %v2898 = vmul.f32 %v2890, %v2890
    %v2899 = vmul.f32 %v2891, %v2891
    %v2900 = vmul.f32 %v2892, %v2892
    %v2901 = vmul.f32 %v2893, %v2893
    %v2902 = vmul.f32 %v2894, %v2894
    %v2903 = vmul.f32 %v2895, %v2895
    %v2904 = vmul.f32 %v2896, %v2896
    %v2905 = vmul.f32 %v2897, %v2897
    %v2906 = vsel %vm588, %v2898, 0.0
    %v2907 = vsel %vm588, %v2899, 0.0
    %v2908 = vadd.f32 %v2906, %v2907
    %v2909 = vsel %vm588, %v2900, 0.0
    %v2910 = vadd.f32 %v2908, %v2909
    %v2911 = vsel %vm588, %v2901, 0.0
    %v2912 = vadd.f32 %v2910, %v2911
    %v2913 = vsel %vm588, %v2902, 0.0
    %v2914 = vadd.f32 %v2912, %v2913
    %v2915 = vsel %vm588, %v2903, 0.0
    %v2916 = vadd.f32 %v2914, %v2915
    %v2917 = vsel %vm588, %v2904, 0.0
    %v2918 = vadd.f32 %v2916, %v2917
    %v2919 = vsel %vm588, %v2905, 0.0
    %v2920 = vadd.f32 %v2918, %v2919
    %2921 = vadd.xlane.f32.xlu0 %v2920
    %v2922 = vpop.xlane.xlu0 %2921
    %v2923 = vmul.f32 %v2922, %v612
    %v2924 = vadd.f32 %v2923, 1e-12
    %v2925 = vrsqrt.pop %v2924
    %v2926 = vmul.f32 %v2925, %v2924
    %v2927 = vmul.f32 %v2926, %v2925
    %v2928 = vmul.f32 0.5, %v2927
    %v2929 = vsub.f32 1.5, %v2928
    %v2930 = vmul.f32 %v2925, %v2929
    %vm2931 = vweird.f32 %v2924
    %vm2932 = vweird.f32 %v2925
    %vm2933 = vmor %vm2931, %vm2932
    %v2934 = vsel %vm2933, %v2925, %v2930
    %v2935 = vmul.f32 %v2890, %v2934
    %v2936 = vmul.f32 %v2891, %v2934
    %v2937 = vmul.f32 %v2892, %v2934
    %v2938 = vmul.f32 %v2893, %v2934
    %v2939 = vmul.f32 %v2894, %v2934
    %v2940 = vmul.f32 %v2895, %v2934
    %v2941 = vmul.f32 %v2896, %v2934
    %v2942 = vmul.f32 %v2897, %v2934
    %v2943 = vmul.f32 %v2935, %v667
    %v2944 = vmul.f32 %v2936, %v668
    %v2945 = vmul.f32 %v2937, %v669
    %v2946 = vmul.f32 %v2938, %v670
    %v2947 = vmul.f32 %v2939, %v671
    %v2948 = vmul.f32 %v2940, %v672
    %v2949 = vmul.f32 %v2941, %v673
    %v2950 = vmul.f32 %v2942, %v674
    %v2951 = vadd.f32 %v2943, %v691
    %v2952 = vadd.f32 %v2944, %v692
    %v2953 = vadd.f32 %v2945, %v693
    %v2954 = vadd.f32 %v2946, %v694
    %v2955 = vadd.f32 %v2947, %v695
    %v2956 = vadd.f32 %v2948, %v696
    %v2957 = vadd.f32 %v2949, %v697
    %v2958 = vadd.f32 %v2950, %v698
    %v2959 = vld [vmem:[%s1] sm:$0x3]
    %2960 = vxpose.xlu0.b32.start [1/16] %v2959, 128
    %2961 = vxpose.xlu0.b32.cont [2/16] 0.0, 128
    %2962 = vxpose.xlu0.b32.cont [3/16] 0.0, 128
    %2963 = vxpose.xlu0.b32.cont [4/16] 0.0, 128
    %2964 = vxpose.xlu0.b32.cont [5/16] 0.0, 128
    %2965 = vxpose.xlu0.b32.cont [6/16] 0.0, 128
    %2966 = vxpose.xlu0.b32.cont [7/16] 0.0, 128
    %2967 = vxpose.xlu0.b32.cont [8/16] 0.0, 128
    %2968 = vxpose.xlu0.b32.cont [9/16] 0.0, 128
    %2969 = vxpose.xlu0.b32.cont [10/16] 0.0, 128
    %2970 = vxpose.xlu0.b32.cont [11/16] 0.0, 128
    %2971 = vxpose.xlu0.b32.cont [12/16] 0.0, 128
    %2972 = vxpose.xlu0.b32.cont [13/16] 0.0, 128
    %2973 = vxpose.xlu0.b32.cont [14/16] 0.0, 128
    %2974 = vxpose.xlu0.b32.cont [15/16] 0.0, 128
    %2975 = vxpose.xlu0.b32.end [16/16] 0.0, 128
    %v2976 = vpop.trf.xlu0
    %v2977 = vpop.trf.xlu0
    %v2978 = vpop.trf.xlu0
    %v2979 = vpop.trf.xlu0
    %v2980 = vpop.trf.xlu0
    %v2981 = vpop.trf.xlu0
    %v2982 = vpop.trf.xlu0
    %v2983 = vpop.trf.xlu0
    %v2984 = vpop.trf.xlu0
    %v2985 = vpop.trf.xlu0
    %v2986 = vpop.trf.xlu0
    %v2987 = vpop.trf.xlu0
    %v2988 = vpop.trf.xlu0
    %v2989 = vpop.trf.xlu0
    %v2990 = vpop.trf.xlu0
    %v2991 = vpop.trf.xlu0
    %v2992 = vperm.slane %v2976, 0
    %v2993 = vlaneseq
    %v2994 = vshrl.u32 %v2993, 7
    %2996 = vset.pattern.permute.xlu0 %v2994
    %2997 = vperm.xlu0 %2996, %v2992
    %v2998 = vpop.permute.xlu0 %2997
    %v2999 = vperm.slane %v2976, 1
    %v3000 = vlaneseq
    %v3001 = vshrl.u32 %v3000, 7
    %3003 = vset.pattern.permute.xlu0 %v3001
    %3004 = vperm.xlu0 %3003, %v2999
    %v3005 = vpop.permute.xlu0 %3004
    %v3006 = vperm.slane %v2976, 2
    %v3007 = vlaneseq
    %v3008 = vshrl.u32 %v3007, 7
    %3010 = vset.pattern.permute.xlu0 %v3008
    %3011 = vperm.xlu0 %3010, %v3006
    %v3012 = vpop.permute.xlu0 %3011
    %v3013 = vperm.slane %v2976, 3
    %v3014 = vlaneseq
    %v3015 = vshrl.u32 %v3014, 7
    %3017 = vset.pattern.permute.xlu0 %v3015
    %3018 = vperm.xlu0 %3017, %v3013
    %v3019 = vpop.permute.xlu0 %3018
    %v3020 = vperm.slane %v2976, 4
    %v3021 = vlaneseq
    %v3022 = vshrl.u32 %v3021, 7
    %3024 = vset.pattern.permute.xlu0 %v3022
    %3025 = vperm.xlu0 %3024, %v3020
    %v3026 = vpop.permute.xlu0 %3025
    %v3027 = vperm.slane %v2976, 5
    %v3028 = vlaneseq
    %v3029 = vshrl.u32 %v3028, 7
    %3031 = vset.pattern.permute.xlu0 %v3029
    %3032 = vperm.xlu0 %3031, %v3027
    %v3033 = vpop.permute.xlu0 %3032
    %v3034 = vperm.slane %v2976, 6
    %v3035 = vlaneseq
    %v3036 = vshrl.u32 %v3035, 7
    %3038 = vset.pattern.permute.xlu0 %v3036
    %3039 = vperm.xlu0 %3038, %v3034
    %v3040 = vpop.permute.xlu0 %3039
    %v3041 = vperm.slane %v2976, 7
    %v3042 = vlaneseq
    %v3043 = vshrl.u32 %v3042, 7
    %3045 = vset.pattern.permute.xlu0 %v3043
    %3046 = vperm.xlu0 %3045, %v3041
    %v3047 = vpop.permute.xlu0 %3046
    %v3048 = vmul.f32 %v2951, %v2998
    %v3049 = vmul.f32 %v2952, %v3005
    %v3050 = vmul.f32 %v2953, %v3012
    %v3051 = vmul.f32 %v2954, %v3019
    %v3052 = vmul.f32 %v2955, %v3026
    %v3053 = vmul.f32 %v2956, %v3033
    %v3054 = vmul.f32 %v2957, %v3040
    %v3055 = vmul.f32 %v2958, %v3047
    %v3056 = vsel %vm588, %v3048, 0.0
    %v3057 = vsel %vm588, %v3049, 0.0
    %v3058 = vadd.f32 %v3056, %v3057
    %v3059 = vsel %vm588, %v3050, 0.0
    %v3060 = vadd.f32 %v3058, %v3059
    %v3061 = vsel %vm588, %v3051, 0.0
    %v3062 = vadd.f32 %v3060, %v3061
    %v3063 = vsel %vm588, %v3052, 0.0
    %v3064 = vadd.f32 %v3062, %v3063
    %v3065 = vsel %vm588, %v3053, 0.0
    %v3066 = vadd.f32 %v3064, %v3065
    %v3067 = vsel %vm588, %v3054, 0.0
    %v3068 = vadd.f32 %v3066, %v3067
    %v3069 = vsel %vm588, %v3055, 0.0
    %v3070 = vadd.f32 %v3068, %v3069
    %v3071 = vmul.f32 %v3070, 0.125
    %3072 = vst.msk [vmem:[#allocation6] sm:$0x3] %vm588, %v3071
    // Predicated region
    $region77: #{bert_wrapper_rnn_forward.1} parent=1 // pred_check
      _
    $region78: #{bert_wrapper_rnn_forward.1} parent=1 // pred_check_branch
      %3074 = sbr.rel (0) target = $region80
    $region79: #{bert_wrapper_rnn_forward.1} parent=1 // pred_region
      %3076 = vsyncadd [#allocation7], 0
      %s3078 = sshll.u32 [#allocation6], 4
      %s3079 = int_to_ptr.vmem [resolvable:$true] %s3078
      %s3080 = sshll.u32 %s10, 4
      %s3081 = int_to_ptr.hbm [resolvable:$true] %s3080
      %3083 = dma.vmem_to_hbm [thread:$0]  %s3079, 32, %s3081, [#allocation7]
    $region80: #{bert_wrapper_rnn_forward.1} parent=1 // pred_fallthru
      _
    // Predicated region
    $region81: #{bert_wrapper_rnn_forward.1} parent=1 // pred_check
      _
    $region82: #{bert_wrapper_rnn_forward.1} parent=1 // pred_check_branch
      %3085 = sbr.rel (0) target = $region84
    $region83: #{bert_wrapper_rnn_forward.1} parent=1 // pred_region
      %3087 = dma.done [#allocation7], 32
    $region84: #{bert_wrapper_rnn_forward.1} parent=1 // pred_fallthru
      _
    %3088 = vsyncpa [#allocation7], 1

</llo_original>
